<compile_context>
chip_gen: v5e
topology: v5e:2x2
jax: 0.10.0
libtpu: 0.0.40
codegen_flags: <defaults>
</compile_context>

<pallas_src>
import functools
import math

import numpy as np
import jax
import jax.numpy as jnp
from jax.experimental import pallas as pl
from jax.experimental.pallas import tpu as pltpu

# ---- small synthetic ViT config (stands in for ViT-H-14 @ 224) ----
RES = 32            # resize target (real module: 224)
PATCH = 8           # conv1 kernel/stride (real module: 14)
GRID = RES // PATCH
SEQ = GRID * GRID + 1
SEQ_PAD = 32        # padded sequence length, multiple of 16 (bf16 packing)
WIDTH = 64          # real module: 1280
HEADS = 4
HEAD_DIM = WIDTH // HEADS
MLP = 4 * WIDTH
LAYERS = 2          # real module: 32
EPS = 1e-5

MEAN = np.array([0.48145466, 0.4578275, 0.40821073], np.float32)
STD = np.array([0.26862954, 0.26130258, 0.27577711], np.float32)


# ---------------------------------------------------------------------------
# bicubic resize weights (separable, align_corners=True, border-clamped)
# TODO(synk): kornia's antialias path adds a blur pre-filter when downscaling;
# the demo upscales, so the widened-kernel path is inactive (as in torch).
# ---------------------------------------------------------------------------
def _cubic(t, a=-0.75):
    t = np.abs(t)
    return np.where(
        t <= 1.0, (a + 2) * t**3 - (a + 3) * t**2 + 1.0,
        np.where(t < 2.0, a * t**3 - 5 * a * t**2 + 8 * a * t - 4 * a, 0.0))


def bicubic_matrix(n_in, n_out, antialias=True):
    if n_out == 1:
        return np.ones((1, n_in), np.float32) / n_in
    coords = np.arange(n_out) * (n_in - 1) / (n_out - 1)
    scale = (n_in - 1) / (n_out - 1)
    kscale = max(scale, 1.0) if antialias else 1.0
    support = 2.0 * kscale
    w_mat = np.zeros((n_out, n_in), np.float64)
    for i, c in enumerate(coords):
        idx = np.arange(int(np.floor(c - support)), int(np.ceil(c + support)) + 1)
        w = _cubic((c - idx) / kscale)
        s = w.sum()
        if s > 0:
            w = w / s
        for j, wj in zip(np.clip(idx, 0, n_in - 1), w):
            w_mat[i, j] += wj
    return w_mat.astype(np.float32)


# ---------------------------------------------------------------------------
# helpers
# ---------------------------------------------------------------------------
def _rep(arr):
    """BlockSpec for a weight that is identical for every grid step (1-D grid)."""
    nd = arr.ndim
    return pl.BlockSpec(arr.shape, lambda i, _nd=nd: (0,) * _nd)


def _layernorm(v, g, b):
    mu = jnp.mean(v, axis=-1, keepdims=True)
    var = jnp.mean((v - mu) ** 2, axis=-1, keepdims=True)
    return (v - mu) * jax.lax.rsqrt(var + EPS) * g + b


_PARALLEL_B = pltpu.CompilerParams(dimension_semantics=("parallel",))


# ---------------------------------------------------------------------------
# kernel 1: bicubic resize + (x+1)/2 + normalize, all 3 channels per step.
# grid = (B,)
# ---------------------------------------------------------------------------
def _resize_norm_kernel(x_ref, wh_ref, wwt_ref, scale_ref, bias_ref, o_ref):
    x = x_ref[...].astype(jnp.bfloat16)                          # (3, H, W)
    c, h_in, w_in = x.shape
    wh = wh_ref[...]                                             # (RES, H) bf16
    whb = jnp.broadcast_to(wh[None, :, :], (c,) + wh.shape)      # (3, RES, H)
    # rows: per-channel (RES, H) @ (H, W)
    t = jax.lax.dot_general(whb, x, (((2,), (1,)), ((0,), (0,))),
                            preferred_element_type=jnp.float32)  # (3, RES, W)
    # cols: single tall 2D matmul (3*RES, W) @ (W, RES)
    t2 = t.reshape(c * RES, w_in).astype(jnp.bfloat16)
    y = jnp.dot(t2, wwt_ref[...], preferred_element_type=jnp.float32)  # (3*RES, RES)
    # ((y + 1)/2 - mean) / std  ==  y * (0.5/std) + (0.5 - mean)/std, per row
    y = y * scale_ref[...] + bias_ref[...]
    o_ref[...] = y.reshape(c, RES, RES)


def resize_and_normalize(image):
    b, c, h, w = image.shape
    wh = jnp.asarray(bicubic_matrix(h, RES), dtype=jnp.bfloat16)       # (RES, H)
    wwt = jnp.asarray(bicubic_matrix(w, RES).T, dtype=jnp.bfloat16)    # (W, RES)
    scale = jnp.asarray(np.repeat(0.5 / STD, RES).reshape(c * RES, 1)
                        .astype(np.float32))
    bias = jnp.asarray(np.repeat((0.5 - MEAN) / STD, RES).reshape(c * RES, 1)
                       .astype(np.float32))
    return pl.pallas_call(
        _resize_norm_kernel,
        out_shape=jax.ShapeDtypeStruct((b, c, RES, RES), jnp.float32),
        grid=(b,),
        in_specs=[
            pl.BlockSpec((None, c, h, w), lambda i: (i, 0, 0, 0)),
            _rep(wh), _rep(wwt), _rep(scale), _rep(bias),
        ],
        out_specs=pl.BlockSpec((None, c, RES, RES), lambda i: (i, 0, 0, 0)),
        compiler_params=_PARALLEL_B,
    )(image, wh, wwt, scale, bias)


# ---------------------------------------------------------------------------
# kernel 2: patch-embed matmul + class token + positional embed + ln_pre,
#           single aligned (SEQ_PAD, WIDTH) store.   grid = (B,)
# `patches` is pre-padded to SEQ_PAD rows (row 0 = class-token slot = zeros,
# rows SEQ.. = zeros); `base` = [cls+pos0; pos1..; zeros] is precomputed.
# ---------------------------------------------------------------------------
def _embed_kernel(patch_ref, wconv_ref, base_ref, g_ref, b_ref, o_ref):
    tok = jnp.dot(patch_ref[...].astype(jnp.bfloat16), wconv_ref[...],
                  preferred_element_type=jnp.float32)            # (SEQ_PAD, D)
    o_ref[...] = _layernorm(tok + base_ref[...], g_ref[...], b_ref[...])


def embed_lnpre(patches, prep):
    b, n, kk = patches.shape
    return pl.pallas_call(
        _embed_kernel,
        out_shape=jax.ShapeDtypeStruct((b, SEQ_PAD, WIDTH), jnp.float32),
        grid=(b,),
        in_specs=[pl.BlockSpec((None, n, kk), lambda i: (i, 0, 0)),
                  _rep(prep['wconv']), _rep(prep['base']),
                  _rep(prep['ln_pre_g']), _rep(prep['ln_pre_b'])],
        out_specs=pl.BlockSpec((None, SEQ_PAD, WIDTH), lambda i: (i, 0, 0)),
        compiler_params=_PARALLEL_B,
    )(patches, prep['wconv'], prep['base'], prep['ln_pre_g'], prep['ln_pre_b'])


# ---------------------------------------------------------------------------
# kernel 3: ALL residual attention blocks in one pallas_call.
# grid = (B, LAYERS); activations stay resident in the (revisited) output
# block across the layer axis; per-layer weights selected by index_map.
#   x = x + MHA(ln_1(x));  x = x + MLP(ln_2(x))
# ---------------------------------------------------------------------------
def _transformer_kernel(x_ref, ln1g_ref, ln1b_ref, wqkv_ref, bqkv_ref,
                        wo_ref, bo_ref, ln2g_ref, ln2b_ref,
                        w1_ref, b1_ref, w2_ref, b2_ref, o_ref,
                        *, n_heads, seq_valid):
    layer = pl.program_id(1)

    @pl.when(layer == 0)
    def _():                                   # seed the resident activation
        o_ref[...] = x_ref[...]

    x = o_ref[...]                             # (S_pad, D) f32, resident in VMEM
    s_pad, d = x.shape
    hd = d // n_heads

    # --- multi-head self-attention (nn.MultiheadAttention semantics) ---
    h = _layernorm(x, ln1g_ref[...], ln1b_ref[...]).astype(jnp.bfloat16)
    # one full-width MXU matmul; 1/sqrt(hd) pre-folded into the q third
    qkv = jnp.dot(h, wqkv_ref[...], preferred_element_type=jnp.float32)
    qkv = qkv + bqkv_ref[...]                  # (S_pad, 3D)
    q, k, v = qkv[:, :d], qkv[:, d:2 * d], qkv[:, 2 * d:]

    def heads(m):                              # (S, D) -> (H, S, hd) bf16
        return jnp.stack([m[:, j * hd:(j + 1) * hd] for j in range(n_heads)],
                         axis=0).astype(jnp.bfloat16)

    qh, kh, vh = heads(q), heads(k), heads(v)
    s = jax.lax.dot_general(qh, kh, (((2,), (2,)), ((0,), (0,))),
                            preferred_element_type=jnp.float32)   # (H, S, S)
    key_idx = jax.lax.broadcasted_iota(jnp.int32, (1, 1, s_pad), 2)
    s = jnp.where(key_idx < seq_valid, s, -1e30)                  # mask pad keys
    p = jnp.exp(s - jnp.max(s, axis=-1, keepdims=True))
    denom = jnp.sum(p, axis=-1, keepdims=True)                    # (H, S, 1)
    ctx = jax.lax.dot_general(p.astype(jnp.bfloat16), vh,
                              (((2,), (1,)), ((0,), (0,))),
                              preferred_element_type=jnp.float32)  # (H, S, hd)
    ctx = ctx * pl.reciprocal(denom, approx=False)   # exact softmax normalize
    ctx = jnp.concatenate([ctx[j] for j in range(n_heads)], axis=-1)  # (S, D)
    attn = jnp.dot(ctx.astype(jnp.bfloat16), wo_ref[...],
                   preferred_element_type=jnp.float32) + bo_ref[...]
    x = x + attn

    # --- MLP: Linear -> GELU(exact) -> Linear ---
    h2 = _layernorm(x, ln2g_ref[...], ln2b_ref[...]).astype(jnp.bfloat16)
    m = jnp.dot(h2, w1_ref[...], preferred_element_type=jnp.float32) + b1_ref[...]
    m = 0.5 * m * (1.0 + jax.lax.erf(m * np.float32(0.7071067811865476)))
    m = jnp.dot(m.astype(jnp.bfloat16), w2_ref[...],
                preferred_element_type=jnp.float32) + b2_ref[...]
    o_ref[...] = x + m                          # stays resident for layer+1


_BLOCK_WEIGHTS = ('ln1_g', 'ln1_b', 'wqkv', 'bqkv', 'wo', 'bo',
                  'ln2_g', 'ln2_b', 'w1', 'b1', 'w2', 'b2')


def transformer(x, prep):
    # NOTE(v7x): with grid=(B, L) and "parallel" on B, each TensorCore DMAs its
    # own weight copy; B=1 leaves one core idle — batch >= 2 per call preferred.
    bsz = x.shape[0]
    weights = [prep[n] for n in _BLOCK_WEIGHTS]
    n_layers = weights[0].shape[0]
    tok_spec = pl.BlockSpec((None, SEQ_PAD, WIDTH), lambda b, l: (b, 0, 0))
    w_specs = [pl.BlockSpec((None,) + w.shape[1:], lambda b, l: (l, 0, 0))
               for w in weights]
    return pl.pallas_call(
        functools.partial(_transformer_kernel, n_heads=HEADS, seq_valid=SEQ),
        out_shape=jax.ShapeDtypeStruct((bsz, SEQ_PAD, WIDTH), jnp.float32),
        grid=(bsz, n_layers),
        in_specs=[tok_spec] + w_specs,
        out_specs=tok_spec,
        compiler_params=pltpu.CompilerParams(
            dimension_semantics=("parallel", "arbitrary")),
    )(x, *weights)


# ---------------------------------------------------------------------------
# full forward (FrozenOpenCLIPImageEmbedderV2.forward)
# ---------------------------------------------------------------------------
def frozen_openclip_image_embedder_v2(image, prep):
    x = resize_and_normalize(image)                 # (B, 3, RES, RES) f32
    b = x.shape[0]
    # im2col for the stride=kernel conv1 (pure layout work, left to XLA).
    # TODO(synk): fusing this im2col into the embed kernel needs in-kernel
    # strided patch gathers; kept in XLA for robust lowering.
    patches = x.reshape(b, 3, GRID, PATCH, GRID, PATCH)
    patches = patches.transpose(0, 2, 4, 1, 3, 5).reshape(
        b, GRID * GRID, 3 * PATCH * PATCH)
    # zero-pad: row 0 (class-token slot) + rows SEQ..SEQ_PAD, so the embed
    # kernel can do one full-tile aligned store.
    patches = jnp.pad(patches, ((0, 0), (1, SEQ_PAD - SEQ), (0, 0)))
    tok = embed_lnpre(patches, prep)                # (B, SEQ_PAD, WIDTH)
    tok = transformer(tok, prep)                    # all layers, one pallas_call
    # padded rows accumulate LN-bias/residual junk across layers; they are
    # masked as keys and sliced off here, so downstream never sees them.
    return tok[:, :SEQ, :]                          # (B, SEQ, WIDTH)


# ---------------------------------------------------------------------------
# offline weight packing for the frozen encoder:
#   * bf16 matmul weights, f32 biases / LN params
#   * per-layer weights stacked along a leading layer axis for grid indexing
#   * packed (D, 3D) qkv projection with 1/sqrt(hd) folded into the q third
#   * precomputed "base" = [cls + pos0 ; pos1.. ; zeros] (SEQ_PAD, D)
# ---------------------------------------------------------------------------
def _stack(params, name):
    return jnp.stack([blk[name] for blk in params['blocks']], axis=0)


def prepare_params(params):
    qscale = 1.0 / math.sqrt(HEAD_DIM)
    qkv_scale = jnp.concatenate([jnp.full((WIDTH,), qscale, jnp.float32),
                                 jnp.ones((2 * WIDTH,), jnp.float32)])

    base = jnp.concatenate([
        params['class_emb'].reshape(1, WIDTH) + params['pos_emb'][0:1, :],
        params['pos_emb'][1:SEQ, :],
        jnp.zeros((SEQ_PAD - SEQ, WIDTH), jnp.float32)], axis=0)

    prep = {
        'wconv': params['conv_w'].reshape(WIDTH, 3 * PATCH * PATCH).T
                                 .astype(jnp.bfloat16),
        'base': base.astype(jnp.float32),
        'ln_pre_g': params['ln_pre_g'].astype(jnp.float32),
        'ln_pre_b': params['ln_pre_b'].astype(jnp.float32),
        'ln1_g': _stack(params, 'ln1_g'),
        'ln1_b': _stack(params, 'ln1_b'),
        'wqkv': (_stack(params, 'wqkv') * qkv_scale[None, None, :]
                 ).astype(jnp.bfloat16),                       # (L, D, 3D)
        'bqkv': _stack(params, 'bqkv') * qkv_scale[None, None, :],  # (L, 1, 3D)
        'wo': _stack(params, 'wo').astype(jnp.bfloat16),        # (L, D, D)
        'bo': _stack(params, 'bo'),
        'ln2_g': _stack(params, 'ln2_g'),
        'ln2_b': _stack(params, 'ln2_b'),
        'w1': _stack(params, 'w1').astype(jnp.bfloat16),        # (L, D, MLP)
        'b1': _stack(params, 'b1'),
        'w2': _stack(params, 'w2').astype(jnp.bfloat16),        # (L, MLP, D)
        'b2': _stack(params, 'b2'),
    }
    return prep


# ---------------------------------------------------------------------------
# deterministic synthetic parameters (PyTorch-like fp32 layout)
# ---------------------------------------------------------------------------
def init_params(key):
    keys = iter(jax.random.split(key, 8 + 4 * LAYERS))

    def nrm(shape, s=0.02):
        return s * jax.random.normal(next(keys), shape, jnp.float32)

    params = {
        'conv_w': nrm((WIDTH, 3, PATCH, PATCH)),
        'class_emb': nrm((WIDTH,)),
        'pos_emb': nrm((SEQ, WIDTH)),
        'ln_pre_g': jnp.ones((1, WIDTH), jnp.float32),
        'ln_pre_b': jnp.zeros((1, WIDTH), jnp.float32),
        'blocks': [],
    }
    for _ in range(LAYERS):
        params['blocks'].append({
            'ln1_g': jnp.ones((1, WIDTH), jnp.float32),
            'ln1_b': jnp.zeros((1, WIDTH), jnp.float32),
            'wqkv': nrm((WIDTH, 3 * WIDTH)),
            'bqkv': jnp.zeros((1, 3 * WIDTH), jnp.float32),
            'wo': nrm((WIDTH, WIDTH)),
            'bo': jnp.zeros((1, WIDTH), jnp.float32),
            'ln2_g': jnp.ones((1, WIDTH), jnp.float32),
            'ln2_b': jnp.zeros((1, WIDTH), jnp.float32),
            'w1': nrm((WIDTH, MLP)),
            'b1': jnp.zeros((1, MLP), jnp.float32),
            'w2': nrm((MLP, WIDTH)),
            'b2': jnp.zeros((1, WIDTH), jnp.float32),
        })
    return params


if __name__ == "__main__":
    key = jax.random.PRNGKey(0)
    kimg, kparam = jax.random.split(key)
    B = 2
    # image in [-1, 1] like the diffusion-model convention the module expects
    image = jax.random.uniform(kimg, (B, 3, 16, 16), jnp.float32,
                               minval=-1.0, maxval=1.0)
    params = init_params(kparam)
    prepared = prepare_params(params)              # offline frozen-weight packing
    fwd = jax.jit(frozen_openclip_image_embedder_v2)
    z = fwd(image, prepared)
    jax.block_until_ready(z)
    assert z.shape == (B, SEQ, WIDTH), z.shape
    assert z.dtype == jnp.float32
    print("KERNEL_OK")
</pallas_src>

<mosaic_0001>
module attributes {stable_mosaic.version = 11 : i64} {
  func.func @_resize_norm_kernel(%arg0: i32, %arg1: memref<1x3x16x16xf32, #tpu.memory_space<vmem>>, %arg2: memref<32x16xbf16, #tpu.memory_space<vmem>>, %arg3: memref<16x32xbf16, #tpu.memory_space<vmem>>, %arg4: memref<96x1xf32, #tpu.memory_space<vmem>>, %arg5: memref<96x1xf32, #tpu.memory_space<vmem>>, %arg6: memref<1x3x32x32xf32, #tpu.memory_space<vmem>>) attributes {dimension_semantics = [#tpu.dimension_semantics<parallel>], iteration_bounds = array<i64: 2>, scalar_prefetch = 0 : i64, scratch_operands = 0 : i64, tpu.core_type = #tpu.core_type<tc>, window_params = [{transform_indices = @transform_0, window_bounds = array<i64: 1, 3, 16, 16>}, {pipeline_mode = #tpu.pipeline_mode<synchronous>, transform_indices = @transform_1, window_bounds = array<i64: 32, 16>}, {pipeline_mode = #tpu.pipeline_mode<synchronous>, transform_indices = @transform_2, window_bounds = array<i64: 16, 32>}, {pipeline_mode = #tpu.pipeline_mode<synchronous>, transform_indices = @transform_3, window_bounds = array<i64: 96, 1>}, {pipeline_mode = #tpu.pipeline_mode<synchronous>, transform_indices = @transform_4, window_bounds = array<i64: 96, 1>}, {transform_indices = @transform_5, window_bounds = array<i64: 1, 3, 32, 32>}]} {
    %c0 = arith.constant 0 : index
    %c0_0 = arith.constant 0 : index
    %c0_1 = arith.constant 0 : index
    %c0_2 = arith.constant 0 : index
    %0 = vector.load %arg1[%c0, %c0_0, %c0_1, %c0_2] : memref<1x3x16x16xf32, #tpu.memory_space<vmem>>, vector<1x3x16x16xf32>
    %1 = vector.shape_cast %0 : vector<1x3x16x16xf32> to vector<3x16x16xf32>
    %2 = arith.truncf %1 : vector<3x16x16xf32> to vector<3x16x16xbf16>
    %c0_3 = arith.constant 0 : index
    %c0_4 = arith.constant 0 : index
    %3 = vector.load %arg2[%c0_3, %c0_4] : memref<32x16xbf16, #tpu.memory_space<vmem>>, vector<32x16xbf16>
    %4 = vector.shape_cast %3 : vector<32x16xbf16> to vector<1x32x16xbf16>
    %5 = vector.shape_cast %4 : vector<1x32x16xbf16> to vector<1x32x16xbf16>
    %6 = vector.broadcast %5 : vector<1x32x16xbf16> to vector<3x32x16xbf16>
    %cst = arith.constant dense<0.000000e+00> : vector<3x32x16xf32>
    %7 = tpu.matmul %6, %2, %cst {dimension_numbers = #tpu.dot_dimension_numbers<[2], [1], [1], [2], [0, 0, 0, 1, 1, 2], [0], [0]>} : vector<3x32x16xbf16>, vector<3x16x16xbf16>, vector<3x32x16xf32> -> vector<3x32x16xf32>
    %8 = vector.shape_cast %7 : vector<3x32x16xf32> to vector<96x16xf32>
    %9 = arith.truncf %8 : vector<96x16xf32> to vector<96x16xbf16>
    %c0_5 = arith.constant 0 : index
    %c0_6 = arith.constant 0 : index
    %10 = vector.load %arg3[%c0_5, %c0_6] : memref<16x32xbf16, #tpu.memory_space<vmem>>, vector<16x32xbf16>
    %cst_7 = arith.constant dense<0.000000e+00> : vector<96x32xf32>
    %11 = tpu.matmul %9, %10, %cst_7 {dimension_numbers = #tpu.dot_dimension_numbers<[1], [0], [0], [1], [0, 0, 1, 1], [], []>} : vector<96x16xbf16>, vector<16x32xbf16>, vector<96x32xf32> -> vector<96x32xf32>
    %c0_8 = arith.constant 0 : index
    %c0_9 = arith.constant 0 : index
    %12 = vector.load %arg4[%c0_8, %c0_9] : memref<96x1xf32, #tpu.memory_space<vmem>>, vector<96x1xf32>
    %13 = vector.broadcast %12 : vector<96x1xf32> to vector<96x32xf32>
    %14 = arith.mulf %11, %13 : vector<96x32xf32>
    %c0_10 = arith.constant 0 : index
    %c0_11 = arith.constant 0 : index
    %15 = vector.load %arg5[%c0_10, %c0_11] : memref<96x1xf32, #tpu.memory_space<vmem>>, vector<96x1xf32>
    %16 = vector.broadcast %15 : vector<96x1xf32> to vector<96x32xf32>
    %17 = arith.addf %14, %16 : vector<96x32xf32>
    %18 = vector.shape_cast %17 : vector<96x32xf32> to vector<3x32x32xf32>
    %c0_12 = arith.constant 0 : index
    %c0_13 = arith.constant 0 : index
    %c0_14 = arith.constant 0 : index
    %c0_15 = arith.constant 0 : index
    %19 = vector.load %arg6[%c0_12, %c0_13, %c0_14, %c0_15] : memref<1x3x32x32xf32, #tpu.memory_space<vmem>>, vector<1x3x32x32xf32>
    %20 = vector.shape_cast %19 : vector<1x3x32x32xf32> to vector<3x32x32xf32>
    %21 = vector.shape_cast %18 : vector<3x32x32xf32> to vector<1x3x32x32xf32>
    tpu.vector_store %arg6[%c0_12, %c0_13, %c0_14, %c0_15], %21 {strides = array<i32>} : memref<1x3x32x32xf32, #tpu.memory_space<vmem>>, vector<1x3x32x32xf32>,
    return
  }
  func.func @transform_0(%arg0: i32) -> (i32, i32, i32, i32) {
    %c0_i32 = arith.constant 0 : i32
    %c0_i32_0 = arith.constant 0 : i32
    %c0_i32_1 = arith.constant 0 : i32
    %c0_i32_2 = arith.constant 0 : i32
    return %arg0, %c0_i32, %c0_i32_0, %c0_i32_1 : i32, i32, i32, i32
  }
  func.func @transform_1(%arg0: i32) -> (i32, i32) {
    %c0_i32 = arith.constant 0 : i32
    %c0_i32_0 = arith.constant 0 : i32
    %c0_i32_1 = arith.constant 0 : i32
    return %c0_i32, %c0_i32_0 : i32, i32
  }
  func.func @transform_2(%arg0: i32) -> (i32, i32) {
    %c0_i32 = arith.constant 0 : i32
    %c0_i32_0 = arith.constant 0 : i32
    %c0_i32_1 = arith.constant 0 : i32
    return %c0_i32, %c0_i32_0 : i32, i32
  }
  func.func @transform_3(%arg0: i32) -> (i32, i32) {
    %c0_i32 = arith.constant 0 : i32
    %c0_i32_0 = arith.constant 0 : i32
    %c0_i32_1 = arith.constant 0 : i32
    return %c0_i32, %c0_i32_0 : i32, i32
  }
  func.func @transform_4(%arg0: i32) -> (i32, i32) {
    %c0_i32 = arith.constant 0 : i32
    %c0_i32_0 = arith.constant 0 : i32
    %c0_i32_1 = arith.constant 0 : i32
    return %c0_i32, %c0_i32_0 : i32, i32
  }
  func.func @transform_5(%arg0: i32) -> (i32, i32, i32, i32) {
    %c0_i32 = arith.constant 0 : i32
    %c0_i32_0 = arith.constant 0 : i32
    %c0_i32_1 = arith.constant 0 : i32
    %c0_i32_2 = arith.constant 0 : i32
    return %arg0, %c0_i32, %c0_i32_0, %c0_i32_1 : i32, i32, i32, i32
  }
}

module attributes {stable_mosaic.version = 11 : i64} {
  func.func @_embed_kernel(%arg0: i32, %arg1: memref<1x32x192xf32, #tpu.memory_space<vmem>>, %arg2: memref<192x64xbf16, #tpu.memory_space<vmem>>, %arg3: memref<32x64xf32, #tpu.memory_space<vmem>>, %arg4: memref<1x64xf32, #tpu.memory_space<vmem>>, %arg5: memref<1x64xf32, #tpu.memory_space<vmem>>, %arg6: memref<1x32x64xf32, #tpu.memory_space<vmem>>) attributes {dimension_semantics = [#tpu.dimension_semantics<parallel>], iteration_bounds = array<i64: 2>, scalar_prefetch = 0 : i64, scratch_operands = 0 : i64, tpu.core_type = #tpu.core_type<tc>, window_params = [{transform_indices = @transform_0, window_bounds = array<i64: 1, 32, 192>}, {pipeline_mode = #tpu.pipeline_mode<synchronous>, transform_indices = @transform_1, window_bounds = array<i64: 192, 64>}, {pipeline_mode = #tpu.pipeline_mode<synchronous>, transform_indices = @transform_2, window_bounds = array<i64: 32, 64>}, {pipeline_mode = #tpu.pipeline_mode<synchronous>, transform_indices = @transform_3, window_bounds = array<i64: 1, 64>}, {pipeline_mode = #tpu.pipeline_mode<synchronous>, transform_indices = @transform_4, window_bounds = array<i64: 1, 64>}, {transform_indices = @transform_5, window_bounds = array<i64: 1, 32, 64>}]} {
    %c0 = arith.constant 0 : index
    %c0_0 = arith.constant 0 : index
    %c0_1 = arith.constant 0 : index
    %0 = vector.load %arg1[%c0, %c0_0, %c0_1] : memref<1x32x192xf32, #tpu.memory_space<vmem>>, vector<1x32x192xf32>
    %1 = vector.shape_cast %0 : vector<1x32x192xf32> to vector<32x192xf32>
    %2 = arith.truncf %1 : vector<32x192xf32> to vector<32x192xbf16>
    %c0_2 = arith.constant 0 : index
    %c0_3 = arith.constant 0 : index
    %3 = vector.load %arg2[%c0_2, %c0_3] : memref<192x64xbf16, #tpu.memory_space<vmem>>, vector<192x64xbf16>
    %cst = arith.constant dense<0.000000e+00> : vector<32x64xf32>
    %4 = tpu.matmul %2, %3, %cst {dimension_numbers = #tpu.dot_dimension_numbers<[1], [0], [0], [1], [0, 0, 1, 1], [], []>} : vector<32x192xbf16>, vector<192x64xbf16>, vector<32x64xf32> -> vector<32x64xf32>
    %c0_4 = arith.constant 0 : index
    %c0_5 = arith.constant 0 : index
    %5 = vector.load %arg3[%c0_4, %c0_5] : memref<32x64xf32, #tpu.memory_space<vmem>>, vector<32x64xf32>
    %6 = arith.addf %4, %5 : vector<32x64xf32>
    %c0_6 = arith.constant 0 : index
    %c0_7 = arith.constant 0 : index
    %7 = vector.load %arg4[%c0_6, %c0_7] : memref<1x64xf32, #tpu.memory_space<vmem>>, vector<1x64xf32>
    %c0_8 = arith.constant 0 : index
    %c0_9 = arith.constant 0 : index
    %8 = vector.load %arg5[%c0_8, %c0_9] : memref<1x64xf32, #tpu.memory_space<vmem>>, vector<1x64xf32>
    %cst_10 = arith.constant dense<0.000000e+00> : vector<32xf32>
    %9 = vector.multi_reduction <add>, %6, %cst_10 [1] : vector<32x64xf32> to vector<32xf32>
    %10 = vector.shape_cast %9 : vector<32xf32> to vector<32x1xf32>
    %cst_11 = arith.constant 6.400000e+01 : f32
    %11 = vector.broadcast %cst_11 : f32 to vector<32x1xf32>
    %12 = arith.divf %10, %11 : vector<32x1xf32>
    %13 = vector.broadcast %12 : vector<32x1xf32> to vector<32x64xf32>
    %14 = arith.subf %6, %13 : vector<32x64xf32>
    %15 = arith.mulf %14, %14 : vector<32x64xf32>
    %cst_12 = arith.constant dense<0.000000e+00> : vector<32xf32>
    %16 = vector.multi_reduction <add>, %15, %cst_12 [1] : vector<32x64xf32> to vector<32xf32>
    %17 = vector.shape_cast %16 : vector<32xf32> to vector<32x1xf32>
    %cst_13 = arith.constant 6.400000e+01 : f32
    %18 = vector.broadcast %cst_13 : f32 to vector<32x1xf32>
    %19 = arith.divf %17, %18 : vector<32x1xf32>
    %20 = vector.broadcast %12 : vector<32x1xf32> to vector<32x64xf32>
    %21 = arith.subf %6, %20 : vector<32x64xf32>
    %cst_14 = arith.constant 9.99999974E-6 : f32
    %22 = vector.broadcast %cst_14 : f32 to vector<32x1xf32>
    %23 = arith.addf %19, %22 : vector<32x1xf32>
    %24 = math.rsqrt %23 : vector<32x1xf32>
    %25 = vector.broadcast %24 : vector<32x1xf32> to vector<32x64xf32>
    %26 = arith.mulf %21, %25 : vector<32x64xf32>
    %27 = vector.broadcast %7 : vector<1x64xf32> to vector<32x64xf32>
    %28 = arith.mulf %26, %27 : vector<32x64xf32>
    %29 = vector.broadcast %8 : vector<1x64xf32> to vector<32x64xf32>
    %30 = arith.addf %28, %29 : vector<32x64xf32>
    %c0_15 = arith.constant 0 : index
    %c0_16 = arith.constant 0 : index
    %c0_17 = arith.constant 0 : index
    %31 = vector.load %arg6[%c0_15, %c0_16, %c0_17] : memref<1x32x64xf32, #tpu.memory_space<vmem>>, vector<1x32x64xf32>
    %32 = vector.shape_cast %31 : vector<1x32x64xf32> to vector<32x64xf32>
    %33 = vector.shape_cast %30 : vector<32x64xf32> to vector<1x32x64xf32>
    tpu.vector_store %arg6[%c0_15, %c0_16, %c0_17], %33 {strides = array<i32>} : memref<1x32x64xf32, #tpu.memory_space<vmem>>, vector<1x32x64xf32>,
    return
  }
  func.func @transform_0(%arg0: i32) -> (i32, i32, i32) {
    %c0_i32 = arith.constant 0 : i32
    %c0_i32_0 = arith.constant 0 : i32
    %c0_i32_1 = arith.constant 0 : i32
    return %arg0, %c0_i32, %c0_i32_0 : i32, i32, i32
  }
  func.func @transform_1(%arg0: i32) -> (i32, i32) {
    %c0_i32 = arith.constant 0 : i32
    %c0_i32_0 = arith.constant 0 : i32
    %c0_i32_1 = arith.constant 0 : i32
    return %c0_i32, %c0_i32_0 : i32, i32
  }
  func.func @transform_2(%arg0: i32) -> (i32, i32) {
    %c0_i32 = arith.constant 0 : i32
    %c0_i32_0 = arith.constant 0 : i32
    %c0_i32_1 = arith.constant 0 : i32
    return %c0_i32, %c0_i32_0 : i32, i32
  }
  func.func @transform_3(%arg0: i32) -> (i32, i32) {
    %c0_i32 = arith.constant 0 : i32
    %c0_i32_0 = arith.constant 0 : i32
    %c0_i32_1 = arith.constant 0 : i32
    return %c0_i32, %c0_i32_0 : i32, i32
  }
  func.func @transform_4(%arg0: i32) -> (i32, i32) {
    %c0_i32 = arith.constant 0 : i32
    %c0_i32_0 = arith.constant 0 : i32
    %c0_i32_1 = arith.constant 0 : i32
    return %c0_i32, %c0_i32_0 : i32, i32
  }
  func.func @transform_5(%arg0: i32) -> (i32, i32, i32) {
    %c0_i32 = arith.constant 0 : i32
    %c0_i32_0 = arith.constant 0 : i32
    %c0_i32_1 = arith.constant 0 : i32
    return %arg0, %c0_i32, %c0_i32_0 : i32, i32, i32
  }
}

module attributes {stable_mosaic.version = 11 : i64} {
  func.func @_transformer_kernel(%arg0: i32, %arg1: i32, %arg2: memref<1x32x64xf32, #tpu.memory_space<vmem>>, %arg3: memref<1x1x64xf32, #tpu.memory_space<vmem>>, %arg4: memref<1x1x64xf32, #tpu.memory_space<vmem>>, %arg5: memref<1x64x192xbf16, #tpu.memory_space<vmem>>, %arg6: memref<1x1x192xf32, #tpu.memory_space<vmem>>, %arg7: memref<1x64x64xbf16, #tpu.memory_space<vmem>>, %arg8: memref<1x1x64xf32, #tpu.memory_space<vmem>>, %arg9: memref<1x1x64xf32, #tpu.memory_space<vmem>>, %arg10: memref<1x1x64xf32, #tpu.memory_space<vmem>>, %arg11: memref<1x64x256xbf16, #tpu.memory_space<vmem>>, %arg12: memref<1x1x256xf32, #tpu.memory_space<vmem>>, %arg13: memref<1x256x64xbf16, #tpu.memory_space<vmem>>, %arg14: memref<1x1x64xf32, #tpu.memory_space<vmem>>, %arg15: memref<1x32x64xf32, #tpu.memory_space<vmem>>) attributes {dimension_semantics = [#tpu.dimension_semantics<parallel>, #tpu.dimension_semantics<arbitrary>], iteration_bounds = array<i64: 2, 2>, scalar_prefetch = 0 : i64, scratch_operands = 0 : i64, tpu.core_type = #tpu.core_type<tc>, window_params = [{transform_indices = @transform_0, window_bounds = array<i64: 1, 32, 64>}, {transform_indices = @transform_1, window_bounds = array<i64: 1, 1, 64>}, {transform_indices = @transform_2, window_bounds = array<i64: 1, 1, 64>}, {transform_indices = @transform_3, window_bounds = array<i64: 1, 64, 192>}, {transform_indices = @transform_4, window_bounds = array<i64: 1, 1, 192>}, {transform_indices = @transform_5, window_bounds = array<i64: 1, 64, 64>}, {transform_indices = @transform_6, window_bounds = array<i64: 1, 1, 64>}, {transform_indices = @transform_7, window_bounds = array<i64: 1, 1, 64>}, {transform_indices = @transform_8, window_bounds = array<i64: 1, 1, 64>}, {transform_indices = @transform_9, window_bounds = array<i64: 1, 64, 256>}, {transform_indices = @transform_10, window_bounds = array<i64: 1, 1, 256>}, {transform_indices = @transform_11, window_bounds = array<i64: 1, 256, 64>}, {transform_indices = @transform_12, window_bounds = array<i64: 1, 1, 64>}, {transform_indices = @transform_13, window_bounds = array<i64: 1, 32, 64>}]} {
    %c0_i32 = arith.constant 0 : i32
    %0 = arith.cmpi eq, %arg1, %c0_i32 : i32
    %1 = arith.extui %0 : i1 to i32
    %c0_i32_0 = arith.constant 0 : i32
    %2 = arith.cmpi ne, %1, %c0_i32_0 : i32
    scf.if %2 {
      %c0_63 = arith.constant 0 : index
      %c0_64 = arith.constant 0 : index
      %c0_65 = arith.constant 0 : index
      %164 = vector.load %arg2[%c0_63, %c0_64, %c0_65] : memref<1x32x64xf32, #tpu.memory_space<vmem>>, vector<1x32x64xf32>
      %165 = vector.shape_cast %164 : vector<1x32x64xf32> to vector<32x64xf32>
      %c0_66 = arith.constant 0 : index
      %c0_67 = arith.constant 0 : index
      %c0_68 = arith.constant 0 : index
      %166 = vector.load %arg15[%c0_66, %c0_67, %c0_68] : memref<1x32x64xf32, #tpu.memory_space<vmem>>, vector<1x32x64xf32>
      %167 = vector.shape_cast %166 : vector<1x32x64xf32> to vector<32x64xf32>
      %168 = vector.shape_cast %165 : vector<32x64xf32> to vector<1x32x64xf32>
      tpu.vector_store %arg15[%c0_66, %c0_67, %c0_68], %168 {strides = array<i32>} : memref<1x32x64xf32, #tpu.memory_space<vmem>>, vector<1x32x64xf32>,
    } else {
    }
    %c0 = arith.constant 0 : index
    %c0_1 = arith.constant 0 : index
    %c0_2 = arith.constant 0 : index
    %3 = vector.load %arg15[%c0, %c0_1, %c0_2] : memref<1x32x64xf32, #tpu.memory_space<vmem>>, vector<1x32x64xf32>
    %4 = vector.shape_cast %3 : vector<1x32x64xf32> to vector<32x64xf32>
    %c0_3 = arith.constant 0 : index
    %c0_4 = arith.constant 0 : index
    %c0_5 = arith.constant 0 : index
    %5 = vector.load %arg3[%c0_3, %c0_4, %c0_5] : memref<1x1x64xf32, #tpu.memory_space<vmem>>, vector<1x1x64xf32>
    %6 = vector.shape_cast %5 : vector<1x1x64xf32> to vector<1x64xf32>
    %c0_6 = arith.constant 0 : index
    %c0_7 = arith.constant 0 : index
    %c0_8 = arith.constant 0 : index
    %7 = vector.load %arg4[%c0_6, %c0_7, %c0_8] : memref<1x1x64xf32, #tpu.memory_space<vmem>>, vector<1x1x64xf32>
    %8 = vector.shape_cast %7 : vector<1x1x64xf32> to vector<1x64xf32>
    %cst = arith.constant dense<0.000000e+00> : vector<32xf32>
    %9 = vector.multi_reduction <add>, %4, %cst [1] : vector<32x64xf32> to vector<32xf32>
    %10 = vector.shape_cast %9 : vector<32xf32> to vector<32x1xf32>
    %cst_9 = arith.constant 6.400000e+01 : f32
    %11 = vector.broadcast %cst_9 : f32 to vector<32x1xf32>
    %12 = arith.divf %10, %11 : vector<32x1xf32>
    %13 = vector.broadcast %12 : vector<32x1xf32> to vector<32x64xf32>
    %14 = arith.subf %4, %13 : vector<32x64xf32>
    %15 = arith.mulf %14, %14 : vector<32x64xf32>
    %cst_10 = arith.constant dense<0.000000e+00> : vector<32xf32>
    %16 = vector.multi_reduction <add>, %15, %cst_10 [1] : vector<32x64xf32> to vector<32xf32>
    %17 = vector.shape_cast %16 : vector<32xf32> to vector<32x1xf32>
    %cst_11 = arith.constant 6.400000e+01 : f32
    %18 = vector.broadcast %cst_11 : f32 to vector<32x1xf32>
    %19 = arith.divf %17, %18 : vector<32x1xf32>
    %20 = vector.broadcast %12 : vector<32x1xf32> to vector<32x64xf32>
    %21 = arith.subf %4, %20 : vector<32x64xf32>
    %cst_12 = arith.constant 9.99999974E-6 : f32
    %22 = vector.broadcast %cst_12 : f32 to vector<32x1xf32>
    %23 = arith.addf %19, %22 : vector<32x1xf32>
    %24 = math.rsqrt %23 : vector<32x1xf32>
    %25 = vector.broadcast %24 : vector<32x1xf32> to vector<32x64xf32>
    %26 = arith.mulf %21, %25 : vector<32x64xf32>
    %27 = vector.broadcast %6 : vector<1x64xf32> to vector<32x64xf32>
    %28 = arith.mulf %26, %27 : vector<32x64xf32>
    %29 = vector.broadcast %8 : vector<1x64xf32> to vector<32x64xf32>
    %30 = arith.addf %28, %29 : vector<32x64xf32>
    %31 = arith.truncf %30 : vector<32x64xf32> to vector<32x64xbf16>
    %c0_13 = arith.constant 0 : index
    %c0_14 = arith.constant 0 : index
    %c0_15 = arith.constant 0 : index
    %32 = vector.load %arg5[%c0_13, %c0_14, %c0_15] : memref<1x64x192xbf16, #tpu.memory_space<vmem>>, vector<1x64x192xbf16>
    %33 = vector.shape_cast %32 : vector<1x64x192xbf16> to vector<64x192xbf16>
    %cst_16 = arith.constant dense<0.000000e+00> : vector<32x192xf32>
    %34 = tpu.matmul %31, %33, %cst_16 {dimension_numbers = #tpu.dot_dimension_numbers<[1], [0], [0], [1], [0, 0, 1, 1], [], []>} : vector<32x64xbf16>, vector<64x192xbf16>, vector<32x192xf32> -> vector<32x192xf32>
    %c0_17 = arith.constant 0 : index
    %c0_18 = arith.constant 0 : index
    %c0_19 = arith.constant 0 : index
    %35 = vector.load %arg6[%c0_17, %c0_18, %c0_19] : memref<1x1x192xf32, #tpu.memory_space<vmem>>, vector<1x1x192xf32>
    %36 = vector.shape_cast %35 : vector<1x1x192xf32> to vector<1x192xf32>
    %37 = vector.broadcast %36 : vector<1x192xf32> to vector<32x192xf32>
    %38 = arith.addf %34, %37 : vector<32x192xf32>
    %39 = vector.extract_strided_slice %38 {offsets = [0, 0], sizes = [32, 64], strides = [1, 1]} : vector<32x192xf32> to vector<32x64xf32>
    %40 = vector.extract_strided_slice %38 {offsets = [0, 64], sizes = [32, 64], strides = [1, 1]} : vector<32x192xf32> to vector<32x64xf32>
    %41 = vector.extract_strided_slice %38 {offsets = [0, 128], sizes = [32, 64], strides = [1, 1]} : vector<32x192xf32> to vector<32x64xf32>
    %42 = vector.extract_strided_slice %39 {offsets = [0, 0], sizes = [32, 16], strides = [1, 1]} : vector<32x64xf32> to vector<32x16xf32>
    %43 = vector.extract_strided_slice %39 {offsets = [0, 16], sizes = [32, 16], strides = [1, 1]} : vector<32x64xf32> to vector<32x16xf32>
    %44 = vector.extract_strided_slice %39 {offsets = [0, 32], sizes = [32, 16], strides = [1, 1]} : vector<32x64xf32> to vector<32x16xf32>
    %45 = vector.extract_strided_slice %39 {offsets = [0, 48], sizes = [32, 16], strides = [1, 1]} : vector<32x64xf32> to vector<32x16xf32>
    %46 = vector.shape_cast %42 : vector<32x16xf32> to vector<1x32x16xf32>
    %47 = vector.shape_cast %43 : vector<32x16xf32> to vector<1x32x16xf32>
    %48 = vector.shape_cast %44 : vector<32x16xf32> to vector<1x32x16xf32>
    %49 = vector.shape_cast %45 : vector<32x16xf32> to vector<1x32x16xf32>
    %50 = tpu.concatenate %46, %47, %48, %49 in 0 : vector<1x32x16xf32>, vector<1x32x16xf32>, vector<1x32x16xf32>, vector<1x32x16xf32> -> vector<4x32x16xf32>
    %51 = arith.truncf %50 : vector<4x32x16xf32> to vector<4x32x16xbf16>
    %52 = vector.extract_strided_slice %40 {offsets = [0, 0], sizes = [32, 16], strides = [1, 1]} : vector<32x64xf32> to vector<32x16xf32>
    %53 = vector.extract_strided_slice %40 {offsets = [0, 16], sizes = [32, 16], strides = [1, 1]} : vector<32x64xf32> to vector<32x16xf32>
    %54 = vector.extract_strided_slice %40 {offsets = [0, 32], sizes = [32, 16], strides = [1, 1]} : vector<32x64xf32> to vector<32x16xf32>
    %55 = vector.extract_strided_slice %40 {offsets = [0, 48], sizes = [32, 16], strides = [1, 1]} : vector<32x64xf32> to vector<32x16xf32>
    %56 = vector.shape_cast %52 : vector<32x16xf32> to vector<1x32x16xf32>
    %57 = vector.shape_cast %53 : vector<32x16xf32> to vector<1x32x16xf32>
    %58 = vector.shape_cast %54 : vector<32x16xf32> to vector<1x32x16xf32>
    %59 = vector.shape_cast %55 : vector<32x16xf32> to vector<1x32x16xf32>
    %60 = tpu.concatenate %56, %57, %58, %59 in 0 : vector<1x32x16xf32>, vector<1x32x16xf32>, vector<1x32x16xf32>, vector<1x32x16xf32> -> vector<4x32x16xf32>
    %61 = arith.truncf %60 : vector<4x32x16xf32> to vector<4x32x16xbf16>
    %62 = vector.extract_strided_slice %41 {offsets = [0, 0], sizes = [32, 16], strides = [1, 1]} : vector<32x64xf32> to vector<32x16xf32>
    %63 = vector.extract_strided_slice %41 {offsets = [0, 16], sizes = [32, 16], strides = [1, 1]} : vector<32x64xf32> to vector<32x16xf32>
    %64 = vector.extract_strided_slice %41 {offsets = [0, 32], sizes = [32, 16], strides = [1, 1]} : vector<32x64xf32> to vector<32x16xf32>
    %65 = vector.extract_strided_slice %41 {offsets = [0, 48], sizes = [32, 16], strides = [1, 1]} : vector<32x64xf32> to vector<32x16xf32>
    %66 = vector.shape_cast %62 : vector<32x16xf32> to vector<1x32x16xf32>
    %67 = vector.shape_cast %63 : vector<32x16xf32> to vector<1x32x16xf32>
    %68 = vector.shape_cast %64 : vector<32x16xf32> to vector<1x32x16xf32>
    %69 = vector.shape_cast %65 : vector<32x16xf32> to vector<1x32x16xf32>
    %70 = tpu.concatenate %66, %67, %68, %69 in 0 : vector<1x32x16xf32>, vector<1x32x16xf32>, vector<1x32x16xf32>, vector<1x32x16xf32> -> vector<4x32x16xf32>
    %71 = arith.truncf %70 : vector<4x32x16xf32> to vector<4x32x16xbf16>
    %cst_20 = arith.constant dense<0.000000e+00> : vector<4x32x32xf32>
    %72 = tpu.matmul %51, %61, %cst_20 {dimension_numbers = #tpu.dot_dimension_numbers<[2], [2], [1], [1], [0, 0, 0, 1, 1, 1], [0], [0]>} : vector<4x32x16xbf16>, vector<4x32x16xbf16>, vector<4x32x32xf32> -> vector<4x32x32xf32>
    %73 = tpu.iota {dimensions = array<i32: 2>} : vector<1x1x32xi32>
    %c17_i32 = arith.constant 17 : i32
    %74 = vector.broadcast %c17_i32 : i32 to vector<1x1x32xi32>
    %75 = arith.cmpi slt, %73, %74 : vector<1x1x32xi32>
    %cst_21 = arith.constant -1.000000e+30 : f32
    %76 = vector.shape_cast %75 : vector<1x1x32xi1> to vector<1x1x32xi1>
    %77 = vector.broadcast %76 : vector<1x1x32xi1> to vector<4x32x32xi1>
    %78 = vector.broadcast %cst_21 : f32 to vector<4x32x32xf32>
    %79 = arith.select %77, %72, %78 : vector<4x32x32xi1>, vector<4x32x32xf32>
    %cst_22 = arith.constant dense<0xFF800000> : vector<4x32xf32>
    %80 = vector.multi_reduction <maximumf>, %79, %cst_22 [2] : vector<4x32x32xf32> to vector<4x32xf32>
    %81 = vector.shape_cast %80 : vector<4x32xf32> to vector<4x32x1xf32>
    %82 = vector.broadcast %81 : vector<4x32x1xf32> to vector<4x32x32xf32>
    %83 = arith.subf %79, %82 : vector<4x32x32xf32>
    %84 = math.exp %83 : vector<4x32x32xf32>
    %cst_23 = arith.constant dense<0.000000e+00> : vector<4x32xf32>
    %85 = vector.multi_reduction <add>, %84, %cst_23 [2] : vector<4x32x32xf32> to vector<4x32xf32>
    %86 = vector.shape_cast %85 : vector<4x32xf32> to vector<4x32x1xf32>
    %87 = arith.truncf %84 : vector<4x32x32xf32> to vector<4x32x32xbf16>
    %cst_24 = arith.constant dense<0.000000e+00> : vector<4x32x16xf32>
    %88 = tpu.matmul %87, %71, %cst_24 {dimension_numbers = #tpu.dot_dimension_numbers<[2], [1], [1], [2], [0, 0, 0, 1, 1, 2], [0], [0]>} : vector<4x32x32xbf16>, vector<4x32x16xbf16>, vector<4x32x16xf32> -> vector<4x32x16xf32>
    %89 = tpu.reciprocal %86 : vector<4x32x1xf32> -> vector<4x32x1xf32>
    %90 = vector.broadcast %89 : vector<4x32x1xf32> to vector<4x32x16xf32>
    %91 = arith.mulf %88, %90 : vector<4x32x16xf32>
    %92 = vector.extract_strided_slice %91 {offsets = [0, 0, 0], sizes = [1, 32, 16], strides = [1, 1, 1]} : vector<4x32x16xf32> to vector<1x32x16xf32>
    %93 = vector.shape_cast %92 : vector<1x32x16xf32> to vector<32x16xf32>
    %94 = vector.extract_strided_slice %91 {offsets = [1, 0, 0], sizes = [1, 32, 16], strides = [1, 1, 1]} : vector<4x32x16xf32> to vector<1x32x16xf32>
    %95 = vector.shape_cast %94 : vector<1x32x16xf32> to vector<32x16xf32>
    %96 = vector.extract_strided_slice %91 {offsets = [2, 0, 0], sizes = [1, 32, 16], strides = [1, 1, 1]} : vector<4x32x16xf32> to vector<1x32x16xf32>
    %97 = vector.shape_cast %96 : vector<1x32x16xf32> to vector<32x16xf32>
    %98 = vector.extract_strided_slice %91 {offsets = [3, 0, 0], sizes = [1, 32, 16], strides = [1, 1, 1]} : vector<4x32x16xf32> to vector<1x32x16xf32>
    %99 = vector.shape_cast %98 : vector<1x32x16xf32> to vector<32x16xf32>
    %100 = tpu.concatenate %93, %95, %97, %99 in 1 : vector<32x16xf32>, vector<32x16xf32>, vector<32x16xf32>, vector<32x16xf32> -> vector<32x64xf32>
    %101 = arith.truncf %100 : vector<32x64xf32> to vector<32x64xbf16>
    %c0_25 = arith.constant 0 : index
    %c0_26 = arith.constant 0 : index
    %c0_27 = arith.constant 0 : index
    %102 = vector.load %arg7[%c0_25, %c0_26, %c0_27] : memref<1x64x64xbf16, #tpu.memory_space<vmem>>, vector<1x64x64xbf16>
    %103 = vector.shape_cast %102 : vector<1x64x64xbf16> to vector<64x64xbf16>
    %cst_28 = arith.constant dense<0.000000e+00> : vector<32x64xf32>
    %104 = tpu.matmul %101, %103, %cst_28 {dimension_numbers = #tpu.dot_dimension_numbers<[1], [0], [0], [1], [0, 0, 1, 1], [], []>} : vector<32x64xbf16>, vector<64x64xbf16>, vector<32x64xf32> -> vector<32x64xf32>
    %c0_29 = arith.constant 0 : index
    %c0_30 = arith.constant 0 : index
    %c0_31 = arith.constant 0 : index
    %105 = vector.load %arg8[%c0_29, %c0_30, %c0_31] : memref<1x1x64xf32, #tpu.memory_space<vmem>>, vector<1x1x64xf32>
    %106 = vector.shape_cast %105 : vector<1x1x64xf32> to vector<1x64xf32>
    %107 = vector.broadcast %106 : vector<1x64xf32> to vector<32x64xf32>
    %108 = arith.addf %104, %107 : vector<32x64xf32>
    %109 = arith.addf %4, %108 : vector<32x64xf32>
    %c0_32 = arith.constant 0 : index
    %c0_33 = arith.constant 0 : index
    %c0_34 = arith.constant 0 : index
    %110 = vector.load %arg9[%c0_32, %c0_33, %c0_34] : memref<1x1x64xf32, #tpu.memory_space<vmem>>, vector<1x1x64xf32>
    %111 = vector.shape_cast %110 : vector<1x1x64xf32> to vector<1x64xf32>
    %c0_35 = arith.constant 0 : index
    %c0_36 = arith.constant 0 : index
    %c0_37 = arith.constant 0 : index
    %112 = vector.load %arg10[%c0_35, %c0_36, %c0_37] : memref<1x1x64xf32, #tpu.memory_space<vmem>>, vector<1x1x64xf32>
    %113 = vector.shape_cast %112 : vector<1x1x64xf32> to vector<1x64xf32>
    %cst_38 = arith.constant dense<0.000000e+00> : vector<32xf32>
    %114 = vector.multi_reduction <add>, %109, %cst_38 [1] : vector<32x64xf32> to vector<32xf32>
    %115 = vector.shape_cast %114 : vector<32xf32> to vector<32x1xf32>
    %cst_39 = arith.constant 6.400000e+01 : f32
    %116 = vector.broadcast %cst_39 : f32 to vector<32x1xf32>
    %117 = arith.divf %115, %116 : vector<32x1xf32>
    %118 = vector.broadcast %117 : vector<32x1xf32> to vector<32x64xf32>
    %119 = arith.subf %109, %118 : vector<32x64xf32>
    %120 = arith.mulf %119, %119 : vector<32x64xf32>
    %cst_40 = arith.constant dense<0.000000e+00> : vector<32xf32>
    %121 = vector.multi_reduction <add>, %120, %cst_40 [1] : vector<32x64xf32> to vector<32xf32>
    %122 = vector.shape_cast %121 : vector<32xf32> to vector<32x1xf32>
    %cst_41 = arith.constant 6.400000e+01 : f32
    %123 = vector.broadcast %cst_41 : f32 to vector<32x1xf32>
    %124 = arith.divf %122, %123 : vector<32x1xf32>
    %125 = vector.broadcast %117 : vector<32x1xf32> to vector<32x64xf32>
    %126 = arith.subf %109, %125 : vector<32x64xf32>
    %cst_42 = arith.constant 9.99999974E-6 : f32
    %127 = vector.broadcast %cst_42 : f32 to vector<32x1xf32>
    %128 = arith.addf %124, %127 : vector<32x1xf32>
    %129 = math.rsqrt %128 : vector<32x1xf32>
    %130 = vector.broadcast %129 : vector<32x1xf32> to vector<32x64xf32>
    %131 = arith.mulf %126, %130 : vector<32x64xf32>
    %132 = vector.broadcast %111 : vector<1x64xf32> to vector<32x64xf32>
    %133 = arith.mulf %131, %132 : vector<32x64xf32>
    %134 = vector.broadcast %113 : vector<1x64xf32> to vector<32x64xf32>
    %135 = arith.addf %133, %134 : vector<32x64xf32>
    %136 = arith.truncf %135 : vector<32x64xf32> to vector<32x64xbf16>
    %c0_43 = arith.constant 0 : index
    %c0_44 = arith.constant 0 : index
    %c0_45 = arith.constant 0 : index
    %137 = vector.load %arg11[%c0_43, %c0_44, %c0_45] : memref<1x64x256xbf16, #tpu.memory_space<vmem>>, vector<1x64x256xbf16>
    %138 = vector.shape_cast %137 : vector<1x64x256xbf16> to vector<64x256xbf16>
    %cst_46 = arith.constant dense<0.000000e+00> : vector<32x256xf32>
    %139 = tpu.matmul %136, %138, %cst_46 {dimension_numbers = #tpu.dot_dimension_numbers<[1], [0], [0], [1], [0, 0, 1, 1], [], []>} : vector<32x64xbf16>, vector<64x256xbf16>, vector<32x256xf32> -> vector<32x256xf32>
    %c0_47 = arith.constant 0 : index
    %c0_48 = arith.constant 0 : index
    %c0_49 = arith.constant 0 : index
    %140 = vector.load %arg12[%c0_47, %c0_48, %c0_49] : memref<1x1x256xf32, #tpu.memory_space<vmem>>, vector<1x1x256xf32>
    %141 = vector.shape_cast %140 : vector<1x1x256xf32> to vector<1x256xf32>
    %142 = vector.broadcast %141 : vector<1x256xf32> to vector<32x256xf32>
    %143 = arith.addf %139, %142 : vector<32x256xf32>
    %cst_50 = arith.constant 5.000000e-01 : f32
    %144 = vector.broadcast %cst_50 : f32 to vector<32x256xf32>
    %145 = arith.mulf %144, %143 : vector<32x256xf32>
    %cst_51 = arith.constant 0.707106769 : f32
    %146 = vector.broadcast %cst_51 : f32 to vector<32x256xf32>
    %147 = arith.mulf %143, %146 : vector<32x256xf32>
    %148 = math.erf %147 : vector<32x256xf32>
    %cst_52 = arith.constant 1.000000e+00 : f32
    %149 = vector.broadcast %cst_52 : f32 to vector<32x256xf32>
    %150 = arith.addf %149, %148 : vector<32x256xf32>
    %151 = arith.mulf %145, %150 : vector<32x256xf32>
    %152 = arith.truncf %151 : vector<32x256xf32> to vector<32x256xbf16>
    %c0_53 = arith.constant 0 : index
    %c0_54 = arith.constant 0 : index
    %c0_55 = arith.constant 0 : index
    %153 = vector.load %arg13[%c0_53, %c0_54, %c0_55] : memref<1x256x64xbf16, #tpu.memory_space<vmem>>, vector<1x256x64xbf16>
    %154 = vector.shape_cast %153 : vector<1x256x64xbf16> to vector<256x64xbf16>
    %cst_56 = arith.constant dense<0.000000e+00> : vector<32x64xf32>
    %155 = tpu.matmul %152, %154, %cst_56 {dimension_numbers = #tpu.dot_dimension_numbers<[1], [0], [0], [1], [0, 0, 1, 1], [], []>} : vector<32x256xbf16>, vector<256x64xbf16>, vector<32x64xf32> -> vector<32x64xf32>
    %c0_57 = arith.constant 0 : index
    %c0_58 = arith.constant 0 : index
    %c0_59 = arith.constant 0 : index
    %156 = vector.load %arg14[%c0_57, %c0_58, %c0_59] : memref<1x1x64xf32, #tpu.memory_space<vmem>>, vector<1x1x64xf32>
    %157 = vector.shape_cast %156 : vector<1x1x64xf32> to vector<1x64xf32>
    %158 = vector.broadcast %157 : vector<1x64xf32> to vector<32x64xf32>
    %159 = arith.addf %155, %158 : vector<32x64xf32>
    %160 = arith.addf %109, %159 : vector<32x64xf32>
    %c0_60 = arith.constant 0 : index
    %c0_61 = arith.constant 0 : index
    %c0_62 = arith.constant 0 : index
    %161 = vector.load %arg15[%c0_60, %c0_61, %c0_62] : memref<1x32x64xf32, #tpu.memory_space<vmem>>, vector<1x32x64xf32>
    %162 = vector.shape_cast %161 : vector<1x32x64xf32> to vector<32x64xf32>
    %163 = vector.shape_cast %160 : vector<32x64xf32> to vector<1x32x64xf32>
    tpu.vector_store %arg15[%c0_60, %c0_61, %c0_62], %163 {strides = array<i32>} : memref<1x32x64xf32, #tpu.memory_space<vmem>>, vector<1x32x64xf32>,
    return
  }
  func.func @transform_0(%arg0: i32, %arg1: i32) -> (i32, i32, i32) {
    %c0_i32 = arith.constant 0 : i32
    %c0_i32_0 = arith.constant 0 : i32
    %c0_i32_1 = arith.constant 0 : i32
    return %arg0, %c0_i32, %c0_i32_0 : i32, i32, i32
  }
  func.func @transform_1(%arg0: i32, %arg1: i32) -> (i32, i32, i32) {
    %c0_i32 = arith.constant 0 : i32
    %c0_i32_0 = arith.constant 0 : i32
    %c0_i32_1 = arith.constant 0 : i32
    return %arg1, %c0_i32, %c0_i32_0 : i32, i32, i32
  }
  func.func @transform_2(%arg0: i32, %arg1: i32) -> (i32, i32, i32) {
    %c0_i32 = arith.constant 0 : i32
    %c0_i32_0 = arith.constant 0 : i32
    %c0_i32_1 = arith.constant 0 : i32
    return %arg1, %c0_i32, %c0_i32_0 : i32, i32, i32
  }
  func.func @transform_3(%arg0: i32, %arg1: i32) -> (i32, i32, i32) {
    %c0_i32 = arith.constant 0 : i32
    %c0_i32_0 = arith.constant 0 : i32
    %c0_i32_1 = arith.constant 0 : i32
    return %arg1, %c0_i32, %c0_i32_0 : i32, i32, i32
  }
  func.func @transform_4(%arg0: i32, %arg1: i32) -> (i32, i32, i32) {
    %c0_i32 = arith.constant 0 : i32
    %c0_i32_0 = arith.constant 0 : i32
    %c0_i32_1 = arith.constant 0 : i32
    return %arg1, %c0_i32, %c0_i32_0 : i32, i32, i32
  }
  func.func @transform_5(%arg0: i32, %arg1: i32) -> (i32, i32, i32) {
    %c0_i32 = arith.constant 0 : i32
    %c0_i32_0 = arith.constant 0 : i32
    %c0_i32_1 = arith.constant 0 : i32
    return %arg1, %c0_i32, %c0_i32_0 : i32, i32, i32
  }
  func.func @transform_6(%arg0: i32, %arg1: i32) -> (i32, i32, i32) {
    %c0_i32 = arith.constant 0 : i32
    %c0_i32_0 = arith.constant 0 : i32
    %c0_i32_1 = arith.constant 0 : i32
    return %arg1, %c0_i32, %c0_i32_0 : i32, i32, i32
  }
  func.func @transform_7(%arg0: i32, %arg1: i32) -> (i32, i32, i32) {
    %c0_i32 = arith.constant 0 : i32
    %c0_i32_0 = arith.constant 0 : i32
    %c0_i32_1 = arith.constant 0 : i32
    return %arg1, %c0_i32, %c0_i32_0 : i32, i32, i32
  }
  func.func @transform_8(%arg0: i32, %arg1: i32) -> (i32, i32, i32) {
    %c0_i32 = arith.constant 0 : i32
    %c0_i32_0 = arith.constant 0 : i32
    %c0_i32_1 = arith.constant 0 : i32
    return %arg1, %c0_i32, %c0_i32_0 : i32, i32, i32
  }
  func.func @transform_9(%arg0: i32, %arg1: i32) -> (i32, i32, i32) {
    %c0_i32 = arith.constant 0 : i32
    %c0_i32_0 = arith.constant 0 : i32
    %c0_i32_1 = arith.constant 0 : i32
    return %arg1, %c0_i32, %c0_i32_0 : i32, i32, i32
  }
  func.func @transform_10(%arg0: i32, %arg1: i32) -> (i32, i32, i32) {
    %c0_i32 = arith.constant 0 : i32
    %c0_i32_0 = arith.constant 0 : i32
    %c0_i32_1 = arith.constant 0 : i32
    return %arg1, %c0_i32, %c0_i32_0 : i32, i32, i32
  }
  func.func @transform_11(%arg0: i32, %arg1: i32) -> (i32, i32, i32) {
    %c0_i32 = arith.constant 0 : i32
    %c0_i32_0 = arith.constant 0 : i32
    %c0_i32_1 = arith.constant 0 : i32
    return %arg1, %c0_i32, %c0_i32_0 : i32, i32, i32
  }
  func.func @transform_12(%arg0: i32, %arg1: i32) -> (i32, i32, i32) {
    %c0_i32 = arith.constant 0 : i32
    %c0_i32_0 = arith.constant 0 : i32
    %c0_i32_1 = arith.constant 0 : i32
    return %arg1, %c0_i32, %c0_i32_0 : i32, i32, i32
  }
  func.func @transform_13(%arg0: i32, %arg1: i32) -> (i32, i32, i32) {
    %c0_i32 = arith.constant 0 : i32
    %c0_i32_0 = arith.constant 0 : i32
    %c0_i32_1 = arith.constant 0 : i32
    return %arg0, %c0_i32, %c0_i32_0 : i32, i32, i32
  }
}

</mosaic_0001>

<llo_original>
// kernel: frozen_openclip_image_embedder_v2.3
$region0: #{frozen_openclip_image_embedder_v2.3}
  #allocation0 [shape = 'u32[]', space=smem, size = 0x4, offset = 0x4, fixed_abs, tag = 'smem constant byte address 0x4 - core index']
  #allocation1 [shape = 'u32[72,128]{1,0:T(1,128)}', space=vmem, size = 0x9000, scoped, tag = 'internal scratch']
  %s0 = inlined_call_operand.hbm [shape: f32[2,3,16,16], index: 0, kind: input, shape index: {}]
  %s1 = inlined_call_operand.vmem [shape: bf16[32,16], index: 1, kind: input, shape index: {}]
  %s2 = inlined_call_operand.hbm [shape: bf16[16,32], index: 2, kind: input, shape index: {}]
  %s3 = inlined_call_operand.hbm [shape: f32[96,1], index: 3, kind: input, shape index: {}]
  %s4 = inlined_call_operand.hbm [shape: f32[96,1], index: 4, kind: input, shape index: {}]
  %s5 = inlined_call_operand.vmem [shape: f32[2,3,32,32], index: 5, kind: output, shape index: {}]
  %s6 = sld [smem:[#allocation0]]
  $region69: #{frozen_openclip_image_embedder_v2.3} parent=0
    _
  %s8 = ssub.s32 1, %s6
  %s9 = scalar_select 0, %s8, %s6
  $region1: #{frozen_openclip_image_embedder_v2.3} parent=0
    #allocation2 [shape = 'u8[49152]{0}', space=vmem, size = 0xc000, scoped, tag = 'input window, operand 0']
    #allocation3 [shape = 's32[2]{0}', space=sflag, size = 0x8, scoped, tag = 'scoped memory for frozen_openclip_image_embedder_v2.3']
    #allocation4 [shape = 'u8[4096]{0}', space=vmem, size = 0x1000, scoped, tag = 'input window, operand 2, single buffered']
    #allocation5 [shape = 's32[1]{0}', space=sflag, size = 0x4, scoped, tag = 'scoped memory for frozen_openclip_image_embedder_v2.3']
    #allocation6 [shape = 'u8[49152]{0}', space=vmem, size = 0xc000, scoped, tag = 'input window, operand 3, single buffered']
    #allocation7 [shape = 'u8[49152]{0}', space=vmem, size = 0xc000, scoped, tag = 'input window, operand 4, single buffered']
    #allocation8 [shape = 's32[1]{0}', space=sflag, size = 0x4, scoped, tag = 'scoped memory for frozen_openclip_image_embedder_v2.3']
    %10 = vsyncpa [#allocation3], 0
    %s11 = scalar_lea.sflag [#allocation3], 1
    %12 = vsyncpa %s11, 0
    %13 = vsyncpa [#allocation5], 0
    %14 = vsyncpa [#allocation8], 0
    loop: start=0, step=1, limit=4
    $region2: #{frozen_openclip_image_embedder_v2.3} parent=1 // loop_pre_header
      _
    $region3: #{frozen_openclip_image_embedder_v2.3} parent=1 // loop_header
      %s16 = sphi 0, %s20
      %p17 = scmp.ge.s32.totalorder %s16, 4
      %s26 = sphi 0, %s28
      %s29 = sphi 0, %s26
      %s30 = sphi 0, %s29
      %s46 = sphi 0, %s30
      %s50 = sphi 0, %s50
      %s52 = sphi 0, %s50
      %s53 = sphi 0, %s52
      %s67 = sphi 0, %s53
      %s71 = sphi 0, %s71
      %s73 = sphi 0, %s71
      %s74 = sphi 0, %s73
      %s88 = sphi 0, %s74
      %s92 = sphi 0, %s92
      %s94 = sphi 0, %s92
      %s95 = sphi 0, %s94
      %s109 = sphi 0, %s95
      %s113 = sphi 0, %s113
      %s115 = sphi 0, %s113
      %s116 = sphi 0, %s115
      %s130 = sphi 0, %s116
      %s136 = sphi 0, %s138
      %s139 = sphi 0, %s136
      %s140 = sphi 0, %s139
      %s156 = sphi 0, %s140
    $region4: #{frozen_openclip_image_embedder_v2.3} parent=1 // loop_header_branch
      %19 = sbr.rel (%p17) target = $region8
    $region5: #{frozen_openclip_image_embedder_v2.3} parent=1 // loop_body
      %s21 = ssub.s32 %s16, 1
      %s22 = ssub.s32 %s16, 2
      %s23 = sadd.s32 %s16, 1
      %s24 = ssub.s32 %s16, %s23
      %p25 = scmp.eq.s32.totalorder %s24, 0
      %s27 = sadd.s32 %s26, 1
      %s28 = scalar_select %p25, %s26, %s27
      %p31 = pneg %p25
      %p32 = scmp.eq.s32.totalorder %s16, 1
      %p33 = por %p31, %p32
      %p34 = scmp.ne.s32.totalorder %s26, %s29
      %p35 = scmp.eq.s32.totalorder %s16, 0
      %p36 = por %p34, %p35
      %p37 = scmp.ne.s32.totalorder %s26, %s29
      %p38 = scmp.eq.s32.totalorder %s21, 1
      %p39 = por %p37, %p38
      %p40 = scmp.ne.s32.totalorder %s29, %s30
      %p41 = scmp.eq.s32.totalorder %s21, 0
      %p42 = por %p40, %p41
      %p43 = scmp.ne.s32.totalorder %s29, %s30
      %p44 = scmp.eq.s32.totalorder %s22, 1
      %p45 = por %p43, %p44
      %p47 = scmp.ne.s32.totalorder %s30, %s46
      %p48 = scmp.eq.s32.totalorder %s22, 0
      %p49 = por %p47, %p48
      %s51 = sadd.s32 %s50, 1
      %p54 = scmp.eq.s32.totalorder %s16, 1
      %p55 = scmp.ne.s32.totalorder %s50, %s52
      %p56 = scmp.eq.s32.totalorder %s16, 0
      %p57 = por %p55, %p56
      %p58 = scmp.ne.s32.totalorder %s50, %s52
      %p59 = scmp.eq.s32.totalorder %s21, 1
      %p60 = por %p58, %p59
      %p61 = scmp.ne.s32.totalorder %s52, %s53
      %p62 = scmp.eq.s32.totalorder %s21, 0
      %p63 = por %p61, %p62
      %p64 = scmp.ne.s32.totalorder %s52, %s53
      %p65 = scmp.eq.s32.totalorder %s22, 1
      %p66 = por %p64, %p65
      %p68 = scmp.ne.s32.totalorder %s53, %s67
      %p69 = scmp.eq.s32.totalorder %s22, 0
      %p70 = por %p68, %p69
      %s72 = sadd.s32 %s71, 1
      %p75 = scmp.eq.s32.totalorder %s16, 1
      %p76 = scmp.ne.s32.totalorder %s71, %s73
      %p77 = scmp.eq.s32.totalorder %s16, 0
      %p78 = por %p76, %p77
      %p79 = scmp.ne.s32.totalorder %s71, %s73
      %p80 = scmp.eq.s32.totalorder %s21, 1
      %p81 = por %p79, %p80
      %p82 = scmp.ne.s32.totalorder %s73, %s74
      %p83 = scmp.eq.s32.totalorder %s21, 0
      %p84 = por %p82, %p83
      %p85 = scmp.ne.s32.totalorder %s73, %s74
      %p86 = scmp.eq.s32.totalorder %s22, 1
      %p87 = por %p85, %p86
      %p89 = scmp.ne.s32.totalorder %s74, %s88
      %p90 = scmp.eq.s32.totalorder %s22, 0
      %p91 = por %p89, %p90
      %s93 = sadd.s32 %s92, 1
      %p96 = scmp.eq.s32.totalorder %s16, 1
      %p97 = scmp.ne.s32.totalorder %s92, %s94
      %p98 = scmp.eq.s32.totalorder %s16, 0
      %p99 = por %p97, %p98
      %p100 = scmp.ne.s32.totalorder %s92, %s94
      %p101 = scmp.eq.s32.totalorder %s21, 1
      %p102 = por %p100, %p101
      %p103 = scmp.ne.s32.totalorder %s94, %s95
      %p104 = scmp.eq.s32.totalorder %s21, 0
      %p105 = por %p103, %p104
      %p106 = scmp.ne.s32.totalorder %s94, %s95
      %p107 = scmp.eq.s32.totalorder %s22, 1
      %p108 = por %p106, %p107
      %p110 = scmp.ne.s32.totalorder %s95, %s109
      %p111 = scmp.eq.s32.totalorder %s22, 0
      %p112 = por %p110, %p111
      %s114 = sadd.s32 %s113, 1
      %p117 = scmp.eq.s32.totalorder %s16, 1
      %p118 = scmp.ne.s32.totalorder %s113, %s115
      %p119 = scmp.eq.s32.totalorder %s16, 0
      %p120 = por %p118, %p119
      %p121 = scmp.ne.s32.totalorder %s113, %s115
      %p122 = scmp.eq.s32.totalorder %s21, 1
      %p123 = por %p121, %p122
      %p124 = scmp.ne.s32.totalorder %s115, %s116
      %p125 = scmp.eq.s32.totalorder %s21, 0
      %p126 = por %p124, %p125
      %p127 = scmp.ne.s32.totalorder %s115, %s116
      %p128 = scmp.eq.s32.totalorder %s22, 1
      %p129 = por %p127, %p128
      %p131 = scmp.ne.s32.totalorder %s116, %s130
      %p132 = scmp.eq.s32.totalorder %s22, 0
      %p133 = por %p131, %p132
      %s134 = ssub.s32 %s16, %s23
      %p135 = scmp.eq.s32.totalorder %s134, 0
      %s137 = sadd.s32 %s136, 1
      %s138 = scalar_select %p135, %s136, %s137
      %p141 = pneg %p135
      %p142 = scmp.eq.s32.totalorder %s16, 1
      %p143 = por %p141, %p142
      %p144 = scmp.ne.s32.totalorder %s136, %s139
      %p145 = scmp.eq.s32.totalorder %s16, 0
      %p146 = por %p144, %p145
      %p147 = scmp.ne.s32.totalorder %s136, %s139
      %p148 = scmp.eq.s32.totalorder %s21, 1
      %p149 = por %p147, %p148
      %p150 = scmp.ne.s32.totalorder %s139, %s140
      %p151 = scmp.eq.s32.totalorder %s21, 0
      %p152 = por %p150, %p151
      %p153 = scmp.ne.s32.totalorder %s139, %s140
      %p154 = scmp.eq.s32.totalorder %s22, 1
      %p155 = por %p153, %p154
      %p157 = scmp.ne.s32.totalorder %s140, %s156
      %p158 = scmp.eq.s32.totalorder %s22, 0
      %p159 = por %p157, %p158
      %p160 = scmp.le.s32.totalorder 1, %s16
      %p161 = scmp.lt.s32.totalorder %s16, 3
      %p162 = pnand %p160, %p161
      %p163 = pneg %p162
      // Predicated region
      $region9: #{frozen_openclip_image_embedder_v2.3} parent=5 // pred_check
        _
      $region10: #{frozen_openclip_image_embedder_v2.3} parent=5 // pred_check_branch
        %165 = sbr.rel (%p162) target = $region12
      $region11: #{frozen_openclip_image_embedder_v2.3} parent=5 // pred_region
        %s166 = ssub.s32 %s16, 1
        // Predicated region
        $region13: #{frozen_openclip_image_embedder_v2.3} parent=11 // pred_check
          %p167 = pneg %p63
        $region14: #{frozen_openclip_image_embedder_v2.3} parent=11 // pred_check_branch
          %169 = sbr.rel (%p167) target = $region16
        $region15: #{frozen_openclip_image_embedder_v2.3} parent=11 // pred_region
          _
        $region16: #{frozen_openclip_image_embedder_v2.3} parent=11 // pred_fallthru
          _
        // Predicated region
        $region17: #{frozen_openclip_image_embedder_v2.3} parent=11 // pred_check
          %p170 = pneg %p84
        $region18: #{frozen_openclip_image_embedder_v2.3} parent=11 // pred_check_branch
          %172 = sbr.rel (%p170) target = $region20
        $region19: #{frozen_openclip_image_embedder_v2.3} parent=11 // pred_region
          %174 = vsyncadd [#allocation5], 0
          %s175 = sshll.u32 %s2, 4
          %s176 = int_to_ptr.hbm [resolvable:$true] %s175
          %s177 = sshll.u32 [#allocation4], 4
          %s178 = int_to_ptr.vmem [resolvable:$true] %s177
          %183 = dma.hbm_to_vmem [thread:$0]  %s176, 128, %s178, [#allocation5], 64, 64, 4
        $region20: #{frozen_openclip_image_embedder_v2.3} parent=11 // pred_fallthru
          _
        // Predicated region
        $region21: #{frozen_openclip_image_embedder_v2.3} parent=11 // pred_check
          %p184 = pneg %p105
        $region22: #{frozen_openclip_image_embedder_v2.3} parent=11 // pred_check_branch
          %186 = sbr.rel (%p184) target = $region24
        $region23: #{frozen_openclip_image_embedder_v2.3} parent=11 // pred_region
          %188 = vsyncadd [#allocation5], 0
          %s189 = sshll.u32 %s3, 4
          %s190 = int_to_ptr.hbm [resolvable:$true] %s189
          %s191 = sshll.u32 [#allocation6], 4
          %s192 = int_to_ptr.vmem [resolvable:$true] %s191
          %197 = dma.hbm_to_vmem [thread:$0]  %s190, 1536, %s192, [#allocation5], 128, 128, 8
        $region24: #{frozen_openclip_image_embedder_v2.3} parent=11 // pred_fallthru
          _
        // Predicated region
        $region25: #{frozen_openclip_image_embedder_v2.3} parent=11 // pred_check
          %p198 = pneg %p126
        $region26: #{frozen_openclip_image_embedder_v2.3} parent=11 // pred_check_branch
          %200 = sbr.rel (%p198) target = $region28
        $region27: #{frozen_openclip_image_embedder_v2.3} parent=11 // pred_region
          %202 = vsyncadd [#allocation8], 0
          %s203 = sshll.u32 %s4, 4
          %s204 = int_to_ptr.hbm [resolvable:$true] %s203
          %s205 = sshll.u32 [#allocation7], 4
          %s206 = int_to_ptr.vmem [resolvable:$true] %s205
          %211 = dma.hbm_to_vmem [thread:$0]  %s204, 1536, %s206, [#allocation8], 128, 128, 8
        $region28: #{frozen_openclip_image_embedder_v2.3} parent=11 // pred_fallthru
          _
      $region12: #{frozen_openclip_image_embedder_v2.3} parent=5 // pred_fallthru
        _
      %p212 = scmp.lt.s32.totalorder %s16, 2
      // Predicated region
      $region29: #{frozen_openclip_image_embedder_v2.3} parent=5 // pred_check
        %p213 = pneg %p212
      $region30: #{frozen_openclip_image_embedder_v2.3} parent=5 // pred_check_branch
        %215 = sbr.rel (%p213) target = $region32
      $region31: #{frozen_openclip_image_embedder_v2.3} parent=5 // pred_region
        // Predicated region
        $region33: #{frozen_openclip_image_embedder_v2.3} parent=31 // pred_check
          %p216 = pneg %p36
        $region34: #{frozen_openclip_image_embedder_v2.3} parent=31 // pred_check_branch
          %218 = sbr.rel (%p216) target = $region36
        $region35: #{frozen_openclip_image_embedder_v2.3} parent=31 // pred_region
          %s219 = sand.u32 %s26, 1
          %s220 = scalar_lea.sflag [#allocation3], %s219
          %s221 = sand.u32 %s26, 1
          %s222 = smul.addr %s221, 48
          %s223 = scalar_lea.vmem [#allocation2], %s222
          %225 = vsyncadd %s220, 0
          %s226 = smul.addr %s16, 6
          %s227 = smul.addr %s226, 8
          %s228 = scalar_lea.hbm %s0, %s227
          %s229 = sshll.u32 %s228, 4
          %s230 = int_to_ptr.hbm [resolvable:$true] %s229
          %s231 = sshll.u32 %s223, 4
          %s232 = int_to_ptr.vmem [resolvable:$true] %s231
          %237 = dma.hbm_to_vmem [thread:$0]  %s230, 768, %s232, %s220, 128, 128, 8
        $region36: #{frozen_openclip_image_embedder_v2.3} parent=31 // pred_fallthru
          _
      $region32: #{frozen_openclip_image_embedder_v2.3} parent=5 // pred_fallthru
        _
      %p238 = scmp.le.s32.totalorder 1, %s16
      %p239 = scmp.lt.s32.totalorder %s16, 3
      %p240 = pnand %p238, %p239
      %p241 = pneg %p240
      // Predicated region
      $region37: #{frozen_openclip_image_embedder_v2.3} parent=5 // pred_check
        _
      $region38: #{frozen_openclip_image_embedder_v2.3} parent=5 // pred_check_branch
        %243 = sbr.rel (%p240) target = $region40
      $region39: #{frozen_openclip_image_embedder_v2.3} parent=5 // pred_region
        %s244 = ssub.s32 %s16, 1
        %s245 = sand.u32 %s29, 1
        %s246 = scalar_lea.sflag [#allocation3], %s245
        %s247 = sand.u32 %s29, 1
        %s248 = smul.addr %s247, 48
        %s249 = scalar_lea.vmem [#allocation2], %s248
        // Predicated region
        $region41: #{frozen_openclip_image_embedder_v2.3} parent=39 // pred_check
          %p250 = pneg %p42
        $region42: #{frozen_openclip_image_embedder_v2.3} parent=39 // pred_check_branch
          %252 = sbr.rel (%p250) target = $region44
        $region43: #{frozen_openclip_image_embedder_v2.3} parent=39 // pred_region
          %254 = dma.done %s246, 768
        $region44: #{frozen_openclip_image_embedder_v2.3} parent=39 // pred_fallthru
          _
        // Predicated region
        $region45: #{frozen_openclip_image_embedder_v2.3} parent=39 // pred_check
          %p255 = pneg %p84
        $region46: #{frozen_openclip_image_embedder_v2.3} parent=39 // pred_check_branch
          %257 = sbr.rel (%p255) target = $region48
        $region47: #{frozen_openclip_image_embedder_v2.3} parent=39 // pred_region
          %259 = dma.done [#allocation5], 128
        $region48: #{frozen_openclip_image_embedder_v2.3} parent=39 // pred_fallthru
          _
        // Predicated region
        $region49: #{frozen_openclip_image_embedder_v2.3} parent=39 // pred_check
          %p260 = pneg %p105
        $region50: #{frozen_openclip_image_embedder_v2.3} parent=39 // pred_check_branch
          %262 = sbr.rel (%p260) target = $region52
        $region51: #{frozen_openclip_image_embedder_v2.3} parent=39 // pred_region
          %264 = dma.done [#allocation5], 1536
        $region52: #{frozen_openclip_image_embedder_v2.3} parent=39 // pred_fallthru
          _
        // Predicated region
        $region53: #{frozen_openclip_image_embedder_v2.3} parent=39 // pred_check
          %p265 = pneg %p126
        $region54: #{frozen_openclip_image_embedder_v2.3} parent=39 // pred_check_branch
          %267 = sbr.rel (%p265) target = $region56
        $region55: #{frozen_openclip_image_embedder_v2.3} parent=39 // pred_region
          %269 = dma.done [#allocation8], 1536
        $region56: #{frozen_openclip_image_embedder_v2.3} parent=39 // pred_fallthru
          _
        %s270 = sand.u32 %s29, 1
        %s271 = scalar_lea.sflag [#allocation3], %s270
        %s272 = sand.u32 %s29, 1
        %s273 = smul.addr %s272, 48
        %s274 = scalar_lea.vmem [#allocation2], %s273
        %p275 = pneg %p42
        %p276 = pneg %p39
        %p277 = pneg %p63
        %p278 = pneg %p60
        %p279 = pneg %p84
        %p280 = pneg %p81
        %p281 = pneg %p105
        %p282 = pneg %p102
        %p283 = pneg %p126
        %p284 = pneg %p123
        %p285 = pneg %p152
        %p286 = pneg %p149
        %p287 = scmp.lt.s32.totalorder %s21, 1
        %s288 = scalar_select %p287, %s21, 1
        %s289 = smul.addr %s288, 12
        %s290 = smul.addr %s289, 8
        %s291 = scalar_lea.vmem %s5, %s290
        %p292 = scmp.lt.s32.totalorder %s21, 1
        %s293 = scalar_select %p292, %s21, 1
        %s294 = smul.addr %s293, 12
        %s295 = smul.addr %s294, 8
        %s296 = scalar_lea.vmem %s5, %s295
        %v298 = vld [vmem:[%s249] sm:$0xff]
        %v299 = vld [vmem:[%s249 + $0x8] sm:$0xff]
        %v300 = vld [vmem:[%s249 + $0x10] sm:$0xff]
        %v301 = vld [vmem:[%s249 + $0x18] sm:$0xff]
        %v302 = vld [vmem:[%s249 + $0x20] sm:$0xff]
        %v303 = vld [vmem:[%s249 + $0x28] sm:$0xff]
        %v304 = vpack.c.bf16 %v298, %v298
        %v305 = vpack.c.bf16 %v299, %v299
        %v306 = vpack.c.bf16 %v300, %v300
        %v307 = vpack.c.bf16 %v301, %v301
        %v308 = vpack.c.bf16 %v302, %v302
        %v309 = vpack.c.bf16 %v303, %v303
        %v310 = vld [vmem:[%s1] sm:$0xf]
        %v311 = vld [vmem:[%s1 + $0x4] sm:$0xf]
        %v312 = vld [vmem:[%s1 + $0x8] sm:$0xf]
        %v313 = vld [vmem:[%s1 + $0xc] sm:$0xf]
        %v318 = vunpack.c.l.b16 %v310
        %v319 = vunpack.c.l.b16 %v311
        %v320 = vunpack.c.l.b16 %v312
        %v321 = vunpack.c.l.b16 %v313
        %v322 = vpack.c.b16 %v319, %v318
        %v323 = vpack.c.b16 %v321, %v320
        %v326 = vunpack.c.l.b16 %v304
        %v327 = vunpack.c.l.b16 %v305
        %v328 = vpack.c.b16 %v327, %v326
        %vm330 = vcmask 130048
        %v332 = vsel %vm330, %v322, 0
        %v335 = vsel %vm330, %v323, 0
        %337 = vmatpush.bf16.msra.mxu0 0
        %338 = vmatpush.bf16.msra.mxu0 0
        %339 = vmatpush.bf16.msra.mxu0 0
        %340 = vmatpush.bf16.msra.mxu0 0
        %341 = vmatpush.bf16.msra.mxu0 0
        %342 = vmatpush.bf16.msra.mxu0 0
        %343 = vmatpush.bf16.msra.mxu0 0
        %344 = vmatpush.bf16.msra.mxu0 %v328
        %345 = vmatmul.bf16.gmra.mxu0 %v332
        %v346 = vpop.f32.mrf.mxu0
        %v347 = vadd.f32 0.0, %v346
        %v348 = vpop.f32.mrf.mxu0
        %v349 = vadd.f32 0.0, %v348
        %350 = vmatmul.bf16.gmra.mxu0 %v335
        %v351 = vpop.f32.mrf.mxu0
        %v352 = vadd.f32 0.0, %v351
        %v353 = vpop.f32.mrf.mxu0
        %v354 = vadd.f32 0.0, %v353
        %355 = vdwg.mxu0
        %v358 = vunpack.c.l.b16 %v306
        %v359 = vunpack.c.l.b16 %v307
        %v360 = vpack.c.b16 %v359, %v358
        %362 = vmatpush.bf16.msra.mxu0 0
        %363 = vmatpush.bf16.msra.mxu0 0
        %364 = vmatpush.bf16.msra.mxu0 0
        %365 = vmatpush.bf16.msra.mxu0 0
        %366 = vmatpush.bf16.msra.mxu0 0
        %367 = vmatpush.bf16.msra.mxu0 0
        %368 = vmatpush.bf16.msra.mxu0 0
        %369 = vmatpush.bf16.msra.mxu0 %v360
        %370 = vmatmul.bf16.gmra.mxu0 %v332
        %v371 = vpop.f32.mrf.mxu0
        %v372 = vadd.f32 0.0, %v371
        %v373 = vpop.f32.mrf.mxu0
        %v374 = vadd.f32 0.0, %v373
        %375 = vmatmul.bf16.gmra.mxu0 %v335
        %v376 = vpop.f32.mrf.mxu0
        %v377 = vadd.f32 0.0, %v376
        %v378 = vpop.f32.mrf.mxu0
        %v379 = vadd.f32 0.0, %v378
        %380 = vdwg.mxu0
        %v383 = vunpack.c.l.b16 %v308
        %v384 = vunpack.c.l.b16 %v309
        %v385 = vpack.c.b16 %v384, %v383
        %387 = vmatpush.bf16.msra.mxu0 0
        %388 = vmatpush.bf16.msra.mxu0 0
        %389 = vmatpush.bf16.msra.mxu0 0
        %390 = vmatpush.bf16.msra.mxu0 0
        %391 = vmatpush.bf16.msra.mxu0 0
        %392 = vmatpush.bf16.msra.mxu0 0
        %393 = vmatpush.bf16.msra.mxu0 0
        %394 = vmatpush.bf16.msra.mxu0 %v385
        %395 = vmatmul.bf16.gmra.mxu0 %v332
        %v396 = vpop.f32.mrf.mxu0
        %v397 = vadd.f32 0.0, %v396
        %v398 = vpop.f32.mrf.mxu0
        %v399 = vadd.f32 0.0, %v398
        %400 = vmatmul.bf16.gmra.mxu0 %v335
        %v401 = vpop.f32.mrf.mxu0
        %v402 = vadd.f32 0.0, %v401
        %v403 = vpop.f32.mrf.mxu0
        %v404 = vadd.f32 0.0, %v403
        %405 = vdwg.mxu0
        %v406 = vpack.c.bf16 %v349, %v347
        %v407 = vpack.c.bf16 %v354, %v352
        %v408 = vpack.c.bf16 %v374, %v372
        %v409 = vpack.c.bf16 %v379, %v377
        %v410 = vpack.c.bf16 %v399, %v397
        %v411 = vpack.c.bf16 %v404, %v402
        %v412 = vld [vmem:[#allocation4] sm:$0xf]
        %v413 = vld [vmem:[#allocation4 + $0x4] sm:$0xf]
        %v416 = vunpack.c.l.b16 %v412
        %v417 = vunpack.c.l.b16 %v413
        %v418 = vpack.c.b16 %v417, %v416
        %v421 = vsel %vm330, %v406, 0
        %v424 = vsel %vm330, %v407, 0
        %v427 = vsel %vm330, %v408, 0
        %v430 = vsel %vm330, %v409, 0
        %v433 = vsel %vm330, %v410, 0
        %v436 = vsel %vm330, %v411, 0
        %438 = vmatpush.bf16.msra.mxu0 0
        %439 = vmatpush.bf16.msra.mxu0 0
        %440 = vmatpush.bf16.msra.mxu0 0
        %441 = vmatpush.bf16.msra.mxu0 0
        %442 = vmatpush.bf16.msra.mxu0 0
        %443 = vmatpush.bf16.msra.mxu0 0
        %444 = vmatpush.bf16.msra.mxu0 0
        %445 = vmatpush.bf16.msra.mxu0 %v418
        %446 = vmatmul.bf16.gmra.mxu0 %v421
        %v447 = vpop.f32.mrf.mxu0
        %v448 = vadd.f32 0.0, %v447
        %v449 = vpop.f32.mrf.mxu0
        %v450 = vadd.f32 0.0, %v449
        %451 = vmatmul.bf16.gmra.mxu0 %v424
        %v452 = vpop.f32.mrf.mxu0
        %v453 = vadd.f32 0.0, %v452
        %v454 = vpop.f32.mrf.mxu0
        %v455 = vadd.f32 0.0, %v454
        %456 = vmatmul.bf16.gmra.mxu0 %v427
        %v457 = vpop.f32.mrf.mxu0
        %v458 = vadd.f32 0.0, %v457
        %v459 = vpop.f32.mrf.mxu0
        %v460 = vadd.f32 0.0, %v459
        %461 = vmatmul.bf16.gmra.mxu0 %v430
        %v462 = vpop.f32.mrf.mxu0
        %v463 = vadd.f32 0.0, %v462
        %v464 = vpop.f32.mrf.mxu0
        %v465 = vadd.f32 0.0, %v464
        %466 = vmatmul.bf16.gmra.mxu0 %v433
        %v467 = vpop.f32.mrf.mxu0
        %v468 = vadd.f32 0.0, %v467
        %v469 = vpop.f32.mrf.mxu0
        %v470 = vadd.f32 0.0, %v469
        %471 = vmatmul.bf16.gmra.mxu0 %v436
        %v472 = vpop.f32.mrf.mxu0
        %v473 = vadd.f32 0.0, %v472
        %v474 = vpop.f32.mrf.mxu0
        %v475 = vadd.f32 0.0, %v474
        %476 = vdwg.mxu0
        %v477 = vld [vmem:[#allocation6] sm:$0xff]
        %v478 = vld [vmem:[#allocation6 + $0x8] sm:$0xff]
        %v479 = vld [vmem:[#allocation6 + $0x10] sm:$0xff]
        %v480 = vld [vmem:[#allocation6 + $0x18] sm:$0xff]
        %v481 = vld [vmem:[#allocation6 + $0x20] sm:$0xff]
        %v482 = vld [vmem:[#allocation6 + $0x28] sm:$0xff]
        %v483 = vld [vmem:[#allocation6 + $0x30] sm:$0xff]
        %v484 = vld [vmem:[#allocation6 + $0x38] sm:$0xff]
        %v485 = vld [vmem:[#allocation6 + $0x40] sm:$0xff]
        %v486 = vld [vmem:[#allocation6 + $0x48] sm:$0xff]
        %v487 = vld [vmem:[#allocation6 + $0x50] sm:$0xff]
        %v488 = vld [vmem:[#allocation6 + $0x58] sm:$0xff]
        %490 = vset.pattern.permute.xlu0 0
        %491 = vperm.xlu0 %490, %v477
        %v492 = vpop.permute.xlu0 %491
        %495 = vset.pattern.permute.xlu0 0
        %496 = vperm.xlu0 %495, %v478
        %v497 = vpop.permute.xlu0 %496
        %500 = vset.pattern.permute.xlu0 0
        %501 = vperm.xlu0 %500, %v479
        %v502 = vpop.permute.xlu0 %501
        %505 = vset.pattern.permute.xlu0 0
        %506 = vperm.xlu0 %505, %v480
        %v507 = vpop.permute.xlu0 %506
        %510 = vset.pattern.permute.xlu0 0
        %511 = vperm.xlu0 %510, %v481
        %v512 = vpop.permute.xlu0 %511
        %515 = vset.pattern.permute.xlu0 0
        %516 = vperm.xlu0 %515, %v482
        %v517 = vpop.permute.xlu0 %516
        %520 = vset.pattern.permute.xlu0 0
        %521 = vperm.xlu0 %520, %v483
        %v522 = vpop.permute.xlu0 %521
        %525 = vset.pattern.permute.xlu0 0
        %526 = vperm.xlu0 %525, %v484
        %v527 = vpop.permute.xlu0 %526
        %530 = vset.pattern.permute.xlu0 0
        %531 = vperm.xlu0 %530, %v485
        %v532 = vpop.permute.xlu0 %531
        %535 = vset.pattern.permute.xlu0 0
        %536 = vperm.xlu0 %535, %v486
        %v537 = vpop.permute.xlu0 %536
        %540 = vset.pattern.permute.xlu0 0
        %541 = vperm.xlu0 %540, %v487
        %v542 = vpop.permute.xlu0 %541
        %545 = vset.pattern.permute.xlu0 0
        %546 = vperm.xlu0 %545, %v488
        %v547 = vpop.permute.xlu0 %546
        %v549 = vmul.f32 %v448, %v492
        %v550 = vmul.f32 %v450, %v497
        %v551 = vmul.f32 %v453, %v502
        %v552 = vmul.f32 %v455, %v507
        %v553 = vmul.f32 %v458, %v512
        %v554 = vmul.f32 %v460, %v517
        %v555 = vmul.f32 %v463, %v522
        %v556 = vmul.f32 %v465, %v527
        %v557 = vmul.f32 %v468, %v532
        %v558 = vmul.f32 %v470, %v537
        %v559 = vmul.f32 %v473, %v542
        %v560 = vmul.f32 %v475, %v547
        %v561 = vld [vmem:[#allocation7] sm:$0xff]
        %v562 = vld [vmem:[#allocation7 + $0x8] sm:$0xff]
        %v563 = vld [vmem:[#allocation7 + $0x10] sm:$0xff]
        %v564 = vld [vmem:[#allocation7 + $0x18] sm:$0xff]
        %v565 = vld [vmem:[#allocation7 + $0x20] sm:$0xff]
        %v566 = vld [vmem:[#allocation7 + $0x28] sm:$0xff]
        %v567 = vld [vmem:[#allocation7 + $0x30] sm:$0xff]
        %v568 = vld [vmem:[#allocation7 + $0x38] sm:$0xff]
        %v569 = vld [vmem:[#allocation7 + $0x40] sm:$0xff]
        %v570 = vld [vmem:[#allocation7 + $0x48] sm:$0xff]
        %v571 = vld [vmem:[#allocation7 + $0x50] sm:$0xff]
        %v572 = vld [vmem:[#allocation7 + $0x58] sm:$0xff]
        %574 = vset.pattern.permute.xlu0 0
        %575 = vperm.xlu0 %574, %v561
        %v576 = vpop.permute.xlu0 %575
        %579 = vset.pattern.permute.xlu0 0
        %580 = vperm.xlu0 %579, %v562
        %v581 = vpop.permute.xlu0 %580
        %584 = vset.pattern.permute.xlu0 0
        %585 = vperm.xlu0 %584, %v563
        %v586 = vpop.permute.xlu0 %585
        %589 = vset.pattern.permute.xlu0 0
        %590 = vperm.xlu0 %589, %v564
        %v591 = vpop.permute.xlu0 %590
        %594 = vset.pattern.permute.xlu0 0
        %595 = vperm.xlu0 %594, %v565
        %v596 = vpop.permute.xlu0 %595
        %599 = vset.pattern.permute.xlu0 0
        %600 = vperm.xlu0 %599, %v566
        %v601 = vpop.permute.xlu0 %600
        %604 = vset.pattern.permute.xlu0 0
        %605 = vperm.xlu0 %604, %v567
        %v606 = vpop.permute.xlu0 %605
        %609 = vset.pattern.permute.xlu0 0
        %610 = vperm.xlu0 %609, %v568
        %v611 = vpop.permute.xlu0 %610
        %614 = vset.pattern.permute.xlu0 0
        %615 = vperm.xlu0 %614, %v569
        %v616 = vpop.permute.xlu0 %615
        %619 = vset.pattern.permute.xlu0 0
        %620 = vperm.xlu0 %619, %v570
        %v621 = vpop.permute.xlu0 %620
        %624 = vset.pattern.permute.xlu0 0
        %625 = vperm.xlu0 %624, %v571
        %v626 = vpop.permute.xlu0 %625
        %629 = vset.pattern.permute.xlu0 0
        %630 = vperm.xlu0 %629, %v572
        %v631 = vpop.permute.xlu0 %630
        %v633 = vadd.f32 %v549, %v576
        %v634 = vadd.f32 %v550, %v581
        %v635 = vadd.f32 %v551, %v586
        %v636 = vadd.f32 %v552, %v591
        %v637 = vadd.f32 %v553, %v596
        %v638 = vadd.f32 %v554, %v601
        %v639 = vadd.f32 %v555, %v606
        %v640 = vadd.f32 %v556, %v611
        %v641 = vadd.f32 %v557, %v616
        %v642 = vadd.f32 %v558, %v621
        %v643 = vadd.f32 %v559, %v626
        %v644 = vadd.f32 %v560, %v631
        %vm645 = vcmask 261120
        %646 = vst.msk [vmem:[%s296] sm:$0xff] %vm645, %v633
        %647 = vst.msk [vmem:[%s296 + $0x8] sm:$0xff] %vm645, %v634
        %648 = vst.msk [vmem:[%s296 + $0x10] sm:$0xff] %vm645, %v635
        %649 = vst.msk [vmem:[%s296 + $0x18] sm:$0xff] %vm645, %v636
        %650 = vst.msk [vmem:[%s296 + $0x20] sm:$0xff] %vm645, %v637
        %651 = vst.msk [vmem:[%s296 + $0x28] sm:$0xff] %vm645, %v638
        %652 = vst.msk [vmem:[%s296 + $0x30] sm:$0xff] %vm645, %v639
        %653 = vst.msk [vmem:[%s296 + $0x38] sm:$0xff] %vm645, %v640
        %654 = vst.msk [vmem:[%s296 + $0x40] sm:$0xff] %vm645, %v641
        %655 = vst.msk [vmem:[%s296 + $0x48] sm:$0xff] %vm645, %v642
        %656 = vst.msk [vmem:[%s296 + $0x50] sm:$0xff] %vm645, %v643
        %657 = vst.msk [vmem:[%s296 + $0x58] sm:$0xff] %vm645, %v644
        %p658 = scmp.lt.s32.totalorder %s21, 1
        %s659 = scalar_select %p658, %s21, 1
        %s660 = smul.addr %s659, 12
        %s661 = smul.addr %s660, 8
        %s662 = scalar_lea.vmem %s5, %s661
        // Predicated region
        $region57: #{frozen_openclip_image_embedder_v2.3} parent=39 // pred_check
          %p663 = pneg %p149
        $region58: #{frozen_openclip_image_embedder_v2.3} parent=39 // pred_check_branch
          %665 = sbr.rel (%p663) target = $region60
        $region59: #{frozen_openclip_image_embedder_v2.3} parent=39 // pred_region
          _
        $region60: #{frozen_openclip_image_embedder_v2.3} parent=39 // pred_fallthru
          _
      $region40: #{frozen_openclip_image_embedder_v2.3} parent=5 // pred_fallthru
        _
      %p666 = scmp.le.s32.totalorder 2, %s16
      // Predicated region
      $region61: #{frozen_openclip_image_embedder_v2.3} parent=5 // pred_check
        %p667 = pneg %p666
      $region62: #{frozen_openclip_image_embedder_v2.3} parent=5 // pred_check_branch
        %669 = sbr.rel (%p667) target = $region64
      $region63: #{frozen_openclip_image_embedder_v2.3} parent=5 // pred_region
        %s670 = ssub.s32 %s16, 2
        // Predicated region
        $region65: #{frozen_openclip_image_embedder_v2.3} parent=63 // pred_check
          %p671 = pneg %p155
        $region66: #{frozen_openclip_image_embedder_v2.3} parent=63 // pred_check_branch
          %673 = sbr.rel (%p671) target = $region68
        $region67: #{frozen_openclip_image_embedder_v2.3} parent=63 // pred_region
          %p674 = scmp.lt.s32.totalorder %s22, 1
          %s675 = scalar_select %p674, %s22, 1
          %s676 = smul.addr %s675, 12
          %s677 = smul.addr %s676, 8
          %s678 = scalar_lea.vmem %s5, %s677
        $region68: #{frozen_openclip_image_embedder_v2.3} parent=63 // pred_fallthru
          _
      $region64: #{frozen_openclip_image_embedder_v2.3} parent=5 // pred_fallthru
        _
    $region6: #{frozen_openclip_image_embedder_v2.3} parent=1 // loop_footer
      %s20 = sadd.s32 1, %s16
    $region7: #{frozen_openclip_image_embedder_v2.3} parent=1 // loop_footer_branch
      %15 = sbr.rel target = $region3
    $region8: #{frozen_openclip_image_embedder_v2.3} parent=1 // loop_exit
      _
    %679 = vsyncpa [#allocation3], 1
    %s680 = scalar_lea.sflag [#allocation3], 1
    %681 = vsyncpa %s680, 1
    %682 = vsyncpa [#allocation5], 1
    %683 = vsyncpa [#allocation8], 1

// kernel: frozen_openclip_image_embedder_v2.4
$region0: #{frozen_openclip_image_embedder_v2.4}
  #allocation0 [shape = 'u32[]', space=smem, size = 0x4, offset = 0x4, fixed_abs, tag = 'smem constant byte address 0x4 - core index']
  #allocation1 [shape = 'u32[72,128]{1,0:T(1,128)}', space=vmem, size = 0x9000, scoped, tag = 'internal scratch']
  %s0 = inlined_call_operand.vmem [shape: f32[2,32,192], index: 0, kind: input, shape index: {}]
  %s1 = inlined_call_operand.vmem [shape: bf16[192,64], index: 1, kind: input, shape index: {}]
  %s2 = inlined_call_operand.vmem [shape: f32[32,64], index: 2, kind: input, shape index: {}]
  %s3 = inlined_call_operand.vmem [shape: f32[1,64], index: 3, kind: input, shape index: {}]
  %s4 = inlined_call_operand.vmem [shape: f32[1,64], index: 4, kind: input, shape index: {}]
  %s5 = inlined_call_operand.vmem [shape: f32[2,32,64], index: 5, kind: output, shape index: {}]
  %s6 = sld [smem:[#allocation0]]
  $region53: #{frozen_openclip_image_embedder_v2.4} parent=0
    _
  %s8 = ssub.s32 1, %s6
  %s9 = scalar_select 0, %s8, %s6
  loop: start=0, step=1, limit=4
  $region2: #{frozen_openclip_image_embedder_v2.4} parent=0 // loop_pre_header
    _
  $region3: #{frozen_openclip_image_embedder_v2.4} parent=0 // loop_header
    %s11 = sphi 0, %s15
    %p12 = scmp.ge.s32.totalorder %s11, 4
    %s21 = sphi 0, %s23
    %s24 = sphi 0, %s21
    %s25 = sphi 0, %s24
    %s41 = sphi 0, %s25
    %s45 = sphi 0, %s45
    %s47 = sphi 0, %s45
    %s48 = sphi 0, %s47
    %s62 = sphi 0, %s48
    %s66 = sphi 0, %s66
    %s68 = sphi 0, %s66
    %s69 = sphi 0, %s68
    %s83 = sphi 0, %s69
    %s87 = sphi 0, %s87
    %s89 = sphi 0, %s87
    %s90 = sphi 0, %s89
    %s104 = sphi 0, %s90
    %s108 = sphi 0, %s108
    %s110 = sphi 0, %s108
    %s111 = sphi 0, %s110
    %s125 = sphi 0, %s111
    %s131 = sphi 0, %s133
    %s134 = sphi 0, %s131
    %s135 = sphi 0, %s134
    %s151 = sphi 0, %s135
  $region4: #{frozen_openclip_image_embedder_v2.4} parent=0 // loop_header_branch
    %14 = sbr.rel (%p12) target = $region8
  $region5: #{frozen_openclip_image_embedder_v2.4} parent=0 // loop_body
    %s16 = ssub.s32 %s11, 1
    %s17 = ssub.s32 %s11, 2
    %s18 = sadd.s32 %s11, 1
    %s19 = ssub.s32 %s11, %s18
    %p20 = scmp.eq.s32.totalorder %s19, 0
    %s22 = sadd.s32 %s21, 1
    %s23 = scalar_select %p20, %s21, %s22
    %p26 = pneg %p20
    %p27 = scmp.eq.s32.totalorder %s11, 1
    %p28 = por %p26, %p27
    %p29 = scmp.ne.s32.totalorder %s21, %s24
    %p30 = scmp.eq.s32.totalorder %s11, 0
    %p31 = por %p29, %p30
    %p32 = scmp.ne.s32.totalorder %s21, %s24
    %p33 = scmp.eq.s32.totalorder %s16, 1
    %p34 = por %p32, %p33
    %p35 = scmp.ne.s32.totalorder %s24, %s25
    %p36 = scmp.eq.s32.totalorder %s16, 0
    %p37 = por %p35, %p36
    %p38 = scmp.ne.s32.totalorder %s24, %s25
    %p39 = scmp.eq.s32.totalorder %s17, 1
    %p40 = por %p38, %p39
    %p42 = scmp.ne.s32.totalorder %s25, %s41
    %p43 = scmp.eq.s32.totalorder %s17, 0
    %p44 = por %p42, %p43
    %s46 = sadd.s32 %s45, 1
    %p49 = scmp.eq.s32.totalorder %s11, 1
    %p50 = scmp.ne.s32.totalorder %s45, %s47
    %p51 = scmp.eq.s32.totalorder %s11, 0
    %p52 = por %p50, %p51
    %p53 = scmp.ne.s32.totalorder %s45, %s47
    %p54 = scmp.eq.s32.totalorder %s16, 1
    %p55 = por %p53, %p54
    %p56 = scmp.ne.s32.totalorder %s47, %s48
    %p57 = scmp.eq.s32.totalorder %s16, 0
    %p58 = por %p56, %p57
    %p59 = scmp.ne.s32.totalorder %s47, %s48
    %p60 = scmp.eq.s32.totalorder %s17, 1
    %p61 = por %p59, %p60
    %p63 = scmp.ne.s32.totalorder %s48, %s62
    %p64 = scmp.eq.s32.totalorder %s17, 0
    %p65 = por %p63, %p64
    %s67 = sadd.s32 %s66, 1
    %p70 = scmp.eq.s32.totalorder %s11, 1
    %p71 = scmp.ne.s32.totalorder %s66, %s68
    %p72 = scmp.eq.s32.totalorder %s11, 0
    %p73 = por %p71, %p72
    %p74 = scmp.ne.s32.totalorder %s66, %s68
    %p75 = scmp.eq.s32.totalorder %s16, 1
    %p76 = por %p74, %p75
    %p77 = scmp.ne.s32.totalorder %s68, %s69
    %p78 = scmp.eq.s32.totalorder %s16, 0
    %p79 = por %p77, %p78
    %p80 = scmp.ne.s32.totalorder %s68, %s69
    %p81 = scmp.eq.s32.totalorder %s17, 1
    %p82 = por %p80, %p81
    %p84 = scmp.ne.s32.totalorder %s69, %s83
    %p85 = scmp.eq.s32.totalorder %s17, 0
    %p86 = por %p84, %p85
    %s88 = sadd.s32 %s87, 1
    %p91 = scmp.eq.s32.totalorder %s11, 1
    %p92 = scmp.ne.s32.totalorder %s87, %s89
    %p93 = scmp.eq.s32.totalorder %s11, 0
    %p94 = por %p92, %p93
    %p95 = scmp.ne.s32.totalorder %s87, %s89
    %p96 = scmp.eq.s32.totalorder %s16, 1
    %p97 = por %p95, %p96
    %p98 = scmp.ne.s32.totalorder %s89, %s90
    %p99 = scmp.eq.s32.totalorder %s16, 0
    %p100 = por %p98, %p99
    %p101 = scmp.ne.s32.totalorder %s89, %s90
    %p102 = scmp.eq.s32.totalorder %s17, 1
    %p103 = por %p101, %p102
    %p105 = scmp.ne.s32.totalorder %s90, %s104
    %p106 = scmp.eq.s32.totalorder %s17, 0
    %p107 = por %p105, %p106
    %s109 = sadd.s32 %s108, 1
    %p112 = scmp.eq.s32.totalorder %s11, 1
    %p113 = scmp.ne.s32.totalorder %s108, %s110
    %p114 = scmp.eq.s32.totalorder %s11, 0
    %p115 = por %p113, %p114
    %p116 = scmp.ne.s32.totalorder %s108, %s110
    %p117 = scmp.eq.s32.totalorder %s16, 1
    %p118 = por %p116, %p117
    %p119 = scmp.ne.s32.totalorder %s110, %s111
    %p120 = scmp.eq.s32.totalorder %s16, 0
    %p121 = por %p119, %p120
    %p122 = scmp.ne.s32.totalorder %s110, %s111
    %p123 = scmp.eq.s32.totalorder %s17, 1
    %p124 = por %p122, %p123
    %p126 = scmp.ne.s32.totalorder %s111, %s125
    %p127 = scmp.eq.s32.totalorder %s17, 0
    %p128 = por %p126, %p127
    %s129 = ssub.s32 %s11, %s18
    %p130 = scmp.eq.s32.totalorder %s129, 0
    %s132 = sadd.s32 %s131, 1
    %s133 = scalar_select %p130, %s131, %s132
    %p136 = pneg %p130
    %p137 = scmp.eq.s32.totalorder %s11, 1
    %p138 = por %p136, %p137
    %p139 = scmp.ne.s32.totalorder %s131, %s134
    %p140 = scmp.eq.s32.totalorder %s11, 0
    %p141 = por %p139, %p140
    %p142 = scmp.ne.s32.totalorder %s131, %s134
    %p143 = scmp.eq.s32.totalorder %s16, 1
    %p144 = por %p142, %p143
    %p145 = scmp.ne.s32.totalorder %s134, %s135
    %p146 = scmp.eq.s32.totalorder %s16, 0
    %p147 = por %p145, %p146
    %p148 = scmp.ne.s32.totalorder %s134, %s135
    %p149 = scmp.eq.s32.totalorder %s17, 1
    %p150 = por %p148, %p149
    %p152 = scmp.ne.s32.totalorder %s135, %s151
    %p153 = scmp.eq.s32.totalorder %s17, 0
    %p154 = por %p152, %p153
    %p155 = scmp.le.s32.totalorder 1, %s11
    %p156 = scmp.lt.s32.totalorder %s11, 3
    %p157 = pnand %p155, %p156
    %p158 = pneg %p157
    // Predicated region
    $region9: #{frozen_openclip_image_embedder_v2.4} parent=5 // pred_check
      _
    $region10: #{frozen_openclip_image_embedder_v2.4} parent=5 // pred_check_branch
      %160 = sbr.rel (%p157) target = $region12
    $region11: #{frozen_openclip_image_embedder_v2.4} parent=5 // pred_region
      %s161 = ssub.s32 %s11, 1
      // Predicated region
      $region13: #{frozen_openclip_image_embedder_v2.4} parent=11 // pred_check
        %p162 = pneg %p58
      $region14: #{frozen_openclip_image_embedder_v2.4} parent=11 // pred_check_branch
        %164 = sbr.rel (%p162) target = $region16
      $region15: #{frozen_openclip_image_embedder_v2.4} parent=11 // pred_region
        _
      $region16: #{frozen_openclip_image_embedder_v2.4} parent=11 // pred_fallthru
        _
      // Predicated region
      $region17: #{frozen_openclip_image_embedder_v2.4} parent=11 // pred_check
        %p165 = pneg %p79
      $region18: #{frozen_openclip_image_embedder_v2.4} parent=11 // pred_check_branch
        %167 = sbr.rel (%p165) target = $region20
      $region19: #{frozen_openclip_image_embedder_v2.4} parent=11 // pred_region
        _
      $region20: #{frozen_openclip_image_embedder_v2.4} parent=11 // pred_fallthru
        _
      // Predicated region
      $region21: #{frozen_openclip_image_embedder_v2.4} parent=11 // pred_check
        %p168 = pneg %p100
      $region22: #{frozen_openclip_image_embedder_v2.4} parent=11 // pred_check_branch
        %170 = sbr.rel (%p168) target = $region24
      $region23: #{frozen_openclip_image_embedder_v2.4} parent=11 // pred_region
        _
      $region24: #{frozen_openclip_image_embedder_v2.4} parent=11 // pred_fallthru
        _
      // Predicated region
      $region25: #{frozen_openclip_image_embedder_v2.4} parent=11 // pred_check
        %p171 = pneg %p121
      $region26: #{frozen_openclip_image_embedder_v2.4} parent=11 // pred_check_branch
        %173 = sbr.rel (%p171) target = $region28
      $region27: #{frozen_openclip_image_embedder_v2.4} parent=11 // pred_region
        _
      $region28: #{frozen_openclip_image_embedder_v2.4} parent=11 // pred_fallthru
        _
    $region12: #{frozen_openclip_image_embedder_v2.4} parent=5 // pred_fallthru
      _
    %p174 = scmp.lt.s32.totalorder %s11, 2
    // Predicated region
    $region29: #{frozen_openclip_image_embedder_v2.4} parent=5 // pred_check
      %p175 = pneg %p174
    $region30: #{frozen_openclip_image_embedder_v2.4} parent=5 // pred_check_branch
      %177 = sbr.rel (%p175) target = $region32
    $region31: #{frozen_openclip_image_embedder_v2.4} parent=5 // pred_region
      // Predicated region
      $region33: #{frozen_openclip_image_embedder_v2.4} parent=31 // pred_check
        %p178 = pneg %p31
      $region34: #{frozen_openclip_image_embedder_v2.4} parent=31 // pred_check_branch
        %180 = sbr.rel (%p178) target = $region36
      $region35: #{frozen_openclip_image_embedder_v2.4} parent=31 // pred_region
        %p181 = scmp.lt.s32.totalorder %s11, 1
        %s182 = scalar_select %p181, %s11, 1
        %s183 = smul.addr %s182, 8
        %s184 = smul.addr %s183, 8
        %s185 = scalar_lea.vmem %s0, %s184
      $region36: #{frozen_openclip_image_embedder_v2.4} parent=31 // pred_fallthru
        _
    $region32: #{frozen_openclip_image_embedder_v2.4} parent=5 // pred_fallthru
      _
    %p186 = scmp.le.s32.totalorder 1, %s11
    %p187 = scmp.lt.s32.totalorder %s11, 3
    %p188 = pnand %p186, %p187
    %p189 = pneg %p188
    // Predicated region
    $region37: #{frozen_openclip_image_embedder_v2.4} parent=5 // pred_check
      _
    $region38: #{frozen_openclip_image_embedder_v2.4} parent=5 // pred_check_branch
      %191 = sbr.rel (%p188) target = $region40
    $region39: #{frozen_openclip_image_embedder_v2.4} parent=5 // pred_region
      %s192 = ssub.s32 %s11, 1
      %p193 = scmp.lt.s32.totalorder %s16, 1
      %s194 = scalar_select %p193, %s16, 1
      %s195 = smul.addr %s194, 8
      %s196 = smul.addr %s195, 8
      %s197 = scalar_lea.vmem %s0, %s196
      %p198 = pneg %p37
      %p199 = pneg %p34
      %p200 = pneg %p58
      %p201 = pneg %p55
      %p202 = pneg %p79
      %p203 = pneg %p76
      %p204 = pneg %p100
      %p205 = pneg %p97
      %p206 = pneg %p121
      %p207 = pneg %p118
      %p208 = pneg %p147
      %p209 = pneg %p144
      %p210 = scmp.lt.s32.totalorder %s16, 1
      %s211 = scalar_select %p210, %s16, 1
      %s212 = smul.addr %s211, 4
      %s213 = smul.addr %s212, 8
      %s214 = scalar_lea.vmem %s5, %s213
      %p215 = scmp.lt.s32.totalorder %s16, 1
      %s216 = scalar_select %p215, %s16, 1
      %s217 = smul.addr %s216, 8
      %s218 = smul.addr %s217, 8
      %s219 = scalar_lea.vmem %s0, %s218
      %p220 = scmp.lt.s32.totalorder %s16, 1
      %s221 = scalar_select %p220, %s16, 1
      %s222 = smul.addr %s221, 4
      %s223 = smul.addr %s222, 8
      %s224 = scalar_lea.vmem %s5, %s223
      %v226 = vld [vmem:[%s219] sm:$0xff]
      %v227 = vld [vmem:[%s219 + $0x8] sm:$0xff]
      %v228 = vld [vmem:[%s219 + $0x10] sm:$0xff]
      %v229 = vld [vmem:[%s219 + $0x18] sm:$0xff]
      %v230 = vld [vmem:[%s219 + $0x20] sm:$0xff]
      %v231 = vld [vmem:[%s219 + $0x28] sm:$0xff]
      %v232 = vld [vmem:[%s219 + $0x30] sm:$0xff]
      %v233 = vld [vmem:[%s219 + $0x38] sm:$0xff]
      %v234 = vpack.c.bf16 %v228, %v226
      %v235 = vpack.c.bf16 %v229, %v227
      %v236 = vpack.c.bf16 %v232, %v230
      %v237 = vpack.c.bf16 %v233, %v231
      %v238 = vld [vmem:[%s1] sm:$0xf]
      %v239 = vld [vmem:[%s1 + $0x4] sm:$0xf]
      %v240 = vld [vmem:[%s1 + $0x8] sm:$0xf]
      %v241 = vld [vmem:[%s1 + $0xc] sm:$0xf]
      %v242 = vld [vmem:[%s1 + $0x10] sm:$0xf]
      %v243 = vld [vmem:[%s1 + $0x14] sm:$0xf]
      %v244 = vld [vmem:[%s1 + $0x18] sm:$0xf]
      %v245 = vld [vmem:[%s1 + $0x1c] sm:$0xf]
      %v246 = vld [vmem:[%s1 + $0x20] sm:$0xf]
      %v247 = vld [vmem:[%s1 + $0x24] sm:$0xf]
      %v248 = vld [vmem:[%s1 + $0x28] sm:$0xf]
      %v249 = vld [vmem:[%s1 + $0x2c] sm:$0xf]
      %v250 = vld [vmem:[%s1 + $0x30] sm:$0xf]
      %v251 = vld [vmem:[%s1 + $0x34] sm:$0xf]
      %v252 = vld [vmem:[%s1 + $0x38] sm:$0xf]
      %v253 = vld [vmem:[%s1 + $0x3c] sm:$0xf]
      %v254 = vld [vmem:[%s1 + $0x40] sm:$0xf]
      %v255 = vld [vmem:[%s1 + $0x44] sm:$0xf]
      %v256 = vld [vmem:[%s1 + $0x48] sm:$0xf]
      %v257 = vld [vmem:[%s1 + $0x4c] sm:$0xf]
      %v258 = vld [vmem:[%s1 + $0x50] sm:$0xf]
      %v259 = vld [vmem:[%s1 + $0x54] sm:$0xf]
      %v260 = vld [vmem:[%s1 + $0x58] sm:$0xf]
      %v261 = vld [vmem:[%s1 + $0x5c] sm:$0xf]
      %v262 = vld [vmem:[%s2] sm:$0xff]
      %v263 = vld [vmem:[%s2 + $0x8] sm:$0xff]
      %v264 = vld [vmem:[%s2 + $0x10] sm:$0xff]
      %v265 = vld [vmem:[%s2 + $0x18] sm:$0xff]
      %v290 = vunpack.c.l.b16 %v238
      %v291 = vunpack.c.l.b16 %v239
      %v292 = vunpack.c.l.b16 %v240
      %v293 = vunpack.c.l.b16 %v241
      %v294 = vunpack.c.l.b16 %v242
      %v295 = vunpack.c.l.b16 %v243
      %v296 = vunpack.c.l.b16 %v244
      %v297 = vunpack.c.l.b16 %v245
      %v298 = vunpack.c.l.b16 %v246
      %v299 = vunpack.c.l.b16 %v247
      %v300 = vunpack.c.l.b16 %v248
      %v301 = vunpack.c.l.b16 %v249
      %v302 = vunpack.c.l.b16 %v250
      %v303 = vunpack.c.l.b16 %v251
      %v304 = vunpack.c.l.b16 %v252
      %v305 = vunpack.c.l.b16 %v253
      %v306 = vunpack.c.l.b16 %v254
      %v307 = vunpack.c.l.b16 %v255
      %v308 = vunpack.c.l.b16 %v256
      %v309 = vunpack.c.l.b16 %v257
      %v310 = vunpack.c.l.b16 %v258
      %v311 = vunpack.c.l.b16 %v259
      %v312 = vunpack.c.l.b16 %v260
      %v313 = vunpack.c.l.b16 %v261
      %v314 = vpack.c.b16 %v291, %v290
      %v315 = vpack.c.b16 %v293, %v292
      %v316 = vpack.c.b16 %v295, %v294
      %v317 = vpack.c.b16 %v297, %v296
      %v318 = vpack.c.b16 %v299, %v298
      %v319 = vpack.c.b16 %v301, %v300
      %v320 = vpack.c.b16 %v303, %v302
      %v321 = vpack.c.b16 %v305, %v304
      %v322 = vpack.c.b16 %v307, %v306
      %v323 = vpack.c.b16 %v309, %v308
      %v324 = vpack.c.b16 %v311, %v310
      %v325 = vpack.c.b16 %v313, %v312
      %vm338 = vcmask 523264
      %v340 = vsel %vm338, %v235, 0
      %v343 = vsel %vm338, %v237, 0
      %345 = vmatpush.bf16.msra.mxu0 %v321
      %346 = vmatpush.bf16.msra.mxu0 %v320
      %347 = vmatpush.bf16.msra.mxu0 %v319
      %348 = vmatpush.bf16.msra.mxu0 %v318
      %349 = vmatpush.bf16.msra.mxu0 %v317
      %350 = vmatpush.bf16.msra.mxu0 %v316
      %351 = vmatpush.bf16.msra.mxu0 %v315
      %352 = vmatpush.bf16.msra.mxu0 %v314
      %353 = vmatmul.bf16.gmra.mxu0 %v234
      %v354 = vpop.f32.mrf.mxu0
      %v355 = vadd.f32 %v262, %v354
      %v356 = vpop.f32.mrf.mxu0
      %v357 = vadd.f32 %v263, %v356
      %358 = vmatmul.bf16.gmra.mxu0 %v236
      %v359 = vpop.f32.mrf.mxu0
      %v360 = vadd.f32 %v264, %v359
      %v361 = vpop.f32.mrf.mxu0
      %v362 = vadd.f32 %v265, %v361
      %363 = vdwg.mxu0
      %364 = vmatpush.bf16.msra.mxu0 0
      %365 = vmatpush.bf16.msra.mxu0 0
      %366 = vmatpush.bf16.msra.mxu0 0
      %367 = vmatpush.bf16.msra.mxu0 0
      %368 = vmatpush.bf16.msra.mxu0 %v325
      %369 = vmatpush.bf16.msra.mxu0 %v324
      %370 = vmatpush.bf16.msra.mxu0 %v323
      %371 = vmatpush.bf16.msra.mxu0 %v322
      %372 = vmatmul.bf16.gmra.mxu0 %v340
      %v373 = vpop.f32.mrf.mxu0
      %v374 = vadd.f32 %v355, %v373
      %v375 = vpop.f32.mrf.mxu0
      %v376 = vadd.f32 %v357, %v375
      %377 = vmatmul.bf16.gmra.mxu0 %v343
      %v378 = vpop.f32.mrf.mxu0
      %v379 = vadd.f32 %v360, %v378
      %v380 = vpop.f32.mrf.mxu0
      %v381 = vadd.f32 %v362, %v380
      %382 = vdwg.mxu0
      %v383 = vld [vmem:[%s3] sm:$0x1]
      %v384 = vld [vmem:[%s4] sm:$0x1]
      %v385 = vsel %vm338, %v374, 0.0
      %386 = vadd.xlane.f32.xlu0 %v385
      %v387 = vpop.xlane.xlu0 %386
      %v388 = vsel %vm338, %v376, 0.0
      %389 = vadd.xlane.f32.xlu0 %v388
      %v390 = vpop.xlane.xlu0 %389
      %v391 = vsel %vm338, %v379, 0.0
      %392 = vadd.xlane.f32.xlu0 %v391
      %v393 = vpop.xlane.xlu0 %392
      %v394 = vsel %vm338, %v381, 0.0
      %395 = vadd.xlane.f32.xlu0 %v394
      %v396 = vpop.xlane.xlu0 %395
      %v397 = vrcp.pop 64.0
      %v398 = vmul.f32 64.0, %v397
      %v399 = vsub.f32 1.0, %v398
      %v400 = vmul.f32 %v397, %v399
      %v401 = vadd.f32 %v397, %v400
      %vm402 = vweird.f32 %v397
      %v403 = vsel %vm402, %v397, %v401
      %v404 = vmul.f32 %v387, %v403
      %v405 = vmul.f32 %v390, %v403
      %v406 = vmul.f32 %v393, %v403
      %v407 = vmul.f32 %v396, %v403
      %v408 = vsub.f32 %v374, %v404
      %v409 = vsub.f32 %v376, %v405
      %v410 = vsub.f32 %v379, %v406
      %v411 = vsub.f32 %v381, %v407
      %v412 = vmul.f32 %v408, %v408
      %v413 = vmul.f32 %v409, %v409
      %v414 = vmul.f32 %v410, %v410
      %v415 = vmul.f32 %v411, %v411
      %v416 = vsel %vm338, %v412, 0.0
      %417 = vadd.xlane.f32.xlu0 %v416
      %v418 = vpop.xlane.xlu0 %417
      %v419 = vsel %vm338, %v413, 0.0
      %420 = vadd.xlane.f32.xlu0 %v419
      %v421 = vpop.xlane.xlu0 %420
      %v422 = vsel %vm338, %v414, 0.0
      %423 = vadd.xlane.f32.xlu0 %v422
      %v424 = vpop.xlane.xlu0 %423
      %v425 = vsel %vm338, %v415, 0.0
      %426 = vadd.xlane.f32.xlu0 %v425
      %v427 = vpop.xlane.xlu0 %426
      %v428 = vmul.f32 %v418, %v403
      %v429 = vmul.f32 %v421, %v403
      %v430 = vmul.f32 %v424, %v403
      %v431 = vmul.f32 %v427, %v403
      %v432 = vadd.f32 %v428, 1e-05
      %v433 = vadd.f32 %v429, 1e-05
      %v434 = vadd.f32 %v430, 1e-05
      %v435 = vadd.f32 %v431, 1e-05
      %v436 = vrsqrt.pop %v432
      %v437 = vmul.f32 %v436, %v432
      %v438 = vmul.f32 %v437, %v436
      %v439 = vmul.f32 0.5, %v438
      %v440 = vsub.f32 1.5, %v439
      %v441 = vmul.f32 %v436, %v440
      %vm442 = vweird.f32 %v432
      %vm443 = vweird.f32 %v436
      %vm444 = vmor %vm442, %vm443
      %v445 = vsel %vm444, %v436, %v441
      %v446 = vrsqrt.pop %v433
      %v447 = vmul.f32 %v446, %v433
      %v448 = vmul.f32 %v447, %v446
      %v449 = vmul.f32 0.5, %v448
      %v450 = vsub.f32 1.5, %v449
      %v451 = vmul.f32 %v446, %v450
      %vm452 = vweird.f32 %v433
      %vm453 = vweird.f32 %v446
      %vm454 = vmor %vm452, %vm453
      %v455 = vsel %vm454, %v446, %v451
      %v456 = vrsqrt.pop %v434
      %v457 = vmul.f32 %v456, %v434
      %v458 = vmul.f32 %v457, %v456
      %v459 = vmul.f32 0.5, %v458
      %v460 = vsub.f32 1.5, %v459
      %v461 = vmul.f32 %v456, %v460
      %vm462 = vweird.f32 %v434
      %vm463 = vweird.f32 %v456
      %vm464 = vmor %vm462, %vm463
      %v465 = vsel %vm464, %v456, %v461
      %v466 = vrsqrt.pop %v435
      %v467 = vmul.f32 %v466, %v435
      %v468 = vmul.f32 %v467, %v466
      %v469 = vmul.f32 0.5, %v468
      %v470 = vsub.f32 1.5, %v469
      %v471 = vmul.f32 %v466, %v470
      %vm472 = vweird.f32 %v435
      %vm473 = vweird.f32 %v466
      %vm474 = vmor %vm472, %vm473
      %v475 = vsel %vm474, %v466, %v471
      %v476 = vmul.f32 %v408, %v445
      %v477 = vmul.f32 %v409, %v455
      %v478 = vmul.f32 %v410, %v465
      %v479 = vmul.f32 %v411, %v475
      %v481 = vperm.slane %v383, 0
      %v483 = vmul.f32 %v476, %v481
      %v484 = vmul.f32 %v477, %v481
      %v485 = vmul.f32 %v478, %v481
      %v486 = vmul.f32 %v479, %v481
      %v488 = vperm.slane %v384, 0
      %v490 = vadd.f32 %v483, %v488
      %v491 = vadd.f32 %v484, %v488
      %v492 = vadd.f32 %v485, %v488
      %v493 = vadd.f32 %v486, %v488
      %494 = vst.msk [vmem:[%s224] sm:$0xff] %vm338, %v490
      %495 = vst.msk [vmem:[%s224 + $0x8] sm:$0xff] %vm338, %v491
      %496 = vst.msk [vmem:[%s224 + $0x10] sm:$0xff] %vm338, %v492
      %497 = vst.msk [vmem:[%s224 + $0x18] sm:$0xff] %vm338, %v493
      %p498 = scmp.lt.s32.totalorder %s16, 1
      %s499 = scalar_select %p498, %s16, 1
      %s500 = smul.addr %s499, 4
      %s501 = smul.addr %s500, 8
      %s502 = scalar_lea.vmem %s5, %s501
      // Predicated region
      $region41: #{frozen_openclip_image_embedder_v2.4} parent=39 // pred_check
        %p503 = pneg %p144
      $region42: #{frozen_openclip_image_embedder_v2.4} parent=39 // pred_check_branch
        %505 = sbr.rel (%p503) target = $region44
      $region43: #{frozen_openclip_image_embedder_v2.4} parent=39 // pred_region
        _
      $region44: #{frozen_openclip_image_embedder_v2.4} parent=39 // pred_fallthru
        _
    $region40: #{frozen_openclip_image_embedder_v2.4} parent=5 // pred_fallthru
      _
    %p506 = scmp.le.s32.totalorder 2, %s11
    // Predicated region
    $region45: #{frozen_openclip_image_embedder_v2.4} parent=5 // pred_check
      %p507 = pneg %p506
    $region46: #{frozen_openclip_image_embedder_v2.4} parent=5 // pred_check_branch
      %509 = sbr.rel (%p507) target = $region48
    $region47: #{frozen_openclip_image_embedder_v2.4} parent=5 // pred_region
      %s510 = ssub.s32 %s11, 2
      // Predicated region
      $region49: #{frozen_openclip_image_embedder_v2.4} parent=47 // pred_check
        %p511 = pneg %p150
      $region50: #{frozen_openclip_image_embedder_v2.4} parent=47 // pred_check_branch
        %513 = sbr.rel (%p511) target = $region52
      $region51: #{frozen_openclip_image_embedder_v2.4} parent=47 // pred_region
        %p514 = scmp.lt.s32.totalorder %s17, 1
        %s515 = scalar_select %p514, %s17, 1
        %s516 = smul.addr %s515, 4
        %s517 = smul.addr %s516, 8
        %s518 = scalar_lea.vmem %s5, %s517
      $region52: #{frozen_openclip_image_embedder_v2.4} parent=47 // pred_fallthru
        _
    $region48: #{frozen_openclip_image_embedder_v2.4} parent=5 // pred_fallthru
      _
  $region6: #{frozen_openclip_image_embedder_v2.4} parent=0 // loop_footer
    %s15 = sadd.s32 1, %s11
  $region7: #{frozen_openclip_image_embedder_v2.4} parent=0 // loop_footer_branch
    %10 = sbr.rel target = $region3
  $region8: #{frozen_openclip_image_embedder_v2.4} parent=0 // loop_exit
    _

// kernel: frozen_openclip_image_embedder_v2.5
$region0: #{frozen_openclip_image_embedder_v2.5}
  #allocation0 [shape = 'u32[]', space=smem, size = 0x4, offset = 0x4, fixed_abs, tag = 'smem constant byte address 0x4 - core index']
  #allocation1 [shape = 'u32[72,128]{1,0:T(1,128)}', space=vmem, size = 0x9000, scoped, tag = 'internal scratch']
  %s0 = inlined_call_operand.vmem [shape: f32[2,32,64], index: 0, kind: input, shape index: {}]
  %s1 = inlined_call_operand.vmem [shape: f32[2,1,64], index: 1, kind: input, shape index: {}]
  %s2 = inlined_call_operand.vmem [shape: f32[2,1,64], index: 2, kind: input, shape index: {}]
  %s3 = inlined_call_operand.vmem [shape: bf16[2,64,192], index: 3, kind: input, shape index: {}]
  %s4 = inlined_call_operand.vmem [shape: f32[2,1,192], index: 4, kind: input, shape index: {}]
  %s5 = inlined_call_operand.vmem [shape: bf16[2,64,64], index: 5, kind: input, shape index: {}]
  %s6 = inlined_call_operand.vmem [shape: f32[2,1,64], index: 6, kind: input, shape index: {}]
  %s7 = inlined_call_operand.vmem [shape: f32[2,1,64], index: 7, kind: input, shape index: {}]
  %s8 = inlined_call_operand.vmem [shape: f32[2,1,64], index: 8, kind: input, shape index: {}]
  %s9 = inlined_call_operand.vmem [shape: bf16[2,64,256], index: 9, kind: input, shape index: {}]
  %s10 = inlined_call_operand.vmem [shape: f32[2,1,256], index: 10, kind: input, shape index: {}]
  %s11 = inlined_call_operand.vmem [shape: bf16[2,256,64], index: 11, kind: input, shape index: {}]
  %s12 = inlined_call_operand.vmem [shape: f32[2,1,64], index: 12, kind: input, shape index: {}]
  %s13 = inlined_call_operand.vmem [shape: f32[2,32,64], index: 13, kind: output, shape index: {}]
  %s14 = sld [smem:[#allocation0]]
  $region89: #{frozen_openclip_image_embedder_v2.5} parent=0
    _
  %s16 = ssub.s32 1, %s14
  %s17 = scalar_select 0, %s16, %s14
  loop: start=0, step=1, limit=6
  $region2: #{frozen_openclip_image_embedder_v2.5} parent=0 // loop_pre_header
    _
  $region3: #{frozen_openclip_image_embedder_v2.5} parent=0 // loop_header
    %s19 = sphi 0, %s23
    %p20 = scmp.ge.s32.totalorder %s19, 6
    %s26 = sphi 0, %s38
    %s27 = sphi 0, %s34
    %s28 = sphi 0, %s26
    %s29 = sphi 0, %s27
    %s30 = sphi 0, %s28
    %s31 = sphi 0, %s29
    %s41 = sphi 0, %s43
    %s44 = sphi 0, %s41
    %s45 = sphi 0, %s44
    %s61 = sphi 0, %s45
    %s67 = sphi 0, %s69
    %s70 = sphi 0, %s67
    %s71 = sphi 0, %s70
    %s87 = sphi 0, %s71
    %s93 = sphi 0, %s95
    %s96 = sphi 0, %s93
    %s97 = sphi 0, %s96
    %s113 = sphi 0, %s97
    %s119 = sphi 0, %s121
    %s122 = sphi 0, %s119
    %s123 = sphi 0, %s122
    %s139 = sphi 0, %s123
    %s145 = sphi 0, %s147
    %s148 = sphi 0, %s145
    %s149 = sphi 0, %s148
    %s165 = sphi 0, %s149
    %s171 = sphi 0, %s173
    %s174 = sphi 0, %s171
    %s175 = sphi 0, %s174
    %s191 = sphi 0, %s175
    %s197 = sphi 0, %s199
    %s200 = sphi 0, %s197
    %s201 = sphi 0, %s200
    %s217 = sphi 0, %s201
    %s223 = sphi 0, %s225
    %s226 = sphi 0, %s223
    %s227 = sphi 0, %s226
    %s243 = sphi 0, %s227
    %s249 = sphi 0, %s251
    %s252 = sphi 0, %s249
    %s253 = sphi 0, %s252
    %s269 = sphi 0, %s253
    %s275 = sphi 0, %s277
    %s278 = sphi 0, %s275
    %s279 = sphi 0, %s278
    %s295 = sphi 0, %s279
    %s301 = sphi 0, %s303
    %s304 = sphi 0, %s301
    %s305 = sphi 0, %s304
    %s321 = sphi 0, %s305
    %s327 = sphi 0, %s329
    %s330 = sphi 0, %s327
    %s331 = sphi 0, %s330
    %s347 = sphi 0, %s331
    %s353 = sphi 0, %s355
    %s356 = sphi 0, %s353
    %s357 = sphi 0, %s356
    %s373 = sphi 0, %s357
    %s379 = sphi 0, %s381
    %s382 = sphi 0, %s379
    %s383 = sphi 0, %s382
    %s399 = sphi 0, %s383
  $region4: #{frozen_openclip_image_embedder_v2.5} parent=0 // loop_header_branch
    %22 = sbr.rel (%p20) target = $region8
  $region5: #{frozen_openclip_image_embedder_v2.5} parent=0 // loop_body
    %s24 = ssub.s32 %s19, 1
    %s25 = ssub.s32 %s19, 2
    %s32 = sadd.s32 1, %s27
    %p33 = scmp.ge.s32.totalorder %s32, 2
    %s34 = scalar_select %p33, 0, %s32
    %s35 = sadd.s32 1, %s26
    %s36 = scalar_select %p33, %s35, %s26
    %p37 = scmp.ge.s32.totalorder %s36, 2
    %s38 = scalar_select %p37, 0, %s36
    %s39 = ssub.s32 %s26, %s38
    %p40 = scmp.eq.s32.totalorder %s39, 0
    %s42 = sadd.s32 %s41, 1
    %s43 = scalar_select %p40, %s41, %s42
    %p46 = pneg %p40
    %p47 = scmp.eq.s32.totalorder %s19, 3
    %p48 = por %p46, %p47
    %p49 = scmp.ne.s32.totalorder %s41, %s44
    %p50 = scmp.eq.s32.totalorder %s19, 0
    %p51 = por %p49, %p50
    %p52 = scmp.ne.s32.totalorder %s41, %s44
    %p53 = scmp.eq.s32.totalorder %s24, 3
    %p54 = por %p52, %p53
    %p55 = scmp.ne.s32.totalorder %s44, %s45
    %p56 = scmp.eq.s32.totalorder %s24, 0
    %p57 = por %p55, %p56
    %p58 = scmp.ne.s32.totalorder %s44, %s45
    %p59 = scmp.eq.s32.totalorder %s25, 3
    %p60 = por %p58, %p59
    %p62 = scmp.ne.s32.totalorder %s45, %s61
    %p63 = scmp.eq.s32.totalorder %s25, 0
    %p64 = por %p62, %p63
    %s65 = ssub.s32 %s27, %s34
    %p66 = scmp.eq.s32.totalorder %s65, 0
    %s68 = sadd.s32 %s67, 1
    %s69 = scalar_select %p66, %s67, %s68
    %p72 = pneg %p66
    %p73 = scmp.eq.s32.totalorder %s19, 3
    %p74 = por %p72, %p73
    %p75 = scmp.ne.s32.totalorder %s67, %s70
    %p76 = scmp.eq.s32.totalorder %s19, 0
    %p77 = por %p75, %p76
    %p78 = scmp.ne.s32.totalorder %s67, %s70
    %p79 = scmp.eq.s32.totalorder %s24, 3
    %p80 = por %p78, %p79
    %p81 = scmp.ne.s32.totalorder %s70, %s71
    %p82 = scmp.eq.s32.totalorder %s24, 0
    %p83 = por %p81, %p82
    %p84 = scmp.ne.s32.totalorder %s70, %s71
    %p85 = scmp.eq.s32.totalorder %s25, 3
    %p86 = por %p84, %p85
    %p88 = scmp.ne.s32.totalorder %s71, %s87
    %p89 = scmp.eq.s32.totalorder %s25, 0
    %p90 = por %p88, %p89
    %s91 = ssub.s32 %s27, %s34
    %p92 = scmp.eq.s32.totalorder %s91, 0
    %s94 = sadd.s32 %s93, 1
    %s95 = scalar_select %p92, %s93, %s94
    %p98 = pneg %p92
    %p99 = scmp.eq.s32.totalorder %s19, 3
    %p100 = por %p98, %p99
    %p101 = scmp.ne.s32.totalorder %s93, %s96
    %p102 = scmp.eq.s32.totalorder %s19, 0
    %p103 = por %p101, %p102
    %p104 = scmp.ne.s32.totalorder %s93, %s96
    %p105 = scmp.eq.s32.totalorder %s24, 3
    %p106 = por %p104, %p105
    %p107 = scmp.ne.s32.totalorder %s96, %s97
    %p108 = scmp.eq.s32.totalorder %s24, 0
    %p109 = por %p107, %p108
    %p110 = scmp.ne.s32.totalorder %s96, %s97
    %p111 = scmp.eq.s32.totalorder %s25, 3
    %p112 = por %p110, %p111
    %p114 = scmp.ne.s32.totalorder %s97, %s113
    %p115 = scmp.eq.s32.totalorder %s25, 0
    %p116 = por %p114, %p115
    %s117 = ssub.s32 %s27, %s34
    %p118 = scmp.eq.s32.totalorder %s117, 0
    %s120 = sadd.s32 %s119, 1
    %s121 = scalar_select %p118, %s119, %s120
    %p124 = pneg %p118
    %p125 = scmp.eq.s32.totalorder %s19, 3
    %p126 = por %p124, %p125
    %p127 = scmp.ne.s32.totalorder %s119, %s122
    %p128 = scmp.eq.s32.totalorder %s19, 0
    %p129 = por %p127, %p128
    %p130 = scmp.ne.s32.totalorder %s119, %s122
    %p131 = scmp.eq.s32.totalorder %s24, 3
    %p132 = por %p130, %p131
    %p133 = scmp.ne.s32.totalorder %s122, %s123
    %p134 = scmp.eq.s32.totalorder %s24, 0
    %p135 = por %p133, %p134
    %p136 = scmp.ne.s32.totalorder %s122, %s123
    %p137 = scmp.eq.s32.totalorder %s25, 3
    %p138 = por %p136, %p137
    %p140 = scmp.ne.s32.totalorder %s123, %s139
    %p141 = scmp.eq.s32.totalorder %s25, 0
    %p142 = por %p140, %p141
    %s143 = ssub.s32 %s27, %s34
    %p144 = scmp.eq.s32.totalorder %s143, 0
    %s146 = sadd.s32 %s145, 1
    %s147 = scalar_select %p144, %s145, %s146
    %p150 = pneg %p144
    %p151 = scmp.eq.s32.totalorder %s19, 3
    %p152 = por %p150, %p151
    %p153 = scmp.ne.s32.totalorder %s145, %s148
    %p154 = scmp.eq.s32.totalorder %s19, 0
    %p155 = por %p153, %p154
    %p156 = scmp.ne.s32.totalorder %s145, %s148
    %p157 = scmp.eq.s32.totalorder %s24, 3
    %p158 = por %p156, %p157
    %p159 = scmp.ne.s32.totalorder %s148, %s149
    %p160 = scmp.eq.s32.totalorder %s24, 0
    %p161 = por %p159, %p160
    %p162 = scmp.ne.s32.totalorder %s148, %s149
    %p163 = scmp.eq.s32.totalorder %s25, 3
    %p164 = por %p162, %p163
    %p166 = scmp.ne.s32.totalorder %s149, %s165
    %p167 = scmp.eq.s32.totalorder %s25, 0
    %p168 = por %p166, %p167
    %s169 = ssub.s32 %s27, %s34
    %p170 = scmp.eq.s32.totalorder %s169, 0
    %s172 = sadd.s32 %s171, 1
    %s173 = scalar_select %p170, %s171, %s172
    %p176 = pneg %p170
    %p177 = scmp.eq.s32.totalorder %s19, 3
    %p178 = por %p176, %p177
    %p179 = scmp.ne.s32.totalorder %s171, %s174
    %p180 = scmp.eq.s32.totalorder %s19, 0
    %p181 = por %p179, %p180
    %p182 = scmp.ne.s32.totalorder %s171, %s174
    %p183 = scmp.eq.s32.totalorder %s24, 3
    %p184 = por %p182, %p183
    %p185 = scmp.ne.s32.totalorder %s174, %s175
    %p186 = scmp.eq.s32.totalorder %s24, 0
    %p187 = por %p185, %p186
    %p188 = scmp.ne.s32.totalorder %s174, %s175
    %p189 = scmp.eq.s32.totalorder %s25, 3
    %p190 = por %p188, %p189
    %p192 = scmp.ne.s32.totalorder %s175, %s191
    %p193 = scmp.eq.s32.totalorder %s25, 0
    %p194 = por %p192, %p193
    %s195 = ssub.s32 %s27, %s34
    %p196 = scmp.eq.s32.totalorder %s195, 0
    %s198 = sadd.s32 %s197, 1
    %s199 = scalar_select %p196, %s197, %s198
    %p202 = pneg %p196
    %p203 = scmp.eq.s32.totalorder %s19, 3
    %p204 = por %p202, %p203
    %p205 = scmp.ne.s32.totalorder %s197, %s200
    %p206 = scmp.eq.s32.totalorder %s19, 0
    %p207 = por %p205, %p206
    %p208 = scmp.ne.s32.totalorder %s197, %s200
    %p209 = scmp.eq.s32.totalorder %s24, 3
    %p210 = por %p208, %p209
    %p211 = scmp.ne.s32.totalorder %s200, %s201
    %p212 = scmp.eq.s32.totalorder %s24, 0
    %p213 = por %p211, %p212
    %p214 = scmp.ne.s32.totalorder %s200, %s201
    %p215 = scmp.eq.s32.totalorder %s25, 3
    %p216 = por %p214, %p215
    %p218 = scmp.ne.s32.totalorder %s201, %s217
    %p219 = scmp.eq.s32.totalorder %s25, 0
    %p220 = por %p218, %p219
    %s221 = ssub.s32 %s27, %s34
    %p222 = scmp.eq.s32.totalorder %s221, 0
    %s224 = sadd.s32 %s223, 1
    %s225 = scalar_select %p222, %s223, %s224
    %p228 = pneg %p222
    %p229 = scmp.eq.s32.totalorder %s19, 3
    %p230 = por %p228, %p229
    %p231 = scmp.ne.s32.totalorder %s223, %s226
    %p232 = scmp.eq.s32.totalorder %s19, 0
    %p233 = por %p231, %p232
    %p234 = scmp.ne.s32.totalorder %s223, %s226
    %p235 = scmp.eq.s32.totalorder %s24, 3
    %p236 = por %p234, %p235
    %p237 = scmp.ne.s32.totalorder %s226, %s227
    %p238 = scmp.eq.s32.totalorder %s24, 0
    %p239 = por %p237, %p238
    %p240 = scmp.ne.s32.totalorder %s226, %s227
    %p241 = scmp.eq.s32.totalorder %s25, 3
    %p242 = por %p240, %p241
    %p244 = scmp.ne.s32.totalorder %s227, %s243
    %p245 = scmp.eq.s32.totalorder %s25, 0
    %p246 = por %p244, %p245
    %s247 = ssub.s32 %s27, %s34
    %p248 = scmp.eq.s32.totalorder %s247, 0
    %s250 = sadd.s32 %s249, 1
    %s251 = scalar_select %p248, %s249, %s250
    %p254 = pneg %p248
    %p255 = scmp.eq.s32.totalorder %s19, 3
    %p256 = por %p254, %p255
    %p257 = scmp.ne.s32.totalorder %s249, %s252
    %p258 = scmp.eq.s32.totalorder %s19, 0
    %p259 = por %p257, %p258
    %p260 = scmp.ne.s32.totalorder %s249, %s252
    %p261 = scmp.eq.s32.totalorder %s24, 3
    %p262 = por %p260, %p261
    %p263 = scmp.ne.s32.totalorder %s252, %s253
    %p264 = scmp.eq.s32.totalorder %s24, 0
    %p265 = por %p263, %p264
    %p266 = scmp.ne.s32.totalorder %s252, %s253
    %p267 = scmp.eq.s32.totalorder %s25, 3
    %p268 = por %p266, %p267
    %p270 = scmp.ne.s32.totalorder %s253, %s269
    %p271 = scmp.eq.s32.totalorder %s25, 0
    %p272 = por %p270, %p271
    %s273 = ssub.s32 %s27, %s34
    %p274 = scmp.eq.s32.totalorder %s273, 0
    %s276 = sadd.s32 %s275, 1
    %s277 = scalar_select %p274, %s275, %s276
    %p280 = pneg %p274
    %p281 = scmp.eq.s32.totalorder %s19, 3
    %p282 = por %p280, %p281
    %p283 = scmp.ne.s32.totalorder %s275, %s278
    %p284 = scmp.eq.s32.totalorder %s19, 0
    %p285 = por %p283, %p284
    %p286 = scmp.ne.s32.totalorder %s275, %s278
    %p287 = scmp.eq.s32.totalorder %s24, 3
    %p288 = por %p286, %p287
    %p289 = scmp.ne.s32.totalorder %s278, %s279
    %p290 = scmp.eq.s32.totalorder %s24, 0
    %p291 = por %p289, %p290
    %p292 = scmp.ne.s32.totalorder %s278, %s279
    %p293 = scmp.eq.s32.totalorder %s25, 3
    %p294 = por %p292, %p293
    %p296 = scmp.ne.s32.totalorder %s279, %s295
    %p297 = scmp.eq.s32.totalorder %s25, 0
    %p298 = por %p296, %p297
    %s299 = ssub.s32 %s27, %s34
    %p300 = scmp.eq.s32.totalorder %s299, 0
    %s302 = sadd.s32 %s301, 1
    %s303 = scalar_select %p300, %s301, %s302
    %p306 = pneg %p300
    %p307 = scmp.eq.s32.totalorder %s19, 3
    %p308 = por %p306, %p307
    %p309 = scmp.ne.s32.totalorder %s301, %s304
    %p310 = scmp.eq.s32.totalorder %s19, 0
    %p311 = por %p309, %p310
    %p312 = scmp.ne.s32.totalorder %s301, %s304
    %p313 = scmp.eq.s32.totalorder %s24, 3
    %p314 = por %p312, %p313
    %p315 = scmp.ne.s32.totalorder %s304, %s305
    %p316 = scmp.eq.s32.totalorder %s24, 0
    %p317 = por %p315, %p316
    %p318 = scmp.ne.s32.totalorder %s304, %s305
    %p319 = scmp.eq.s32.totalorder %s25, 3
    %p320 = por %p318, %p319
    %p322 = scmp.ne.s32.totalorder %s305, %s321
    %p323 = scmp.eq.s32.totalorder %s25, 0
    %p324 = por %p322, %p323
    %s325 = ssub.s32 %s27, %s34
    %p326 = scmp.eq.s32.totalorder %s325, 0
    %s328 = sadd.s32 %s327, 1
    %s329 = scalar_select %p326, %s327, %s328
    %p332 = pneg %p326
    %p333 = scmp.eq.s32.totalorder %s19, 3
    %p334 = por %p332, %p333
    %p335 = scmp.ne.s32.totalorder %s327, %s330
    %p336 = scmp.eq.s32.totalorder %s19, 0
    %p337 = por %p335, %p336
    %p338 = scmp.ne.s32.totalorder %s327, %s330
    %p339 = scmp.eq.s32.totalorder %s24, 3
    %p340 = por %p338, %p339
    %p341 = scmp.ne.s32.totalorder %s330, %s331
    %p342 = scmp.eq.s32.totalorder %s24, 0
    %p343 = por %p341, %p342
    %p344 = scmp.ne.s32.totalorder %s330, %s331
    %p345 = scmp.eq.s32.totalorder %s25, 3
    %p346 = por %p344, %p345
    %p348 = scmp.ne.s32.totalorder %s331, %s347
    %p349 = scmp.eq.s32.totalorder %s25, 0
    %p350 = por %p348, %p349
    %s351 = ssub.s32 %s27, %s34
    %p352 = scmp.eq.s32.totalorder %s351, 0
    %s354 = sadd.s32 %s353, 1
    %s355 = scalar_select %p352, %s353, %s354
    %p358 = pneg %p352
    %p359 = scmp.eq.s32.totalorder %s19, 3
    %p360 = por %p358, %p359
    %p361 = scmp.ne.s32.totalorder %s353, %s356
    %p362 = scmp.eq.s32.totalorder %s19, 0
    %p363 = por %p361, %p362
    %p364 = scmp.ne.s32.totalorder %s353, %s356
    %p365 = scmp.eq.s32.totalorder %s24, 3
    %p366 = por %p364, %p365
    %p367 = scmp.ne.s32.totalorder %s356, %s357
    %p368 = scmp.eq.s32.totalorder %s24, 0
    %p369 = por %p367, %p368
    %p370 = scmp.ne.s32.totalorder %s356, %s357
    %p371 = scmp.eq.s32.totalorder %s25, 3
    %p372 = por %p370, %p371
    %p374 = scmp.ne.s32.totalorder %s357, %s373
    %p375 = scmp.eq.s32.totalorder %s25, 0
    %p376 = por %p374, %p375
    %s377 = ssub.s32 %s26, %s38
    %p378 = scmp.eq.s32.totalorder %s377, 0
    %s380 = sadd.s32 %s379, 1
    %s381 = scalar_select %p378, %s379, %s380
    %p384 = pneg %p378
    %p385 = scmp.eq.s32.totalorder %s19, 3
    %p386 = por %p384, %p385
    %p387 = scmp.ne.s32.totalorder %s379, %s382
    %p388 = scmp.eq.s32.totalorder %s19, 0
    %p389 = por %p387, %p388
    %p390 = scmp.ne.s32.totalorder %s379, %s382
    %p391 = scmp.eq.s32.totalorder %s24, 3
    %p392 = por %p390, %p391
    %p393 = scmp.ne.s32.totalorder %s382, %s383
    %p394 = scmp.eq.s32.totalorder %s24, 0
    %p395 = por %p393, %p394
    %p396 = scmp.ne.s32.totalorder %s382, %s383
    %p397 = scmp.eq.s32.totalorder %s25, 3
    %p398 = por %p396, %p397
    %p400 = scmp.ne.s32.totalorder %s383, %s399
    %p401 = scmp.eq.s32.totalorder %s25, 0
    %p402 = por %p400, %p401
    %p403 = scmp.le.s32.totalorder 1, %s19
    %p404 = scmp.lt.s32.totalorder %s19, 5
    %p405 = pnand %p403, %p404
    %p406 = pneg %p405
    // Predicated region
    $region9: #{frozen_openclip_image_embedder_v2.5} parent=5 // pred_check
      _
    $region10: #{frozen_openclip_image_embedder_v2.5} parent=5 // pred_check_branch
      %408 = sbr.rel (%p405) target = $region12
    $region11: #{frozen_openclip_image_embedder_v2.5} parent=5 // pred_region
      %s409 = ssub.s32 %s19, 1
    $region12: #{frozen_openclip_image_embedder_v2.5} parent=5 // pred_fallthru
      _
    %p410 = scmp.lt.s32.totalorder %s19, 4
    // Predicated region
    $region13: #{frozen_openclip_image_embedder_v2.5} parent=5 // pred_check
      %p411 = pneg %p410
    $region14: #{frozen_openclip_image_embedder_v2.5} parent=5 // pred_check_branch
      %413 = sbr.rel (%p411) target = $region16
    $region15: #{frozen_openclip_image_embedder_v2.5} parent=5 // pred_region
      // Predicated region
      $region17: #{frozen_openclip_image_embedder_v2.5} parent=15 // pred_check
        %p414 = pneg %p51
      $region18: #{frozen_openclip_image_embedder_v2.5} parent=15 // pred_check_branch
        %416 = sbr.rel (%p414) target = $region20
      $region19: #{frozen_openclip_image_embedder_v2.5} parent=15 // pred_region
        %p417 = scmp.lt.s32.totalorder %s26, 1
        %s418 = scalar_select %p417, %s26, 1
        %s419 = smul.addr %s418, 4
        %s420 = smul.addr %s419, 8
        %s421 = scalar_lea.vmem %s0, %s420
      $region20: #{frozen_openclip_image_embedder_v2.5} parent=15 // pred_fallthru
        _
      // Predicated region
      $region21: #{frozen_openclip_image_embedder_v2.5} parent=15 // pred_check
        %p422 = pneg %p77
      $region22: #{frozen_openclip_image_embedder_v2.5} parent=15 // pred_check_branch
        %424 = sbr.rel (%p422) target = $region24
      $region23: #{frozen_openclip_image_embedder_v2.5} parent=15 // pred_region
        %p425 = scmp.lt.s32.totalorder %s27, 1
        %s426 = scalar_select %p425, %s27, 1
        %s427 = scalar_lea.vmem %s1, %s426
      $region24: #{frozen_openclip_image_embedder_v2.5} parent=15 // pred_fallthru
        _
      // Predicated region
      $region25: #{frozen_openclip_image_embedder_v2.5} parent=15 // pred_check
        %p428 = pneg %p103
      $region26: #{frozen_openclip_image_embedder_v2.5} parent=15 // pred_check_branch
        %430 = sbr.rel (%p428) target = $region28
      $region27: #{frozen_openclip_image_embedder_v2.5} parent=15 // pred_region
        %p431 = scmp.lt.s32.totalorder %s27, 1
        %s432 = scalar_select %p431, %s27, 1
        %s433 = scalar_lea.vmem %s2, %s432
      $region28: #{frozen_openclip_image_embedder_v2.5} parent=15 // pred_fallthru
        _
      // Predicated region
      $region29: #{frozen_openclip_image_embedder_v2.5} parent=15 // pred_check
        %p434 = pneg %p129
      $region30: #{frozen_openclip_image_embedder_v2.5} parent=15 // pred_check_branch
        %436 = sbr.rel (%p434) target = $region32
      $region31: #{frozen_openclip_image_embedder_v2.5} parent=15 // pred_region
        %p437 = scmp.lt.s32.totalorder %s27, 1
        %s438 = scalar_select %p437, %s27, 1
        %s439 = smul.addr %s438, 16
        %s440 = smul.addr %s439, 4
        %s441 = scalar_lea.vmem %s3, %s440
      $region32: #{frozen_openclip_image_embedder_v2.5} parent=15 // pred_fallthru
        _
      // Predicated region
      $region33: #{frozen_openclip_image_embedder_v2.5} parent=15 // pred_check
        %p442 = pneg %p155
      $region34: #{frozen_openclip_image_embedder_v2.5} parent=15 // pred_check_branch
        %444 = sbr.rel (%p442) target = $region36
      $region35: #{frozen_openclip_image_embedder_v2.5} parent=15 // pred_region
        %p445 = scmp.lt.s32.totalorder %s27, 1
        %s446 = scalar_select %p445, %s27, 1
        %s447 = smul.addr %s446, 2
        %s448 = scalar_lea.vmem %s4, %s447
      $region36: #{frozen_openclip_image_embedder_v2.5} parent=15 // pred_fallthru
        _
      // Predicated region
      $region37: #{frozen_openclip_image_embedder_v2.5} parent=15 // pred_check
        %p449 = pneg %p181
      $region38: #{frozen_openclip_image_embedder_v2.5} parent=15 // pred_check_branch
        %451 = sbr.rel (%p449) target = $region40
      $region39: #{frozen_openclip_image_embedder_v2.5} parent=15 // pred_region
        %p452 = scmp.lt.s32.totalorder %s27, 1
        %s453 = scalar_select %p452, %s27, 1
        %s454 = smul.addr %s453, 8
        %s455 = smul.addr %s454, 4
        %s456 = scalar_lea.vmem %s5, %s455
      $region40: #{frozen_openclip_image_embedder_v2.5} parent=15 // pred_fallthru
        _
      // Predicated region
      $region41: #{frozen_openclip_image_embedder_v2.5} parent=15 // pred_check
        %p457 = pneg %p207
      $region42: #{frozen_openclip_image_embedder_v2.5} parent=15 // pred_check_branch
        %459 = sbr.rel (%p457) target = $region44
      $region43: #{frozen_openclip_image_embedder_v2.5} parent=15 // pred_region
        %p460 = scmp.lt.s32.totalorder %s27, 1
        %s461 = scalar_select %p460, %s27, 1
        %s462 = scalar_lea.vmem %s6, %s461
      $region44: #{frozen_openclip_image_embedder_v2.5} parent=15 // pred_fallthru
        _
      // Predicated region
      $region45: #{frozen_openclip_image_embedder_v2.5} parent=15 // pred_check
        %p463 = pneg %p233
      $region46: #{frozen_openclip_image_embedder_v2.5} parent=15 // pred_check_branch
        %465 = sbr.rel (%p463) target = $region48
      $region47: #{frozen_openclip_image_embedder_v2.5} parent=15 // pred_region
        %p466 = scmp.lt.s32.totalorder %s27, 1
        %s467 = scalar_select %p466, %s27, 1
        %s468 = scalar_lea.vmem %s7, %s467
      $region48: #{frozen_openclip_image_embedder_v2.5} parent=15 // pred_fallthru
        _
      // Predicated region
      $region49: #{frozen_openclip_image_embedder_v2.5} parent=15 // pred_check
        %p469 = pneg %p259
      $region50: #{frozen_openclip_image_embedder_v2.5} parent=15 // pred_check_branch
        %471 = sbr.rel (%p469) target = $region52
      $region51: #{frozen_openclip_image_embedder_v2.5} parent=15 // pred_region
        %p472 = scmp.lt.s32.totalorder %s27, 1
        %s473 = scalar_select %p472, %s27, 1
        %s474 = scalar_lea.vmem %s8, %s473
      $region52: #{frozen_openclip_image_embedder_v2.5} parent=15 // pred_fallthru
        _
      // Predicated region
      $region53: #{frozen_openclip_image_embedder_v2.5} parent=15 // pred_check
        %p475 = pneg %p285
      $region54: #{frozen_openclip_image_embedder_v2.5} parent=15 // pred_check_branch
        %477 = sbr.rel (%p475) target = $region56
      $region55: #{frozen_openclip_image_embedder_v2.5} parent=15 // pred_region
        %p478 = scmp.lt.s32.totalorder %s27, 1
        %s479 = scalar_select %p478, %s27, 1
        %s480 = smul.addr %s479, 16
        %s481 = smul.addr %s480, 4
        %s482 = scalar_lea.vmem %s9, %s481
      $region56: #{frozen_openclip_image_embedder_v2.5} parent=15 // pred_fallthru
        _
      // Predicated region
      $region57: #{frozen_openclip_image_embedder_v2.5} parent=15 // pred_check
        %p483 = pneg %p311
      $region58: #{frozen_openclip_image_embedder_v2.5} parent=15 // pred_check_branch
        %485 = sbr.rel (%p483) target = $region60
      $region59: #{frozen_openclip_image_embedder_v2.5} parent=15 // pred_region
        %p486 = scmp.lt.s32.totalorder %s27, 1
        %s487 = scalar_select %p486, %s27, 1
        %s488 = smul.addr %s487, 2
        %s489 = scalar_lea.vmem %s10, %s488
      $region60: #{frozen_openclip_image_embedder_v2.5} parent=15 // pred_fallthru
        _
      // Predicated region
      $region61: #{frozen_openclip_image_embedder_v2.5} parent=15 // pred_check
        %p490 = pneg %p337
      $region62: #{frozen_openclip_image_embedder_v2.5} parent=15 // pred_check_branch
        %492 = sbr.rel (%p490) target = $region64
      $region63: #{frozen_openclip_image_embedder_v2.5} parent=15 // pred_region
        %p493 = scmp.lt.s32.totalorder %s27, 1
        %s494 = scalar_select %p493, %s27, 1
        %s495 = smul.addr %s494, 32
        %s496 = smul.addr %s495, 4
        %s497 = scalar_lea.vmem %s11, %s496
      $region64: #{frozen_openclip_image_embedder_v2.5} parent=15 // pred_fallthru
        _
      // Predicated region
      $region65: #{frozen_openclip_image_embedder_v2.5} parent=15 // pred_check
        %p498 = pneg %p363
      $region66: #{frozen_openclip_image_embedder_v2.5} parent=15 // pred_check_branch
        %500 = sbr.rel (%p498) target = $region68
      $region67: #{frozen_openclip_image_embedder_v2.5} parent=15 // pred_region
        %p501 = scmp.lt.s32.totalorder %s27, 1
        %s502 = scalar_select %p501, %s27, 1
        %s503 = scalar_lea.vmem %s12, %s502
      $region68: #{frozen_openclip_image_embedder_v2.5} parent=15 // pred_fallthru
        _
    $region16: #{frozen_openclip_image_embedder_v2.5} parent=5 // pred_fallthru
      _
    %p504 = scmp.le.s32.totalorder 1, %s19
    %p505 = scmp.lt.s32.totalorder %s19, 5
    %p506 = pnand %p504, %p505
    %p507 = pneg %p506
    // Predicated region
    $region69: #{frozen_openclip_image_embedder_v2.5} parent=5 // pred_check
      _
    $region70: #{frozen_openclip_image_embedder_v2.5} parent=5 // pred_check_branch
      %509 = sbr.rel (%p506) target = $region72
    $region71: #{frozen_openclip_image_embedder_v2.5} parent=5 // pred_region
      %s510 = ssub.s32 %s19, 1
      %p511 = scmp.lt.s32.totalorder %s28, 1
      %s512 = scalar_select %p511, %s28, 1
      %s513 = smul.addr %s512, 4
      %s514 = smul.addr %s513, 8
      %s515 = scalar_lea.vmem %s0, %s514
      %p516 = pneg %p57
      %p517 = pneg %p54
      %p518 = scmp.lt.s32.totalorder %s29, 1
      %s519 = scalar_select %p518, %s29, 1
      %s520 = scalar_lea.vmem %s1, %s519
      %p521 = pneg %p83
      %p522 = pneg %p80
      %p523 = scmp.lt.s32.totalorder %s29, 1
      %s524 = scalar_select %p523, %s29, 1
      %s525 = scalar_lea.vmem %s2, %s524
      %p526 = pneg %p109
      %p527 = pneg %p106
      %p528 = scmp.lt.s32.totalorder %s29, 1
      %s529 = scalar_select %p528, %s29, 1
      %s530 = smul.addr %s529, 16
      %s531 = smul.addr %s530, 4
      %s532 = scalar_lea.vmem %s3, %s531
      %p533 = pneg %p135
      %p534 = pneg %p132
      %p535 = scmp.lt.s32.totalorder %s29, 1
      %s536 = scalar_select %p535, %s29, 1
      %s537 = smul.addr %s536, 2
      %s538 = scalar_lea.vmem %s4, %s537
      %p539 = pneg %p161
      %p540 = pneg %p158
      %p541 = scmp.lt.s32.totalorder %s29, 1
      %s542 = scalar_select %p541, %s29, 1
      %s543 = smul.addr %s542, 8
      %s544 = smul.addr %s543, 4
      %s545 = scalar_lea.vmem %s5, %s544
      %p546 = pneg %p187
      %p547 = pneg %p184
      %p548 = scmp.lt.s32.totalorder %s29, 1
      %s549 = scalar_select %p548, %s29, 1
      %s550 = scalar_lea.vmem %s6, %s549
      %p551 = pneg %p213
      %p552 = pneg %p210
      %p553 = scmp.lt.s32.totalorder %s29, 1
      %s554 = scalar_select %p553, %s29, 1
      %s555 = scalar_lea.vmem %s7, %s554
      %p556 = pneg %p239
      %p557 = pneg %p236
      %p558 = scmp.lt.s32.totalorder %s29, 1
      %s559 = scalar_select %p558, %s29, 1
      %s560 = scalar_lea.vmem %s8, %s559
      %p561 = pneg %p265
      %p562 = pneg %p262
      %p563 = scmp.lt.s32.totalorder %s29, 1
      %s564 = scalar_select %p563, %s29, 1
      %s565 = smul.addr %s564, 16
      %s566 = smul.addr %s565, 4
      %s567 = scalar_lea.vmem %s9, %s566
      %p568 = pneg %p291
      %p569 = pneg %p288
      %p570 = scmp.lt.s32.totalorder %s29, 1
      %s571 = scalar_select %p570, %s29, 1
      %s572 = smul.addr %s571, 2
      %s573 = scalar_lea.vmem %s10, %s572
      %p574 = pneg %p317
      %p575 = pneg %p314
      %p576 = scmp.lt.s32.totalorder %s29, 1
      %s577 = scalar_select %p576, %s29, 1
      %s578 = smul.addr %s577, 32
      %s579 = smul.addr %s578, 4
      %s580 = scalar_lea.vmem %s11, %s579
      %p581 = pneg %p343
      %p582 = pneg %p340
      %p583 = scmp.lt.s32.totalorder %s29, 1
      %s584 = scalar_select %p583, %s29, 1
      %s585 = scalar_lea.vmem %s12, %s584
      %p586 = pneg %p369
      %p587 = pneg %p366
      %p588 = pneg %p395
      %p589 = pneg %p392
      %p590 = scmp.lt.s32.totalorder %s28, 1
      %s591 = scalar_select %p590, %s28, 1
      %s592 = smul.addr %s591, 4
      %s593 = smul.addr %s592, 8
      %s594 = scalar_lea.vmem %s13, %s593
      %p595 = scmp.lt.s32.totalorder %s28, 1
      %s596 = scalar_select %p595, %s28, 1
      %s597 = smul.addr %s596, 4
      %s598 = smul.addr %s597, 8
      %s599 = scalar_lea.vmem %s0, %s598
      %p600 = scmp.lt.s32.totalorder %s29, 1
      %s601 = scalar_select %p600, %s29, 1
      %s602 = scalar_lea.vmem %s1, %s601
      %p603 = scmp.lt.s32.totalorder %s29, 1
      %s604 = scalar_select %p603, %s29, 1
      %s605 = scalar_lea.vmem %s2, %s604
      %p606 = scmp.lt.s32.totalorder %s29, 1
      %s607 = scalar_select %p606, %s29, 1
      %s608 = smul.addr %s607, 16
      %s609 = smul.addr %s608, 4
      %s610 = scalar_lea.vmem %s3, %s609
      %p611 = scmp.lt.s32.totalorder %s29, 1
      %s612 = scalar_select %p611, %s29, 1
      %s613 = smul.addr %s612, 2
      %s614 = scalar_lea.vmem %s4, %s613
      %p615 = scmp.lt.s32.totalorder %s29, 1
      %s616 = scalar_select %p615, %s29, 1
      %s617 = smul.addr %s616, 8
      %s618 = smul.addr %s617, 4
      %s619 = scalar_lea.vmem %s5, %s618
      %p620 = scmp.lt.s32.totalorder %s29, 1
      %s621 = scalar_select %p620, %s29, 1
      %s622 = scalar_lea.vmem %s6, %s621
      %p623 = scmp.lt.s32.totalorder %s29, 1
      %s624 = scalar_select %p623, %s29, 1
      %s625 = scalar_lea.vmem %s7, %s624
      %p626 = scmp.lt.s32.totalorder %s29, 1
      %s627 = scalar_select %p626, %s29, 1
      %s628 = scalar_lea.vmem %s8, %s627
      %p629 = scmp.lt.s32.totalorder %s29, 1
      %s630 = scalar_select %p629, %s29, 1
      %s631 = smul.addr %s630, 16
      %s632 = smul.addr %s631, 4
      %s633 = scalar_lea.vmem %s9, %s632
      %p634 = scmp.lt.s32.totalorder %s29, 1
      %s635 = scalar_select %p634, %s29, 1
      %s636 = smul.addr %s635, 2
      %s637 = scalar_lea.vmem %s10, %s636
      %p638 = scmp.lt.s32.totalorder %s29, 1
      %s639 = scalar_select %p638, %s29, 1
      %s640 = smul.addr %s639, 32
      %s641 = smul.addr %s640, 4
      %s642 = scalar_lea.vmem %s11, %s641
      %p643 = scmp.lt.s32.totalorder %s29, 1
      %s644 = scalar_select %p643, %s29, 1
      %s645 = scalar_lea.vmem %s12, %s644
      %p646 = scmp.lt.s32.totalorder %s28, 1
      %s647 = scalar_select %p646, %s28, 1
      %s648 = smul.addr %s647, 4
      %s649 = smul.addr %s648, 8
      %s650 = scalar_lea.vmem %s13, %s649
      %p652 = scmp.eq.s32.totalorder %s29, 0
      // Predicated region
      $region73: #{frozen_openclip_image_embedder_v2.5} parent=71 // pred_check
        %p653 = pneg %p652
      $region74: #{frozen_openclip_image_embedder_v2.5} parent=71 // pred_check_branch
        %655 = sbr.rel (%p653) target = $region76
      $region75: #{frozen_openclip_image_embedder_v2.5} parent=71 // pred_region
        %v656 = vld [vmem:[%s599] sm:$0xff]
        %v657 = vld [vmem:[%s599 + $0x8] sm:$0xff]
        %v658 = vld [vmem:[%s599 + $0x10] sm:$0xff]
        %v659 = vld [vmem:[%s599 + $0x18] sm:$0xff]
        %vm660 = vcmask 523264
        %661 = vst.msk [vmem:[%s650] sm:$0xff] %vm660, %v656
        %662 = vst.msk [vmem:[%s650 + $0x8] sm:$0xff] %vm660, %v657
        %663 = vst.msk [vmem:[%s650 + $0x10] sm:$0xff] %vm660, %v658
        %664 = vst.msk [vmem:[%s650 + $0x18] sm:$0xff] %vm660, %v659
      $region76: #{frozen_openclip_image_embedder_v2.5} parent=71 // pred_fallthru
        _
      %v665 = vld [vmem:[%s650] sm:$0xff]
      %v666 = vld [vmem:[%s650 + $0x8] sm:$0xff]
      %v667 = vld [vmem:[%s650 + $0x10] sm:$0xff]
      %v668 = vld [vmem:[%s650 + $0x18] sm:$0xff]
      %v669 = vld [vmem:[%s602] sm:$0x1]
      %v670 = vld [vmem:[%s605] sm:$0x1]
      %vm671 = vcmask 523264
      %v672 = vsel %vm671, %v665, 0.0
      %673 = vadd.xlane.f32.xlu0 %v672
      %v674 = vpop.xlane.xlu0 %673
      %v675 = vsel %vm671, %v666, 0.0
      %676 = vadd.xlane.f32.xlu0 %v675
      %v677 = vpop.xlane.xlu0 %676
      %v678 = vsel %vm671, %v667, 0.0
      %679 = vadd.xlane.f32.xlu0 %v678
      %v680 = vpop.xlane.xlu0 %679
      %v681 = vsel %vm671, %v668, 0.0
      %682 = vadd.xlane.f32.xlu0 %v681
      %v683 = vpop.xlane.xlu0 %682
      %v684 = vrcp.pop 64.0
      %v685 = vmul.f32 64.0, %v684
      %v686 = vsub.f32 1.0, %v685
      %v687 = vmul.f32 %v684, %v686
      %v688 = vadd.f32 %v684, %v687
      %vm689 = vweird.f32 %v684
      %v690 = vsel %vm689, %v684, %v688
      %v691 = vmul.f32 %v674, %v690
      %v692 = vmul.f32 %v677, %v690
      %v693 = vmul.f32 %v680, %v690
      %v694 = vmul.f32 %v683, %v690
      %v695 = vsub.f32 %v665, %v691
      %v696 = vsub.f32 %v666, %v692
      %v697 = vsub.f32 %v667, %v693
      %v698 = vsub.f32 %v668, %v694
      %v699 = vmul.f32 %v695, %v695
      %v700 = vmul.f32 %v696, %v696
      %v701 = vmul.f32 %v697, %v697
      %v702 = vmul.f32 %v698, %v698
      %v703 = vsel %vm671, %v699, 0.0
      %704 = vadd.xlane.f32.xlu0 %v703
      %v705 = vpop.xlane.xlu0 %704
      %v706 = vsel %vm671, %v700, 0.0
      %707 = vadd.xlane.f32.xlu0 %v706
      %v708 = vpop.xlane.xlu0 %707
      %v709 = vsel %vm671, %v701, 0.0
      %710 = vadd.xlane.f32.xlu0 %v709
      %v711 = vpop.xlane.xlu0 %710
      %v712 = vsel %vm671, %v702, 0.0
      %713 = vadd.xlane.f32.xlu0 %v712
      %v714 = vpop.xlane.xlu0 %713
      %v715 = vmul.f32 %v705, %v690
      %v716 = vmul.f32 %v708, %v690
      %v717 = vmul.f32 %v711, %v690
      %v718 = vmul.f32 %v714, %v690
      %v719 = vadd.f32 %v715, 1e-05
      %v720 = vadd.f32 %v716, 1e-05
      %v721 = vadd.f32 %v717, 1e-05
      %v722 = vadd.f32 %v718, 1e-05
      %v723 = vrsqrt.pop %v719
      %v724 = vmul.f32 %v723, %v719
      %v725 = vmul.f32 %v724, %v723
      %v726 = vmul.f32 0.5, %v725
      %v727 = vsub.f32 1.5, %v726
      %v728 = vmul.f32 %v723, %v727
      %vm729 = vweird.f32 %v719
      %vm730 = vweird.f32 %v723
      %vm731 = vmor %vm729, %vm730
      %v732 = vsel %vm731, %v723, %v728
      %v733 = vrsqrt.pop %v720
      %v734 = vmul.f32 %v733, %v720
      %v735 = vmul.f32 %v734, %v733
      %v736 = vmul.f32 0.5, %v735
      %v737 = vsub.f32 1.5, %v736
      %v738 = vmul.f32 %v733, %v737
      %vm739 = vweird.f32 %v720
      %vm740 = vweird.f32 %v733
      %vm741 = vmor %vm739, %vm740
      %v742 = vsel %vm741, %v733, %v738
      %v743 = vrsqrt.pop %v721
      %v744 = vmul.f32 %v743, %v721
      %v745 = vmul.f32 %v744, %v743
      %v746 = vmul.f32 0.5, %v745
      %v747 = vsub.f32 1.5, %v746
      %v748 = vmul.f32 %v743, %v747
      %vm749 = vweird.f32 %v721
      %vm750 = vweird.f32 %v743
      %vm751 = vmor %vm749, %vm750
      %v752 = vsel %vm751, %v743, %v748
      %v753 = vrsqrt.pop %v722
      %v754 = vmul.f32 %v753, %v722
      %v755 = vmul.f32 %v754, %v753
      %v756 = vmul.f32 0.5, %v755
      %v757 = vsub.f32 1.5, %v756
      %v758 = vmul.f32 %v753, %v757
      %vm759 = vweird.f32 %v722
      %vm760 = vweird.f32 %v753
      %vm761 = vmor %vm759, %vm760
      %v762 = vsel %vm761, %v753, %v758
      %v763 = vmul.f32 %v695, %v732
      %v764 = vmul.f32 %v696, %v742
      %v765 = vmul.f32 %v697, %v752
      %v766 = vmul.f32 %v698, %v762
      %v768 = vperm.slane %v669, 0
      %v770 = vmul.f32 %v763, %v768
      %v771 = vmul.f32 %v764, %v768
      %v772 = vmul.f32 %v765, %v768
      %v773 = vmul.f32 %v766, %v768
      %v775 = vperm.slane %v670, 0
      %v777 = vadd.f32 %v770, %v775
      %v778 = vadd.f32 %v771, %v775
      %v779 = vadd.f32 %v772, %v775
      %v780 = vadd.f32 %v773, %v775
      %v781 = vpack.c.bf16 %v778, %v777
      %v782 = vpack.c.bf16 %v780, %v779
      %v783 = vld [vmem:[%s610] sm:$0xff]
      %v784 = vld [vmem:[%s610 + $0x8] sm:$0xff]
      %v785 = vld [vmem:[%s610 + $0x10] sm:$0xff]
      %v786 = vld [vmem:[%s610 + $0x18] sm:$0xff]
      %v787 = vld [vmem:[%s610 + $0x20] sm:$0xff]
      %v788 = vld [vmem:[%s610 + $0x28] sm:$0xff]
      %v789 = vld [vmem:[%s610 + $0x30] sm:$0xff]
      %v790 = vld [vmem:[%s610 + $0x38] sm:$0xff]
      %v791 = vld [vmem:[%s614] sm:$0x3]
      %v793 = vperm.slane %v791, 0
      %v794 = vperm.slane %v791, 1
      %v805 = vunpack.c.l.b16 %v783
      %v806 = vunpack.c.h.b16 %v783
      %v807 = vunpack.c.l.b16 %v784
      %v808 = vunpack.c.h.b16 %v784
      %v809 = vunpack.c.l.b16 %v785
      %v810 = vunpack.c.h.b16 %v785
      %v811 = vunpack.c.l.b16 %v786
      %v812 = vunpack.c.h.b16 %v786
      %v813 = vunpack.c.l.b16 %v787
      %v814 = vunpack.c.h.b16 %v787
      %v815 = vunpack.c.l.b16 %v788
      %v816 = vunpack.c.h.b16 %v788
      %v817 = vunpack.c.l.b16 %v789
      %v818 = vunpack.c.h.b16 %v789
      %v819 = vunpack.c.l.b16 %v790
      %v820 = vunpack.c.h.b16 %v790
      %v821 = vpack.c.b16 %v807, %v805
      %v822 = vpack.c.b16 %v808, %v806
      %v823 = vpack.c.b16 %v811, %v809
      %v824 = vpack.c.b16 %v812, %v810
      %v825 = vpack.c.b16 %v815, %v813
      %v826 = vpack.c.b16 %v816, %v814
      %v827 = vpack.c.b16 %v819, %v817
      %v828 = vpack.c.b16 %v820, %v818
      %v838 = vsel %vm671, %v781, 0
      %v841 = vsel %vm671, %v782, 0
      %843 = vmatpush.bf16.msra.mxu0 0
      %844 = vmatpush.bf16.msra.mxu0 0
      %845 = vmatpush.bf16.msra.mxu0 0
      %846 = vmatpush.bf16.msra.mxu0 0
      %847 = vmatpush.bf16.msra.mxu0 %v827
      %848 = vmatpush.bf16.msra.mxu0 %v825
      %849 = vmatpush.bf16.msra.mxu0 %v823
      %850 = vmatpush.bf16.msra.mxu0 %v821
      %851 = vmatmul.bf16.gmra.mxu0 %v838
      %v852 = vpop.f32.mrf.mxu0
      %v853 = vadd.f32 %v793, %v852
      %v854 = vpop.f32.mrf.mxu0
      %v855 = vadd.f32 %v793, %v854
      %856 = vmatmul.bf16.gmra.mxu0 %v841
      %v857 = vpop.f32.mrf.mxu0
      %v858 = vadd.f32 %v793, %v857
      %v859 = vpop.f32.mrf.mxu0
      %v860 = vadd.f32 %v793, %v859
      %861 = vdwg.mxu0
      %862 = vmatpush.bf16.msra.mxu0 0
      %863 = vmatpush.bf16.msra.mxu0 0
      %864 = vmatpush.bf16.msra.mxu0 0
      %865 = vmatpush.bf16.msra.mxu0 0
      %866 = vmatpush.bf16.msra.mxu0 %v828
      %867 = vmatpush.bf16.msra.mxu0 %v826
      %868 = vmatpush.bf16.msra.mxu0 %v824
      %869 = vmatpush.bf16.msra.mxu0 %v822
      %870 = vmatmul.bf16.gmra.mxu0 %v838
      %v871 = vpop.f32.mrf.mxu0
      %v872 = vadd.f32 %v794, %v871
      %v873 = vpop.f32.mrf.mxu0
      %v874 = vadd.f32 %v794, %v873
      %875 = vmatmul.bf16.gmra.mxu0 %v841
      %v876 = vpop.f32.mrf.mxu0
      %v877 = vadd.f32 %v794, %v876
      %v878 = vpop.f32.mrf.mxu0
      %v879 = vadd.f32 %v794, %v878
      %880 = vdwg.mxu0
      %885 = vrot.lane.b32.xlu0 %v853, 112
      %v886 = vpop.permute.xlu0 %885
      %887 = vrot.lane.b32.xlu0 %v855, 112
      %v888 = vpop.permute.xlu0 %887
      %889 = vrot.lane.b32.xlu0 %v858, 112
      %v890 = vpop.permute.xlu0 %889
      %891 = vrot.lane.b32.xlu0 %v860, 112
      %v892 = vpop.permute.xlu0 %891
      %897 = vrot.lane.b32.xlu0 %v853, 96
      %v898 = vpop.permute.xlu0 %897
      %899 = vrot.lane.b32.xlu0 %v855, 96
      %v900 = vpop.permute.xlu0 %899
      %901 = vrot.lane.b32.xlu0 %v858, 96
      %v902 = vpop.permute.xlu0 %901
      %903 = vrot.lane.b32.xlu0 %v860, 96
      %v904 = vpop.permute.xlu0 %903
      %909 = vrot.lane.b32.xlu0 %v853, 80
      %v910 = vpop.permute.xlu0 %909
      %911 = vrot.lane.b32.xlu0 %v855, 80
      %v912 = vpop.permute.xlu0 %911
      %913 = vrot.lane.b32.xlu0 %v858, 80
      %v914 = vpop.permute.xlu0 %913
      %915 = vrot.lane.b32.xlu0 %v860, 80
      %v916 = vpop.permute.xlu0 %915
      %v921 = vpack.c.bf16 %v853, %v853
      %v922 = vpack.c.bf16 %v855, %v855
      %v923 = vpack.c.bf16 %v858, %v858
      %v924 = vpack.c.bf16 %v860, %v860
      %v925 = vpack.c.bf16 %v886, %v886
      %v926 = vpack.c.bf16 %v888, %v888
      %v927 = vpack.c.bf16 %v890, %v890
      %v928 = vpack.c.bf16 %v892, %v892
      %v929 = vpack.c.bf16 %v898, %v898
      %v930 = vpack.c.bf16 %v900, %v900
      %v931 = vpack.c.bf16 %v902, %v902
      %v932 = vpack.c.bf16 %v904, %v904
      %v933 = vpack.c.bf16 %v910, %v910
      %v934 = vpack.c.bf16 %v912, %v912
      %v935 = vpack.c.bf16 %v914, %v914
      %v936 = vpack.c.bf16 %v916, %v916
      %941 = vrot.lane.b32.xlu0 %v872, 112
      %v942 = vpop.permute.xlu0 %941
      %943 = vrot.lane.b32.xlu0 %v874, 112
      %v944 = vpop.permute.xlu0 %943
      %945 = vrot.lane.b32.xlu0 %v877, 112
      %v946 = vpop.permute.xlu0 %945
      %947 = vrot.lane.b32.xlu0 %v879, 112
      %v948 = vpop.permute.xlu0 %947
      %953 = vrot.lane.b32.xlu0 %v872, 96
      %v954 = vpop.permute.xlu0 %953
      %955 = vrot.lane.b32.xlu0 %v874, 96
      %v956 = vpop.permute.xlu0 %955
      %957 = vrot.lane.b32.xlu0 %v877, 96
      %v958 = vpop.permute.xlu0 %957
      %959 = vrot.lane.b32.xlu0 %v879, 96
      %v960 = vpop.permute.xlu0 %959
      %965 = vrot.lane.b32.xlu0 %v872, 80
      %v966 = vpop.permute.xlu0 %965
      %967 = vrot.lane.b32.xlu0 %v874, 80
      %v968 = vpop.permute.xlu0 %967
      %969 = vrot.lane.b32.xlu0 %v877, 80
      %v970 = vpop.permute.xlu0 %969
      %971 = vrot.lane.b32.xlu0 %v879, 80
      %v972 = vpop.permute.xlu0 %971
      %v977 = vpack.c.bf16 %v872, %v872
      %v978 = vpack.c.bf16 %v874, %v874
      %v979 = vpack.c.bf16 %v877, %v877
      %v980 = vpack.c.bf16 %v879, %v879
      %v981 = vpack.c.bf16 %v942, %v942
      %v982 = vpack.c.bf16 %v944, %v944
      %v983 = vpack.c.bf16 %v946, %v946
      %v984 = vpack.c.bf16 %v948, %v948
      %v985 = vpack.c.bf16 %v954, %v954
      %v986 = vpack.c.bf16 %v956, %v956
      %v987 = vpack.c.bf16 %v958, %v958
      %v988 = vpack.c.bf16 %v960, %v960
      %v989 = vpack.c.bf16 %v966, %v966
      %v990 = vpack.c.bf16 %v968, %v968
      %v991 = vpack.c.bf16 %v970, %v970
      %v992 = vpack.c.bf16 %v972, %v972
      %v997 = vunpack.c.l.b16 %v921
      %v998 = vunpack.c.l.b16 %v922
      %v999 = vunpack.c.l.b16 %v923
      %v1000 = vunpack.c.l.b16 %v924
      %v1001 = vpack.c.b16 %v998, %v997
      %v1002 = vpack.c.b16 %v1000, %v999
      %1003 = vrot.lane.b32.xlu0 %v1001, 64
      %v1004 = vpop.permute.xlu0 %1003
      %1005 = vrot.lane.b32.xlu0 %v1002, 64
      %v1006 = vpop.permute.xlu0 %1005
      %vm1007 = vcmask 130048
      %v1009 = vsel %vm1007, %v1001, 0
      %v1012 = vsel %vm1007, %v1002, 0
      %v1015 = vsel %vm1007, %v1004, 0
      %v1018 = vsel %vm1007, %v1006, 0
      %1020 = vmatpush.bf16.xpose.msra.mxu0 0
      %1021 = vmatpush.bf16.xpose.msra.mxu0 0
      %1022 = vmatpush.bf16.xpose.msra.mxu0 0
      %1023 = vmatpush.bf16.xpose.msra.mxu0 0
      %1024 = vmatpush.bf16.xpose.msra.mxu0 0
      %1025 = vmatpush.bf16.xpose.msra.mxu0 0
      %1026 = vmatpush.bf16.xpose.msra.mxu0 %v1018
      %1027 = vmatpush.bf16.xpose.msra.mxu0 %v1015
      %1028 = vmatmul.bf16.gmra.mxu0 %v1009
      %v1029 = vpop.f32.mrf.mxu0
      %v1030 = vadd.f32 0.0, %v1029
      %v1031 = vpop.f32.mrf.mxu0
      %v1032 = vadd.f32 0.0, %v1031
      %1033 = vmatmul.bf16.gmra.mxu0 %v1012
      %v1034 = vpop.f32.mrf.mxu0
      %v1035 = vadd.f32 0.0, %v1034
      %v1036 = vpop.f32.mrf.mxu0
      %v1037 = vadd.f32 0.0, %v1036
      %1038 = vdwg.mxu0
      %v1043 = vunpack.c.l.b16 %v925
      %v1044 = vunpack.c.l.b16 %v926
      %v1045 = vunpack.c.l.b16 %v927
      %v1046 = vunpack.c.l.b16 %v928
      %v1047 = vpack.c.b16 %v1044, %v1043
      %v1048 = vpack.c.b16 %v1046, %v1045
      %1049 = vrot.lane.b32.xlu0 %v1047, 64
      %v1050 = vpop.permute.xlu0 %1049
      %1051 = vrot.lane.b32.xlu0 %v1048, 64
      %v1052 = vpop.permute.xlu0 %1051
      %v1054 = vsel %vm1007, %v1047, 0
      %v1057 = vsel %vm1007, %v1048, 0
      %v1060 = vsel %vm1007, %v1050, 0
      %v1063 = vsel %vm1007, %v1052, 0
      %1065 = vmatpush.bf16.xpose.msra.mxu0 0
      %1066 = vmatpush.bf16.xpose.msra.mxu0 0
      %1067 = vmatpush.bf16.xpose.msra.mxu0 0
      %1068 = vmatpush.bf16.xpose.msra.mxu0 0
      %1069 = vmatpush.bf16.xpose.msra.mxu0 0
      %1070 = vmatpush.bf16.xpose.msra.mxu0 0
      %1071 = vmatpush.bf16.xpose.msra.mxu0 %v1063
      %1072 = vmatpush.bf16.xpose.msra.mxu0 %v1060
      %1073 = vmatmul.bf16.gmra.mxu0 %v1054
      %v1074 = vpop.f32.mrf.mxu0
      %v1075 = vadd.f32 0.0, %v1074
      %v1076 = vpop.f32.mrf.mxu0
      %v1077 = vadd.f32 0.0, %v1076
      %1078 = vmatmul.bf16.gmra.mxu0 %v1057
      %v1079 = vpop.f32.mrf.mxu0
      %v1080 = vadd.f32 0.0, %v1079
      %v1081 = vpop.f32.mrf.mxu0
      %v1082 = vadd.f32 0.0, %v1081
      %1083 = vdwg.mxu0
      %v1088 = vunpack.c.l.b16 %v929
      %v1089 = vunpack.c.l.b16 %v930
      %v1090 = vunpack.c.l.b16 %v931
      %v1091 = vunpack.c.l.b16 %v932
      %v1092 = vpack.c.b16 %v1089, %v1088
      %v1093 = vpack.c.b16 %v1091, %v1090
      %1094 = vrot.lane.b32.xlu0 %v1092, 64
      %v1095 = vpop.permute.xlu0 %1094
      %1096 = vrot.lane.b32.xlu0 %v1093, 64
      %v1097 = vpop.permute.xlu0 %1096
      %v1099 = vsel %vm1007, %v1092, 0
      %v1102 = vsel %vm1007, %v1093, 0
      %v1105 = vsel %vm1007, %v1095, 0
      %v1108 = vsel %vm1007, %v1097, 0
      %1110 = vmatpush.bf16.xpose.msra.mxu0 0
      %1111 = vmatpush.bf16.xpose.msra.mxu0 0
      %1112 = vmatpush.bf16.xpose.msra.mxu0 0
      %1113 = vmatpush.bf16.xpose.msra.mxu0 0
      %1114 = vmatpush.bf16.xpose.msra.mxu0 0
      %1115 = vmatpush.bf16.xpose.msra.mxu0 0
      %1116 = vmatpush.bf16.xpose.msra.mxu0 %v1108
      %1117 = vmatpush.bf16.xpose.msra.mxu0 %v1105
      %1118 = vmatmul.bf16.gmra.mxu0 %v1099
      %v1119 = vpop.f32.mrf.mxu0
      %v1120 = vadd.f32 0.0, %v1119
      %v1121 = vpop.f32.mrf.mxu0
      %v1122 = vadd.f32 0.0, %v1121
      %1123 = vmatmul.bf16.gmra.mxu0 %v1102
      %v1124 = vpop.f32.mrf.mxu0
      %v1125 = vadd.f32 0.0, %v1124
      %v1126 = vpop.f32.mrf.mxu0
      %v1127 = vadd.f32 0.0, %v1126
      %1128 = vdwg.mxu0
      %v1133 = vunpack.c.l.b16 %v933
      %v1134 = vunpack.c.l.b16 %v934
      %v1135 = vunpack.c.l.b16 %v935
      %v1136 = vunpack.c.l.b16 %v936
      %v1137 = vpack.c.b16 %v1134, %v1133
      %v1138 = vpack.c.b16 %v1136, %v1135
      %1139 = vrot.lane.b32.xlu0 %v1137, 64
      %v1140 = vpop.permute.xlu0 %1139
      %1141 = vrot.lane.b32.xlu0 %v1138, 64
      %v1142 = vpop.permute.xlu0 %1141
      %v1144 = vsel %vm1007, %v1137, 0
      %v1147 = vsel %vm1007, %v1138, 0
      %v1150 = vsel %vm1007, %v1140, 0
      %v1153 = vsel %vm1007, %v1142, 0
      %1155 = vmatpush.bf16.xpose.msra.mxu0 0
      %1156 = vmatpush.bf16.xpose.msra.mxu0 0
      %1157 = vmatpush.bf16.xpose.msra.mxu0 0
      %1158 = vmatpush.bf16.xpose.msra.mxu0 0
      %1159 = vmatpush.bf16.xpose.msra.mxu0 0
      %1160 = vmatpush.bf16.xpose.msra.mxu0 0
      %1161 = vmatpush.bf16.xpose.msra.mxu0 %v1153
      %1162 = vmatpush.bf16.xpose.msra.mxu0 %v1150
      %1163 = vmatmul.bf16.gmra.mxu0 %v1144
      %v1164 = vpop.f32.mrf.mxu0
      %v1165 = vadd.f32 0.0, %v1164
      %v1166 = vpop.f32.mrf.mxu0
      %v1167 = vadd.f32 0.0, %v1166
      %1168 = vmatmul.bf16.gmra.mxu0 %v1147
      %v1169 = vpop.f32.mrf.mxu0
      %v1170 = vadd.f32 0.0, %v1169
      %v1171 = vpop.f32.mrf.mxu0
      %v1172 = vadd.f32 0.0, %v1171
      %1173 = vdwg.mxu0
      %v1174 = vlaneseq
      %v1175 = vand.u32 %v1174, 127
      %vm1176 = vcmp.lt.s32.totalorder %v1175, 17
      %v1177 = vsel %vm1176, 1, 0
      %vm1178 = vcmp.eq.s32.totalorder %v1177, 1
      %v1179 = vsel %vm1178, %v1030, -1e+30
      %v1180 = vsel %vm1178, %v1032, -1e+30
      %v1181 = vsel %vm1178, %v1035, -1e+30
      %v1182 = vsel %vm1178, %v1037, -1e+30
      %v1183 = vsel %vm1178, %v1075, -1e+30
      %v1184 = vsel %vm1178, %v1077, -1e+30
      %v1185 = vsel %vm1178, %v1080, -1e+30
      %v1186 = vsel %vm1178, %v1082, -1e+30
      %v1187 = vsel %vm1178, %v1120, -1e+30
      %v1188 = vsel %vm1178, %v1122, -1e+30
      %v1189 = vsel %vm1178, %v1125, -1e+30
      %v1190 = vsel %vm1178, %v1127, -1e+30
      %v1191 = vsel %vm1178, %v1165, -1e+30
      %v1192 = vsel %vm1178, %v1167, -1e+30
      %v1193 = vsel %vm1178, %v1170, -1e+30
      %v1194 = vsel %vm1178, %v1172, -1e+30
      %vm1195 = vcmask 261120
      %v1196 = vsel %vm1195, %v1179, -inf
      %1197 = vmax.xlane.f32.xlu0 %v1196
      %v1198 = vpop.xlane.xlu0 %1197
      %v1199 = vsel %vm1195, %v1180, -inf
      %1200 = vmax.xlane.f32.xlu0 %v1199
      %v1201 = vpop.xlane.xlu0 %1200
      %v1202 = vsel %vm1195, %v1181, -inf
      %1203 = vmax.xlane.f32.xlu0 %v1202
      %v1204 = vpop.xlane.xlu0 %1203
      %v1205 = vsel %vm1195, %v1182, -inf
      %1206 = vmax.xlane.f32.xlu0 %v1205
      %v1207 = vpop.xlane.xlu0 %1206
      %v1208 = vsel %vm1195, %v1183, -inf
      %1209 = vmax.xlane.f32.xlu0 %v1208
      %v1210 = vpop.xlane.xlu0 %1209
      %v1211 = vsel %vm1195, %v1184, -inf
      %1212 = vmax.xlane.f32.xlu0 %v1211
      %v1213 = vpop.xlane.xlu0 %1212
      %v1214 = vsel %vm1195, %v1185, -inf
      %1215 = vmax.xlane.f32.xlu0 %v1214
      %v1216 = vpop.xlane.xlu0 %1215
      %v1217 = vsel %vm1195, %v1186, -inf
      %1218 = vmax.xlane.f32.xlu0 %v1217
      %v1219 = vpop.xlane.xlu0 %1218
      %v1220 = vsel %vm1195, %v1187, -inf
      %1221 = vmax.xlane.f32.xlu0 %v1220
      %v1222 = vpop.xlane.xlu0 %1221
      %v1223 = vsel %vm1195, %v1188, -inf
      %1224 = vmax.xlane.f32.xlu0 %v1223
      %v1225 = vpop.xlane.xlu0 %1224
      %v1226 = vsel %vm1195, %v1189, -inf
      %1227 = vmax.xlane.f32.xlu0 %v1226
      %v1228 = vpop.xlane.xlu0 %1227
      %v1229 = vsel %vm1195, %v1190, -inf
      %1230 = vmax.xlane.f32.xlu0 %v1229
      %v1231 = vpop.xlane.xlu0 %1230
      %v1232 = vsel %vm1195, %v1191, -inf
      %1233 = vmax.xlane.f32.xlu0 %v1232
      %v1234 = vpop.xlane.xlu0 %1233
      %v1235 = vsel %vm1195, %v1192, -inf
      %1236 = vmax.xlane.f32.xlu0 %v1235
      %v1237 = vpop.xlane.xlu0 %1236
      %v1238 = vsel %vm1195, %v1193, -inf
      %1239 = vmax.xlane.f32.xlu0 %v1238
      %v1240 = vpop.xlane.xlu0 %1239
      %v1241 = vsel %vm1195, %v1194, -inf
      %1242 = vmax.xlane.f32.xlu0 %v1241
      %v1243 = vpop.xlane.xlu0 %1242
      %v1244 = vsub.f32 %v1179, %v1198
      %v1245 = vsub.f32 %v1180, %v1201
      %v1246 = vsub.f32 %v1181, %v1204
      %v1247 = vsub.f32 %v1182, %v1207
      %v1248 = vsub.f32 %v1183, %v1210
      %v1249 = vsub.f32 %v1184, %v1213
      %v1250 = vsub.f32 %v1185, %v1216
      %v1251 = vsub.f32 %v1186, %v1219
      %v1252 = vsub.f32 %v1187, %v1222
      %v1253 = vsub.f32 %v1188, %v1225
      %v1254 = vsub.f32 %v1189, %v1228
      %v1255 = vsub.f32 %v1190, %v1231
      %v1256 = vsub.f32 %v1191, %v1234
      %v1257 = vsub.f32 %v1192, %v1237
      %v1258 = vsub.f32 %v1193, %v1240
      %v1259 = vsub.f32 %v1194, %v1243
      %v1260 = vmul.f32 %v1244, 1.442695
      %v1261 = vpow.pop %v1260
      %v1262 = vmul.f32 %v1245, 1.442695
      %v1263 = vpow.pop %v1262
      %v1264 = vmul.f32 %v1246, 1.442695
      %v1265 = vpow.pop %v1264
      %v1266 = vmul.f32 %v1247, 1.442695
      %v1267 = vpow.pop %v1266
      %v1268 = vmul.f32 %v1248, 1.442695
      %v1269 = vpow.pop %v1268
      %v1270 = vmul.f32 %v1249, 1.442695
      %v1271 = vpow.pop %v1270
      %v1272 = vmul.f32 %v1250, 1.442695
      %v1273 = vpow.pop %v1272
      %v1274 = vmul.f32 %v1251, 1.442695
      %v1275 = vpow.pop %v1274
      %v1276 = vmul.f32 %v1252, 1.442695
      %v1277 = vpow.pop %v1276
      %v1278 = vmul.f32 %v1253, 1.442695
      %v1279 = vpow.pop %v1278
      %v1280 = vmul.f32 %v1254, 1.442695
      %v1281 = vpow.pop %v1280
      %v1282 = vmul.f32 %v1255, 1.442695
      %v1283 = vpow.pop %v1282
      %v1284 = vmul.f32 %v1256, 1.442695
      %v1285 = vpow.pop %v1284
      %v1286 = vmul.f32 %v1257, 1.442695
      %v1287 = vpow.pop %v1286
      %v1288 = vmul.f32 %v1258, 1.442695
      %v1289 = vpow.pop %v1288
      %v1290 = vmul.f32 %v1259, 1.442695
      %v1291 = vpow.pop %v1290
      %v1292 = vsel %vm1195, %v1261, 0.0
      %1293 = vadd.xlane.f32.xlu0 %v1292
      %v1294 = vpop.xlane.xlu0 %1293
      %v1295 = vsel %vm1195, %v1263, 0.0
      %1296 = vadd.xlane.f32.xlu0 %v1295
      %v1297 = vpop.xlane.xlu0 %1296
      %v1298 = vsel %vm1195, %v1265, 0.0
      %1299 = vadd.xlane.f32.xlu0 %v1298
      %v1300 = vpop.xlane.xlu0 %1299
      %v1301 = vsel %vm1195, %v1267, 0.0
      %1302 = vadd.xlane.f32.xlu0 %v1301
      %v1303 = vpop.xlane.xlu0 %1302
      %v1304 = vsel %vm1195, %v1269, 0.0
      %1305 = vadd.xlane.f32.xlu0 %v1304
      %v1306 = vpop.xlane.xlu0 %1305
      %v1307 = vsel %vm1195, %v1271, 0.0
      %1308 = vadd.xlane.f32.xlu0 %v1307
      %v1309 = vpop.xlane.xlu0 %1308
      %v1310 = vsel %vm1195, %v1273, 0.0
      %1311 = vadd.xlane.f32.xlu0 %v1310
      %v1312 = vpop.xlane.xlu0 %1311
      %v1313 = vsel %vm1195, %v1275, 0.0
      %1314 = vadd.xlane.f32.xlu0 %v1313
      %v1315 = vpop.xlane.xlu0 %1314
      %v1316 = vsel %vm1195, %v1277, 0.0
      %1317 = vadd.xlane.f32.xlu0 %v1316
      %v1318 = vpop.xlane.xlu0 %1317
      %v1319 = vsel %vm1195, %v1279, 0.0
      %1320 = vadd.xlane.f32.xlu0 %v1319
      %v1321 = vpop.xlane.xlu0 %1320
      %v1322 = vsel %vm1195, %v1281, 0.0
      %1323 = vadd.xlane.f32.xlu0 %v1322
      %v1324 = vpop.xlane.xlu0 %1323
      %v1325 = vsel %vm1195, %v1283, 0.0
      %1326 = vadd.xlane.f32.xlu0 %v1325
      %v1327 = vpop.xlane.xlu0 %1326
      %v1328 = vsel %vm1195, %v1285, 0.0
      %1329 = vadd.xlane.f32.xlu0 %v1328
      %v1330 = vpop.xlane.xlu0 %1329
      %v1331 = vsel %vm1195, %v1287, 0.0
      %1332 = vadd.xlane.f32.xlu0 %v1331
      %v1333 = vpop.xlane.xlu0 %1332
      %v1334 = vsel %vm1195, %v1289, 0.0
      %1335 = vadd.xlane.f32.xlu0 %v1334
      %v1336 = vpop.xlane.xlu0 %1335
      %v1337 = vsel %vm1195, %v1291, 0.0
      %1338 = vadd.xlane.f32.xlu0 %v1337
      %v1339 = vpop.xlane.xlu0 %1338
      %v1340 = vpack.c.bf16 %v1261, %v1261
      %v1341 = vpack.c.bf16 %v1263, %v1263
      %v1342 = vpack.c.bf16 %v1265, %v1265
      %v1343 = vpack.c.bf16 %v1267, %v1267
      %v1344 = vpack.c.bf16 %v1269, %v1269
      %v1345 = vpack.c.bf16 %v1271, %v1271
      %v1346 = vpack.c.bf16 %v1273, %v1273
      %v1347 = vpack.c.bf16 %v1275, %v1275
      %v1348 = vpack.c.bf16 %v1277, %v1277
      %v1349 = vpack.c.bf16 %v1279, %v1279
      %v1350 = vpack.c.bf16 %v1281, %v1281
      %v1351 = vpack.c.bf16 %v1283, %v1283
      %v1352 = vpack.c.bf16 %v1285, %v1285
      %v1353 = vpack.c.bf16 %v1287, %v1287
      %v1354 = vpack.c.bf16 %v1289, %v1289
      %v1355 = vpack.c.bf16 %v1291, %v1291
      %v1360 = vunpack.c.l.b16 %v1340
      %v1361 = vunpack.c.l.b16 %v1341
      %v1362 = vunpack.c.l.b16 %v1342
      %v1363 = vunpack.c.l.b16 %v1343
      %v1364 = vpack.c.b16 %v1361, %v1360
      %v1365 = vpack.c.b16 %v1363, %v1362
      %v1370 = vunpack.c.l.b16 %v977
      %v1371 = vunpack.c.l.b16 %v978
      %v1372 = vunpack.c.l.b16 %v979
      %v1373 = vunpack.c.l.b16 %v980
      %v1374 = vpack.c.b16 %v1371, %v1370
      %v1375 = vpack.c.b16 %v1373, %v1372
      %v1379 = vsel %vm1195, %v1364, 0
      %v1382 = vsel %vm1195, %v1365, 0
      %1384 = vmatpush.bf16.msra.mxu0 0
      %1385 = vmatpush.bf16.msra.mxu0 0
      %1386 = vmatpush.bf16.msra.mxu0 0
      %1387 = vmatpush.bf16.msra.mxu0 0
      %1388 = vmatpush.bf16.msra.mxu0 0
      %1389 = vmatpush.bf16.msra.mxu0 0
      %1390 = vmatpush.bf16.msra.mxu0 %v1375
      %1391 = vmatpush.bf16.msra.mxu0 %v1374
      %1392 = vmatmul.bf16.gmra.mxu0 %v1379
      %v1393 = vpop.f32.mrf.mxu0
      %v1394 = vadd.f32 0.0, %v1393
      %v1395 = vpop.f32.mrf.mxu0
      %v1396 = vadd.f32 0.0, %v1395
      %1397 = vmatmul.bf16.gmra.mxu0 %v1382
      %v1398 = vpop.f32.mrf.mxu0
      %v1399 = vadd.f32 0.0, %v1398
      %v1400 = vpop.f32.mrf.mxu0
      %v1401 = vadd.f32 0.0, %v1400
      %1402 = vdwg.mxu0
      %v1407 = vunpack.c.l.b16 %v1344
      %v1408 = vunpack.c.l.b16 %v1345
      %v1409 = vunpack.c.l.b16 %v1346
      %v1410 = vunpack.c.l.b16 %v1347
      %v1411 = vpack.c.b16 %v1408, %v1407
      %v1412 = vpack.c.b16 %v1410, %v1409
      %v1417 = vunpack.c.l.b16 %v981
      %v1418 = vunpack.c.l.b16 %v982
      %v1419 = vunpack.c.l.b16 %v983
      %v1420 = vunpack.c.l.b16 %v984
      %v1421 = vpack.c.b16 %v1418, %v1417
      %v1422 = vpack.c.b16 %v1420, %v1419
      %v1426 = vsel %vm1195, %v1411, 0
      %v1429 = vsel %vm1195, %v1412, 0
      %1431 = vmatpush.bf16.msra.mxu0 0
      %1432 = vmatpush.bf16.msra.mxu0 0
      %1433 = vmatpush.bf16.msra.mxu0 0
      %1434 = vmatpush.bf16.msra.mxu0 0
      %1435 = vmatpush.bf16.msra.mxu0 0
      %1436 = vmatpush.bf16.msra.mxu0 0
      %1437 = vmatpush.bf16.msra.mxu0 %v1422
      %1438 = vmatpush.bf16.msra.mxu0 %v1421
      %1439 = vmatmul.bf16.gmra.mxu0 %v1426
      %v1440 = vpop.f32.mrf.mxu0
      %v1441 = vadd.f32 0.0, %v1440
      %v1442 = vpop.f32.mrf.mxu0
      %v1443 = vadd.f32 0.0, %v1442
      %1444 = vmatmul.bf16.gmra.mxu0 %v1429
      %v1445 = vpop.f32.mrf.mxu0
      %v1446 = vadd.f32 0.0, %v1445
      %v1447 = vpop.f32.mrf.mxu0
      %v1448 = vadd.f32 0.0, %v1447
      %1449 = vdwg.mxu0
      %v1454 = vunpack.c.l.b16 %v1348
      %v1455 = vunpack.c.l.b16 %v1349
      %v1456 = vunpack.c.l.b16 %v1350
      %v1457 = vunpack.c.l.b16 %v1351
      %v1458 = vpack.c.b16 %v1455, %v1454
      %v1459 = vpack.c.b16 %v1457, %v1456
      %v1464 = vunpack.c.l.b16 %v985
      %v1465 = vunpack.c.l.b16 %v986
      %v1466 = vunpack.c.l.b16 %v987
      %v1467 = vunpack.c.l.b16 %v988
      %v1468 = vpack.c.b16 %v1465, %v1464
      %v1469 = vpack.c.b16 %v1467, %v1466
      %v1473 = vsel %vm1195, %v1458, 0
      %v1476 = vsel %vm1195, %v1459, 0
      %1478 = vmatpush.bf16.msra.mxu0 0
      %1479 = vmatpush.bf16.msra.mxu0 0
      %1480 = vmatpush.bf16.msra.mxu0 0
      %1481 = vmatpush.bf16.msra.mxu0 0
      %1482 = vmatpush.bf16.msra.mxu0 0
      %1483 = vmatpush.bf16.msra.mxu0 0
      %1484 = vmatpush.bf16.msra.mxu0 %v1469
      %1485 = vmatpush.bf16.msra.mxu0 %v1468
      %1486 = vmatmul.bf16.gmra.mxu0 %v1473
      %v1487 = vpop.f32.mrf.mxu0
      %v1488 = vadd.f32 0.0, %v1487
      %v1489 = vpop.f32.mrf.mxu0
      %v1490 = vadd.f32 0.0, %v1489
      %1491 = vmatmul.bf16.gmra.mxu0 %v1476
      %v1492 = vpop.f32.mrf.mxu0
      %v1493 = vadd.f32 0.0, %v1492
      %v1494 = vpop.f32.mrf.mxu0
      %v1495 = vadd.f32 0.0, %v1494
      %1496 = vdwg.mxu0
      %v1501 = vunpack.c.l.b16 %v1352
      %v1502 = vunpack.c.l.b16 %v1353
      %v1503 = vunpack.c.l.b16 %v1354
      %v1504 = vunpack.c.l.b16 %v1355
      %v1505 = vpack.c.b16 %v1502, %v1501
      %v1506 = vpack.c.b16 %v1504, %v1503
      %v1511 = vunpack.c.l.b16 %v989
      %v1512 = vunpack.c.l.b16 %v990
      %v1513 = vunpack.c.l.b16 %v991
      %v1514 = vunpack.c.l.b16 %v992
      %v1515 = vpack.c.b16 %v1512, %v1511
      %v1516 = vpack.c.b16 %v1514, %v1513
      %v1520 = vsel %vm1195, %v1505, 0
      %v1523 = vsel %vm1195, %v1506, 0
      %1525 = vmatpush.bf16.msra.mxu0 0
      %1526 = vmatpush.bf16.msra.mxu0 0
      %1527 = vmatpush.bf16.msra.mxu0 0
      %1528 = vmatpush.bf16.msra.mxu0 0
      %1529 = vmatpush.bf16.msra.mxu0 0
      %1530 = vmatpush.bf16.msra.mxu0 0
      %1531 = vmatpush.bf16.msra.mxu0 %v1516
      %1532 = vmatpush.bf16.msra.mxu0 %v1515
      %1533 = vmatmul.bf16.gmra.mxu0 %v1520
      %v1534 = vpop.f32.mrf.mxu0
      %v1535 = vadd.f32 0.0, %v1534
      %v1536 = vpop.f32.mrf.mxu0
      %v1537 = vadd.f32 0.0, %v1536
      %1538 = vmatmul.bf16.gmra.mxu0 %v1523
      %v1539 = vpop.f32.mrf.mxu0
      %v1540 = vadd.f32 0.0, %v1539
      %v1541 = vpop.f32.mrf.mxu0
      %v1542 = vadd.f32 0.0, %v1541
      %1543 = vdwg.mxu0
      %v1544 = vrcp.pop %v1294
      %v1545 = vmul.f32 %v1294, %v1544
      %v1546 = vsub.f32 1.0, %v1545
      %v1547 = vmul.f32 %v1544, %v1546
      %v1548 = vadd.f32 %v1544, %v1547
      %vm1549 = vweird.f32 %v1294
      %vm1550 = vweird.f32 %v1544
      %vm1551 = vmor %vm1549, %vm1550
      %v1552 = vsel %vm1551, %v1544, %v1548
      %v1553 = vand.u32 2147483647, %v1294
      %vm1554 = vcmp.eq.f32.partialorder %v1553, 8.507059e+37
      %v1555 = vand.u32 %v1294, 2147483648
      %v1556 = vor.u32 1.1754944e-38, %v1555
      %v1557 = vsel %vm1554, %v1556, %v1552
      %v1558 = vrcp.pop %v1297
      %v1559 = vmul.f32 %v1297, %v1558
      %v1560 = vsub.f32 1.0, %v1559
      %v1561 = vmul.f32 %v1558, %v1560
      %v1562 = vadd.f32 %v1558, %v1561
      %vm1563 = vweird.f32 %v1297
      %vm1564 = vweird.f32 %v1558
      %vm1565 = vmor %vm1563, %vm1564
      %v1566 = vsel %vm1565, %v1558, %v1562
      %v1567 = vand.u32 2147483647, %v1297
      %vm1568 = vcmp.eq.f32.partialorder %v1567, 8.507059e+37
      %v1569 = vand.u32 %v1297, 2147483648
      %v1570 = vor.u32 1.1754944e-38, %v1569
      %v1571 = vsel %vm1568, %v1570, %v1566
      %v1572 = vrcp.pop %v1300
      %v1573 = vmul.f32 %v1300, %v1572
      %v1574 = vsub.f32 1.0, %v1573
      %v1575 = vmul.f32 %v1572, %v1574
      %v1576 = vadd.f32 %v1572, %v1575
      %vm1577 = vweird.f32 %v1300
      %vm1578 = vweird.f32 %v1572
      %vm1579 = vmor %vm1577, %vm1578
      %v1580 = vsel %vm1579, %v1572, %v1576
      %v1581 = vand.u32 2147483647, %v1300
      %vm1582 = vcmp.eq.f32.partialorder %v1581, 8.507059e+37
      %v1583 = vand.u32 %v1300, 2147483648
      %v1584 = vor.u32 1.1754944e-38, %v1583
      %v1585 = vsel %vm1582, %v1584, %v1580
      %v1586 = vrcp.pop %v1303
      %v1587 = vmul.f32 %v1303, %v1586
      %v1588 = vsub.f32 1.0, %v1587
      %v1589 = vmul.f32 %v1586, %v1588
      %v1590 = vadd.f32 %v1586, %v1589
      %vm1591 = vweird.f32 %v1303
      %vm1592 = vweird.f32 %v1586
      %vm1593 = vmor %vm1591, %vm1592
      %v1594 = vsel %vm1593, %v1586, %v1590
      %v1595 = vand.u32 2147483647, %v1303
      %vm1596 = vcmp.eq.f32.partialorder %v1595, 8.507059e+37
      %v1597 = vand.u32 %v1303, 2147483648
      %v1598 = vor.u32 1.1754944e-38, %v1597
      %v1599 = vsel %vm1596, %v1598, %v1594
      %v1600 = vrcp.pop %v1306
      %v1601 = vmul.f32 %v1306, %v1600
      %v1602 = vsub.f32 1.0, %v1601
      %v1603 = vmul.f32 %v1600, %v1602
      %v1604 = vadd.f32 %v1600, %v1603
      %vm1605 = vweird.f32 %v1306
      %vm1606 = vweird.f32 %v1600
      %vm1607 = vmor %vm1605, %vm1606
      %v1608 = vsel %vm1607, %v1600, %v1604
      %v1609 = vand.u32 2147483647, %v1306
      %vm1610 = vcmp.eq.f32.partialorder %v1609, 8.507059e+37
      %v1611 = vand.u32 %v1306, 2147483648
      %v1612 = vor.u32 1.1754944e-38, %v1611
      %v1613 = vsel %vm1610, %v1612, %v1608
      %v1614 = vrcp.pop %v1309
      %v1615 = vmul.f32 %v1309, %v1614
      %v1616 = vsub.f32 1.0, %v1615
      %v1617 = vmul.f32 %v1614, %v1616
      %v1618 = vadd.f32 %v1614, %v1617
      %vm1619 = vweird.f32 %v1309
      %vm1620 = vweird.f32 %v1614
      %vm1621 = vmor %vm1619, %vm1620
      %v1622 = vsel %vm1621, %v1614, %v1618
      %v1623 = vand.u32 2147483647, %v1309
      %vm1624 = vcmp.eq.f32.partialorder %v1623, 8.507059e+37
      %v1625 = vand.u32 %v1309, 2147483648
      %v1626 = vor.u32 1.1754944e-38, %v1625
      %v1627 = vsel %vm1624, %v1626, %v1622
      %v1628 = vrcp.pop %v1312
      %v1629 = vmul.f32 %v1312, %v1628
      %v1630 = vsub.f32 1.0, %v1629
      %v1631 = vmul.f32 %v1628, %v1630
      %v1632 = vadd.f32 %v1628, %v1631
      %vm1633 = vweird.f32 %v1312
      %vm1634 = vweird.f32 %v1628
      %vm1635 = vmor %vm1633, %vm1634
      %v1636 = vsel %vm1635, %v1628, %v1632
      %v1637 = vand.u32 2147483647, %v1312
      %vm1638 = vcmp.eq.f32.partialorder %v1637, 8.507059e+37
      %v1639 = vand.u32 %v1312, 2147483648
      %v1640 = vor.u32 1.1754944e-38, %v1639
      %v1641 = vsel %vm1638, %v1640, %v1636
      %v1642 = vrcp.pop %v1315
      %v1643 = vmul.f32 %v1315, %v1642
      %v1644 = vsub.f32 1.0, %v1643
      %v1645 = vmul.f32 %v1642, %v1644
      %v1646 = vadd.f32 %v1642, %v1645
      %vm1647 = vweird.f32 %v1315
      %vm1648 = vweird.f32 %v1642
      %vm1649 = vmor %vm1647, %vm1648
      %v1650 = vsel %vm1649, %v1642, %v1646
      %v1651 = vand.u32 2147483647, %v1315
      %vm1652 = vcmp.eq.f32.partialorder %v1651, 8.507059e+37
      %v1653 = vand.u32 %v1315, 2147483648
      %v1654 = vor.u32 1.1754944e-38, %v1653
      %v1655 = vsel %vm1652, %v1654, %v1650
      %v1656 = vrcp.pop %v1318
      %v1657 = vmul.f32 %v1318, %v1656
      %v1658 = vsub.f32 1.0, %v1657
      %v1659 = vmul.f32 %v1656, %v1658
      %v1660 = vadd.f32 %v1656, %v1659
      %vm1661 = vweird.f32 %v1318
      %vm1662 = vweird.f32 %v1656
      %vm1663 = vmor %vm1661, %vm1662
      %v1664 = vsel %vm1663, %v1656, %v1660
      %v1665 = vand.u32 2147483647, %v1318
      %vm1666 = vcmp.eq.f32.partialorder %v1665, 8.507059e+37
      %v1667 = vand.u32 %v1318, 2147483648
      %v1668 = vor.u32 1.1754944e-38, %v1667
      %v1669 = vsel %vm1666, %v1668, %v1664
      %v1670 = vrcp.pop %v1321
      %v1671 = vmul.f32 %v1321, %v1670
      %v1672 = vsub.f32 1.0, %v1671
      %v1673 = vmul.f32 %v1670, %v1672
      %v1674 = vadd.f32 %v1670, %v1673
      %vm1675 = vweird.f32 %v1321
      %vm1676 = vweird.f32 %v1670
      %vm1677 = vmor %vm1675, %vm1676
      %v1678 = vsel %vm1677, %v1670, %v1674
      %v1679 = vand.u32 2147483647, %v1321
      %vm1680 = vcmp.eq.f32.partialorder %v1679, 8.507059e+37
      %v1681 = vand.u32 %v1321, 2147483648
      %v1682 = vor.u32 1.1754944e-38, %v1681
      %v1683 = vsel %vm1680, %v1682, %v1678
      %v1684 = vrcp.pop %v1324
      %v1685 = vmul.f32 %v1324, %v1684
      %v1686 = vsub.f32 1.0, %v1685
      %v1687 = vmul.f32 %v1684, %v1686
      %v1688 = vadd.f32 %v1684, %v1687
      %vm1689 = vweird.f32 %v1324
      %vm1690 = vweird.f32 %v1684
      %vm1691 = vmor %vm1689, %vm1690
      %v1692 = vsel %vm1691, %v1684, %v1688
      %v1693 = vand.u32 2147483647, %v1324
      %vm1694 = vcmp.eq.f32.partialorder %v1693, 8.507059e+37
      %v1695 = vand.u32 %v1324, 2147483648
      %v1696 = vor.u32 1.1754944e-38, %v1695
      %v1697 = vsel %vm1694, %v1696, %v1692
      %v1698 = vrcp.pop %v1327
      %v1699 = vmul.f32 %v1327, %v1698
      %v1700 = vsub.f32 1.0, %v1699
      %v1701 = vmul.f32 %v1698, %v1700
      %v1702 = vadd.f32 %v1698, %v1701
      %vm1703 = vweird.f32 %v1327
      %vm1704 = vweird.f32 %v1698
      %vm1705 = vmor %vm1703, %vm1704
      %v1706 = vsel %vm1705, %v1698, %v1702
      %v1707 = vand.u32 2147483647, %v1327
      %vm1708 = vcmp.eq.f32.partialorder %v1707, 8.507059e+37
      %v1709 = vand.u32 %v1327, 2147483648
      %v1710 = vor.u32 1.1754944e-38, %v1709
      %v1711 = vsel %vm1708, %v1710, %v1706
      %v1712 = vrcp.pop %v1330
      %v1713 = vmul.f32 %v1330, %v1712
      %v1714 = vsub.f32 1.0, %v1713
      %v1715 = vmul.f32 %v1712, %v1714
      %v1716 = vadd.f32 %v1712, %v1715
      %vm1717 = vweird.f32 %v1330
      %vm1718 = vweird.f32 %v1712
      %vm1719 = vmor %vm1717, %vm1718
      %v1720 = vsel %vm1719, %v1712, %v1716
      %v1721 = vand.u32 2147483647, %v1330
      %vm1722 = vcmp.eq.f32.partialorder %v1721, 8.507059e+37
      %v1723 = vand.u32 %v1330, 2147483648
      %v1724 = vor.u32 1.1754944e-38, %v1723
      %v1725 = vsel %vm1722, %v1724, %v1720
      %v1726 = vrcp.pop %v1333
      %v1727 = vmul.f32 %v1333, %v1726
      %v1728 = vsub.f32 1.0, %v1727
      %v1729 = vmul.f32 %v1726, %v1728
      %v1730 = vadd.f32 %v1726, %v1729
      %vm1731 = vweird.f32 %v1333
      %vm1732 = vweird.f32 %v1726
      %vm1733 = vmor %vm1731, %vm1732
      %v1734 = vsel %vm1733, %v1726, %v1730
      %v1735 = vand.u32 2147483647, %v1333
      %vm1736 = vcmp.eq.f32.partialorder %v1735, 8.507059e+37
      %v1737 = vand.u32 %v1333, 2147483648
      %v1738 = vor.u32 1.1754944e-38, %v1737
      %v1739 = vsel %vm1736, %v1738, %v1734
      %v1740 = vrcp.pop %v1336
      %v1741 = vmul.f32 %v1336, %v1740
      %v1742 = vsub.f32 1.0, %v1741
      %v1743 = vmul.f32 %v1740, %v1742
      %v1744 = vadd.f32 %v1740, %v1743
      %vm1745 = vweird.f32 %v1336
      %vm1746 = vweird.f32 %v1740
      %vm1747 = vmor %vm1745, %vm1746
      %v1748 = vsel %vm1747, %v1740, %v1744
      %v1749 = vand.u32 2147483647, %v1336
      %vm1750 = vcmp.eq.f32.partialorder %v1749, 8.507059e+37
      %v1751 = vand.u32 %v1336, 2147483648
      %v1752 = vor.u32 1.1754944e-38, %v1751
      %v1753 = vsel %vm1750, %v1752, %v1748
      %v1754 = vrcp.pop %v1339
      %v1755 = vmul.f32 %v1339, %v1754
      %v1756 = vsub.f32 1.0, %v1755
      %v1757 = vmul.f32 %v1754, %v1756
      %v1758 = vadd.f32 %v1754, %v1757
      %vm1759 = vweird.f32 %v1339
      %vm1760 = vweird.f32 %v1754
      %vm1761 = vmor %vm1759, %vm1760
      %v1762 = vsel %vm1761, %v1754, %v1758
      %v1763 = vand.u32 2147483647, %v1339
      %vm1764 = vcmp.eq.f32.partialorder %v1763, 8.507059e+37
      %v1765 = vand.u32 %v1339, 2147483648
      %v1766 = vor.u32 1.1754944e-38, %v1765
      %v1767 = vsel %vm1764, %v1766, %v1762
      %v1768 = vmul.f32 %v1394, %v1557
      %v1769 = vmul.f32 %v1396, %v1571
      %v1770 = vmul.f32 %v1399, %v1585
      %v1771 = vmul.f32 %v1401, %v1599
      %v1772 = vmul.f32 %v1441, %v1613
      %v1773 = vmul.f32 %v1443, %v1627
      %v1774 = vmul.f32 %v1446, %v1641
      %v1775 = vmul.f32 %v1448, %v1655
      %v1776 = vmul.f32 %v1488, %v1669
      %v1777 = vmul.f32 %v1490, %v1683
      %v1778 = vmul.f32 %v1493, %v1697
      %v1779 = vmul.f32 %v1495, %v1711
      %v1780 = vmul.f32 %v1535, %v1725
      %v1781 = vmul.f32 %v1537, %v1739
      %v1782 = vmul.f32 %v1540, %v1753
      %v1783 = vmul.f32 %v1542, %v1767
      %1788 = vrot.lane.b32.xlu0 %v1772, 16
      %v1789 = vpop.permute.xlu0 %1788
      %1790 = vrot.lane.b32.xlu0 %v1773, 16
      %v1791 = vpop.permute.xlu0 %1790
      %1792 = vrot.lane.b32.xlu0 %v1774, 16
      %v1793 = vpop.permute.xlu0 %1792
      %1794 = vrot.lane.b32.xlu0 %v1775, 16
      %v1795 = vpop.permute.xlu0 %1794
      %1804 = vrot.lane.b32.xlu0 %v1776, 32
      %v1805 = vpop.permute.xlu0 %1804
      %1806 = vrot.lane.b32.xlu0 %v1777, 32
      %v1807 = vpop.permute.xlu0 %1806
      %1808 = vrot.lane.b32.xlu0 %v1778, 32
      %v1809 = vpop.permute.xlu0 %1808
      %1810 = vrot.lane.b32.xlu0 %v1779, 32
      %v1811 = vpop.permute.xlu0 %1810
      %1820 = vrot.lane.b32.xlu0 %v1780, 48
      %v1821 = vpop.permute.xlu0 %1820
      %1822 = vrot.lane.b32.xlu0 %v1781, 48
      %v1823 = vpop.permute.xlu0 %1822
      %1824 = vrot.lane.b32.xlu0 %v1782, 48
      %v1825 = vpop.permute.xlu0 %1824
      %1826 = vrot.lane.b32.xlu0 %v1783, 48
      %v1827 = vpop.permute.xlu0 %1826
      %v1832 = vsel %vm1007, %v1768, %v1789
      %v1833 = vsel %vm1007, %v1769, %v1791
      %v1834 = vsel %vm1007, %v1770, %v1793
      %v1835 = vsel %vm1007, %v1771, %v1795
      %v1836 = vsel %vm1195, %v1832, %v1805
      %v1837 = vsel %vm1195, %v1833, %v1807
      %v1838 = vsel %vm1195, %v1834, %v1809
      %v1839 = vsel %vm1195, %v1835, %v1811
      %vm1840 = vcmask 392192
      %v1841 = vsel %vm1840, %v1836, %v1821
      %v1842 = vsel %vm1840, %v1837, %v1823
      %v1843 = vsel %vm1840, %v1838, %v1825
      %v1844 = vsel %vm1840, %v1839, %v1827
      %v1845 = vpack.c.bf16 %v1842, %v1841
      %v1846 = vpack.c.bf16 %v1844, %v1843
      %v1847 = vld [vmem:[%s619] sm:$0xf]
      %v1848 = vld [vmem:[%s619 + $0x4] sm:$0xf]
      %v1849 = vld [vmem:[%s619 + $0x8] sm:$0xf]
      %v1850 = vld [vmem:[%s619 + $0xc] sm:$0xf]
      %v1851 = vld [vmem:[%s619 + $0x10] sm:$0xf]
      %v1852 = vld [vmem:[%s619 + $0x14] sm:$0xf]
      %v1853 = vld [vmem:[%s619 + $0x18] sm:$0xf]
      %v1854 = vld [vmem:[%s619 + $0x1c] sm:$0xf]
      %v1855 = vld [vmem:[%s622] sm:$0x1]
      %v1857 = vperm.slane %v1855, 0
      %v1867 = vunpack.c.l.b16 %v1847
      %v1868 = vunpack.c.l.b16 %v1848
      %v1869 = vunpack.c.l.b16 %v1849
      %v1870 = vunpack.c.l.b16 %v1850
      %v1871 = vunpack.c.l.b16 %v1851
      %v1872 = vunpack.c.l.b16 %v1852
      %v1873 = vunpack.c.l.b16 %v1853
      %v1874 = vunpack.c.l.b16 %v1854
      %v1875 = vpack.c.b16 %v1868, %v1867
      %v1876 = vpack.c.b16 %v1870, %v1869
      %v1877 = vpack.c.b16 %v1872, %v1871
      %v1878 = vpack.c.b16 %v1874, %v1873
      %v1884 = vsel %vm671, %v1845, 0
      %v1887 = vsel %vm671, %v1846, 0
      %1889 = vmatpush.bf16.msra.mxu0 0
      %1890 = vmatpush.bf16.msra.mxu0 0
      %1891 = vmatpush.bf16.msra.mxu0 0
      %1892 = vmatpush.bf16.msra.mxu0 0
      %1893 = vmatpush.bf16.msra.mxu0 %v1878
      %1894 = vmatpush.bf16.msra.mxu0 %v1877
      %1895 = vmatpush.bf16.msra.mxu0 %v1876
      %1896 = vmatpush.bf16.msra.mxu0 %v1875
      %1897 = vmatmul.bf16.gmra.mxu0 %v1884
      %v1898 = vpop.f32.mrf.mxu0
      %v1899 = vadd.f32 %v1857, %v1898
      %v1900 = vpop.f32.mrf.mxu0
      %v1901 = vadd.f32 %v1857, %v1900
      %1902 = vmatmul.bf16.gmra.mxu0 %v1887
      %v1903 = vpop.f32.mrf.mxu0
      %v1904 = vadd.f32 %v1857, %v1903
      %v1905 = vpop.f32.mrf.mxu0
      %v1906 = vadd.f32 %v1857, %v1905
      %1907 = vdwg.mxu0
      %v1908 = vadd.f32 %v665, %v1899
      %v1909 = vadd.f32 %v666, %v1901
      %v1910 = vadd.f32 %v667, %v1904
      %v1911 = vadd.f32 %v668, %v1906
      %v1912 = vld [vmem:[%s625] sm:$0x1]
      %v1913 = vld [vmem:[%s628] sm:$0x1]
      %v1914 = vsel %vm671, %v1908, 0.0
      %1915 = vadd.xlane.f32.xlu0 %v1914
      %v1916 = vpop.xlane.xlu0 %1915
      %v1917 = vsel %vm671, %v1909, 0.0
      %1918 = vadd.xlane.f32.xlu0 %v1917
      %v1919 = vpop.xlane.xlu0 %1918
      %v1920 = vsel %vm671, %v1910, 0.0
      %1921 = vadd.xlane.f32.xlu0 %v1920
      %v1922 = vpop.xlane.xlu0 %1921
      %v1923 = vsel %vm671, %v1911, 0.0
      %1924 = vadd.xlane.f32.xlu0 %v1923
      %v1925 = vpop.xlane.xlu0 %1924
      %v1926 = vmul.f32 %v1916, %v690
      %v1927 = vmul.f32 %v1919, %v690
      %v1928 = vmul.f32 %v1922, %v690
      %v1929 = vmul.f32 %v1925, %v690
      %v1930 = vsub.f32 %v1908, %v1926
      %v1931 = vsub.f32 %v1909, %v1927
      %v1932 = vsub.f32 %v1910, %v1928
      %v1933 = vsub.f32 %v1911, %v1929
      %v1934 = vmul.f32 %v1930, %v1930
      %v1935 = vmul.f32 %v1931, %v1931
      %v1936 = vmul.f32 %v1932, %v1932
      %v1937 = vmul.f32 %v1933, %v1933
      %v1938 = vsel %vm671, %v1934, 0.0
      %1939 = vadd.xlane.f32.xlu0 %v1938
      %v1940 = vpop.xlane.xlu0 %1939
      %v1941 = vsel %vm671, %v1935, 0.0
      %1942 = vadd.xlane.f32.xlu0 %v1941
      %v1943 = vpop.xlane.xlu0 %1942
      %v1944 = vsel %vm671, %v1936, 0.0
      %1945 = vadd.xlane.f32.xlu0 %v1944
      %v1946 = vpop.xlane.xlu0 %1945
      %v1947 = vsel %vm671, %v1937, 0.0
      %1948 = vadd.xlane.f32.xlu0 %v1947
      %v1949 = vpop.xlane.xlu0 %1948
      %v1950 = vmul.f32 %v1940, %v690
      %v1951 = vmul.f32 %v1943, %v690
      %v1952 = vmul.f32 %v1946, %v690
      %v1953 = vmul.f32 %v1949, %v690
      %v1954 = vadd.f32 %v1950, 1e-05
      %v1955 = vadd.f32 %v1951, 1e-05
      %v1956 = vadd.f32 %v1952, 1e-05
      %v1957 = vadd.f32 %v1953, 1e-05
      %v1958 = vrsqrt.pop %v1954
      %v1959 = vmul.f32 %v1958, %v1954
      %v1960 = vmul.f32 %v1959, %v1958
      %v1961 = vmul.f32 0.5, %v1960
      %v1962 = vsub.f32 1.5, %v1961
      %v1963 = vmul.f32 %v1958, %v1962
      %vm1964 = vweird.f32 %v1954
      %vm1965 = vweird.f32 %v1958
      %vm1966 = vmor %vm1964, %vm1965
      %v1967 = vsel %vm1966, %v1958, %v1963
      %v1968 = vrsqrt.pop %v1955
      %v1969 = vmul.f32 %v1968, %v1955
      %v1970 = vmul.f32 %v1969, %v1968
      %v1971 = vmul.f32 0.5, %v1970
      %v1972 = vsub.f32 1.5, %v1971
      %v1973 = vmul.f32 %v1968, %v1972
      %vm1974 = vweird.f32 %v1955
      %vm1975 = vweird.f32 %v1968
      %vm1976 = vmor %vm1974, %vm1975
      %v1977 = vsel %vm1976, %v1968, %v1973
      %v1978 = vrsqrt.pop %v1956
      %v1979 = vmul.f32 %v1978, %v1956
      %v1980 = vmul.f32 %v1979, %v1978
      %v1981 = vmul.f32 0.5, %v1980
      %v1982 = vsub.f32 1.5, %v1981
      %v1983 = vmul.f32 %v1978, %v1982
      %vm1984 = vweird.f32 %v1956
      %vm1985 = vweird.f32 %v1978
      %vm1986 = vmor %vm1984, %vm1985
      %v1987 = vsel %vm1986, %v1978, %v1983
      %v1988 = vrsqrt.pop %v1957
      %v1989 = vmul.f32 %v1988, %v1957
      %v1990 = vmul.f32 %v1989, %v1988
      %v1991 = vmul.f32 0.5, %v1990
      %v1992 = vsub.f32 1.5, %v1991
      %v1993 = vmul.f32 %v1988, %v1992
      %vm1994 = vweird.f32 %v1957
      %vm1995 = vweird.f32 %v1988
      %vm1996 = vmor %vm1994, %vm1995
      %v1997 = vsel %vm1996, %v1988, %v1993
      %v1998 = vmul.f32 %v1930, %v1967
      %v1999 = vmul.f32 %v1931, %v1977
      %v2000 = vmul.f32 %v1932, %v1987
      %v2001 = vmul.f32 %v1933, %v1997
      %v2003 = vperm.slane %v1912, 0
      %v2005 = vmul.f32 %v1998, %v2003
      %v2006 = vmul.f32 %v1999, %v2003
      %v2007 = vmul.f32 %v2000, %v2003
      %v2008 = vmul.f32 %v2001, %v2003
      %v2010 = vperm.slane %v1913, 0
      %v2012 = vadd.f32 %v2005, %v2010
      %v2013 = vadd.f32 %v2006, %v2010
      %v2014 = vadd.f32 %v2007, %v2010
      %v2015 = vadd.f32 %v2008, %v2010
      %v2016 = vpack.c.bf16 %v2013, %v2012
      %v2017 = vpack.c.bf16 %v2015, %v2014
      %v2018 = vld [vmem:[%s633] sm:$0xff]
      %v2019 = vld [vmem:[%s633 + $0x8] sm:$0xff]
      %v2020 = vld [vmem:[%s633 + $0x10] sm:$0xff]
      %v2021 = vld [vmem:[%s633 + $0x18] sm:$0xff]
      %v2022 = vld [vmem:[%s633 + $0x20] sm:$0xff]
      %v2023 = vld [vmem:[%s633 + $0x28] sm:$0xff]
      %v2024 = vld [vmem:[%s633 + $0x30] sm:$0xff]
      %v2025 = vld [vmem:[%s633 + $0x38] sm:$0xff]
      %v2026 = vld [vmem:[%s637] sm:$0x3]
      %v2028 = vperm.slane %v2026, 0
      %v2029 = vperm.slane %v2026, 1
      %v2040 = vunpack.c.l.b16 %v2018
      %v2041 = vunpack.c.h.b16 %v2018
      %v2042 = vunpack.c.l.b16 %v2019
      %v2043 = vunpack.c.h.b16 %v2019
      %v2044 = vunpack.c.l.b16 %v2020
      %v2045 = vunpack.c.h.b16 %v2020
      %v2046 = vunpack.c.l.b16 %v2021
      %v2047 = vunpack.c.h.b16 %v2021
      %v2048 = vunpack.c.l.b16 %v2022
      %v2049 = vunpack.c.h.b16 %v2022
      %v2050 = vunpack.c.l.b16 %v2023
      %v2051 = vunpack.c.h.b16 %v2023
      %v2052 = vunpack.c.l.b16 %v2024
      %v2053 = vunpack.c.h.b16 %v2024
      %v2054 = vunpack.c.l.b16 %v2025
      %v2055 = vunpack.c.h.b16 %v2025
      %v2056 = vpack.c.b16 %v2042, %v2040
      %v2057 = vpack.c.b16 %v2043, %v2041
      %v2058 = vpack.c.b16 %v2046, %v2044
      %v2059 = vpack.c.b16 %v2047, %v2045
      %v2060 = vpack.c.b16 %v2050, %v2048
      %v2061 = vpack.c.b16 %v2051, %v2049
      %v2062 = vpack.c.b16 %v2054, %v2052
      %v2063 = vpack.c.b16 %v2055, %v2053
      %v2073 = vsel %vm671, %v2016, 0
      %v2076 = vsel %vm671, %v2017, 0
      %2078 = vmatpush.bf16.msra.mxu0 0
      %2079 = vmatpush.bf16.msra.mxu0 0
      %2080 = vmatpush.bf16.msra.mxu0 0
      %2081 = vmatpush.bf16.msra.mxu0 0
      %2082 = vmatpush.bf16.msra.mxu0 %v2062
      %2083 = vmatpush.bf16.msra.mxu0 %v2060
      %2084 = vmatpush.bf16.msra.mxu0 %v2058
      %2085 = vmatpush.bf16.msra.mxu0 %v2056
      %2086 = vmatmul.bf16.gmra.mxu0 %v2073
      %v2087 = vpop.f32.mrf.mxu0
      %v2088 = vadd.f32 %v2028, %v2087
      %v2089 = vpop.f32.mrf.mxu0
      %v2090 = vadd.f32 %v2028, %v2089
      %2091 = vmatmul.bf16.gmra.mxu0 %v2076
      %v2092 = vpop.f32.mrf.mxu0
      %v2093 = vadd.f32 %v2028, %v2092
      %v2094 = vpop.f32.mrf.mxu0
      %v2095 = vadd.f32 %v2028, %v2094
      %2096 = vdwg.mxu0
      %2097 = vmatpush.bf16.msra.mxu0 0
      %2098 = vmatpush.bf16.msra.mxu0 0
      %2099 = vmatpush.bf16.msra.mxu0 0
      %2100 = vmatpush.bf16.msra.mxu0 0
      %2101 = vmatpush.bf16.msra.mxu0 %v2063
      %2102 = vmatpush.bf16.msra.mxu0 %v2061
      %2103 = vmatpush.bf16.msra.mxu0 %v2059
      %2104 = vmatpush.bf16.msra.mxu0 %v2057
      %2105 = vmatmul.bf16.gmra.mxu0 %v2073
      %v2106 = vpop.f32.mrf.mxu0
      %v2107 = vadd.f32 %v2029, %v2106
      %v2108 = vpop.f32.mrf.mxu0
      %v2109 = vadd.f32 %v2029, %v2108
      %2110 = vmatmul.bf16.gmra.mxu0 %v2076
      %v2111 = vpop.f32.mrf.mxu0
      %v2112 = vadd.f32 %v2029, %v2111
      %v2113 = vpop.f32.mrf.mxu0
      %v2114 = vadd.f32 %v2029, %v2113
      %2115 = vdwg.mxu0
      %v2116 = vmul.f32 %v2088, 0.5
      %v2117 = vmul.f32 %v2107, 0.5
      %v2118 = vmul.f32 %v2090, 0.5
      %v2119 = vmul.f32 %v2109, 0.5
      %v2120 = vmul.f32 %v2093, 0.5
      %v2121 = vmul.f32 %v2112, 0.5
      %v2122 = vmul.f32 %v2095, 0.5
      %v2123 = vmul.f32 %v2114, 0.5
      %v2124 = vmul.f32 %v2088, 0.70710677
      %v2125 = vmul.f32 %v2107, 0.70710677
      %v2126 = vmul.f32 %v2090, 0.70710677
      %v2127 = vmul.f32 %v2109, 0.70710677
      %v2128 = vmul.f32 %v2093, 0.70710677
      %v2129 = vmul.f32 %v2112, 0.70710677
      %v2130 = vmul.f32 %v2095, 0.70710677
      %v2131 = vmul.f32 %v2114, 0.70710677
      %v2132 = vmul.f32 %v2124, %v2124
      %v2133 = vmin.f32 16.0, %v2132
      %v2134 = vmul.f32 %v2133, 2.1237322e-06
      %v2135 = vadd.f32 %v2134, 0.00028619796
      %v2136 = vmul.f32 %v2133, %v2135
      %v2137 = vadd.f32 %v2136, 0.0036580483
      %v2138 = vmul.f32 %v2133, %v2137
      %v2139 = vadd.f32 %v2138, 0.05243302
      %v2140 = vmul.f32 %v2133, %v2139
      %v2141 = vadd.f32 %v2140, 0.18741608
      %v2142 = vmul.f32 %v2133, %v2141
      %v2143 = vadd.f32 %v2142, 1.1283791
      %v2144 = vmul.f32 %v2124, %v2143
      %v2145 = vmul.f32 %v2133, 3.8918573e-05
      %v2146 = vadd.f32 %v2145, 0.001143296
      %v2147 = vmul.f32 %v2133, %v2146
      %v2148 = vadd.f32 %v2147, 0.014752088
      %v2149 = vmul.f32 %v2133, %v2148
      %v2150 = vadd.f32 %v2149, 0.112945676
      %v2151 = vmul.f32 %v2133, %v2150
      %v2152 = vadd.f32 %v2151, 0.4994258
      %v2153 = vmul.f32 %v2133, %v2152
      %v2154 = vadd.f32 %v2153, 1.0
      %v2155 = vrcp.pop %v2154
      %v2156 = vmul.f32 %v2154, %v2155
      %v2157 = vsub.f32 1.0, %v2156
      %v2158 = vmul.f32 %v2155, %v2157
      %v2159 = vadd.f32 %v2155, %v2158
      %vm2160 = vweird.f32 %v2154
      %vm2161 = vweird.f32 %v2155
      %vm2162 = vmor %vm2160, %vm2161
      %v2163 = vsel %vm2162, %v2155, %v2159
      %v2164 = vand.u32 2147483647, %v2154
      %vm2165 = vcmp.eq.f32.partialorder %v2164, 8.507059e+37
      %v2166 = vand.u32 %v2154, 2147483648
      %v2167 = vor.u32 1.1754944e-38, %v2166
      %v2168 = vsel %vm2165, %v2167, %v2163
      %v2169 = vmul.f32 %v2144, %v2168
      %v2170 = vmin.f32 %v2169, 1.0
      %v2171 = vmax.f32 %v2170, -1.0
      %v2172 = vmul.f32 %v2125, %v2125
      %v2173 = vmin.f32 16.0, %v2172
      %v2174 = vmul.f32 %v2173, 2.1237322e-06
      %v2175 = vadd.f32 %v2174, 0.00028619796
      %v2176 = vmul.f32 %v2173, %v2175
      %v2177 = vadd.f32 %v2176, 0.0036580483
      %v2178 = vmul.f32 %v2173, %v2177
      %v2179 = vadd.f32 %v2178, 0.05243302
      %v2180 = vmul.f32 %v2173, %v2179
      %v2181 = vadd.f32 %v2180, 0.18741608
      %v2182 = vmul.f32 %v2173, %v2181
      %v2183 = vadd.f32 %v2182, 1.1283791
      %v2184 = vmul.f32 %v2125, %v2183
      %v2185 = vmul.f32 %v2173, 3.8918573e-05
      %v2186 = vadd.f32 %v2185, 0.001143296
      %v2187 = vmul.f32 %v2173, %v2186
      %v2188 = vadd.f32 %v2187, 0.014752088
      %v2189 = vmul.f32 %v2173, %v2188
      %v2190 = vadd.f32 %v2189, 0.112945676
      %v2191 = vmul.f32 %v2173, %v2190
      %v2192 = vadd.f32 %v2191, 0.4994258
      %v2193 = vmul.f32 %v2173, %v2192
      %v2194 = vadd.f32 %v2193, 1.0
      %v2195 = vrcp.pop %v2194
      %v2196 = vmul.f32 %v2194, %v2195
      %v2197 = vsub.f32 1.0, %v2196
      %v2198 = vmul.f32 %v2195, %v2197
      %v2199 = vadd.f32 %v2195, %v2198
      %vm2200 = vweird.f32 %v2194
      %vm2201 = vweird.f32 %v2195
      %vm2202 = vmor %vm2200, %vm2201
      %v2203 = vsel %vm2202, %v2195, %v2199
      %v2204 = vand.u32 2147483647, %v2194
      %vm2205 = vcmp.eq.f32.partialorder %v2204, 8.507059e+37
      %v2206 = vand.u32 %v2194, 2147483648
      %v2207 = vor.u32 1.1754944e-38, %v2206
      %v2208 = vsel %vm2205, %v2207, %v2203
      %v2209 = vmul.f32 %v2184, %v2208
      %v2210 = vmin.f32 %v2209, 1.0
      %v2211 = vmax.f32 %v2210, -1.0
      %v2212 = vmul.f32 %v2126, %v2126
      %v2213 = vmin.f32 16.0, %v2212
      %v2214 = vmul.f32 %v2213, 2.1237322e-06
      %v2215 = vadd.f32 %v2214, 0.00028619796
      %v2216 = vmul.f32 %v2213, %v2215
      %v2217 = vadd.f32 %v2216, 0.0036580483
      %v2218 = vmul.f32 %v2213, %v2217
      %v2219 = vadd.f32 %v2218, 0.05243302
      %v2220 = vmul.f32 %v2213, %v2219
      %v2221 = vadd.f32 %v2220, 0.18741608
      %v2222 = vmul.f32 %v2213, %v2221
      %v2223 = vadd.f32 %v2222, 1.1283791
      %v2224 = vmul.f32 %v2126, %v2223
      %v2225 = vmul.f32 %v2213, 3.8918573e-05
      %v2226 = vadd.f32 %v2225, 0.001143296
      %v2227 = vmul.f32 %v2213, %v2226
      %v2228 = vadd.f32 %v2227, 0.014752088
      %v2229 = vmul.f32 %v2213, %v2228
      %v2230 = vadd.f32 %v2229, 0.112945676
      %v2231 = vmul.f32 %v2213, %v2230
      %v2232 = vadd.f32 %v2231, 0.4994258
      %v2233 = vmul.f32 %v2213, %v2232
      %v2234 = vadd.f32 %v2233, 1.0
      %v2235 = vrcp.pop %v2234
      %v2236 = vmul.f32 %v2234, %v2235
      %v2237 = vsub.f32 1.0, %v2236
      %v2238 = vmul.f32 %v2235, %v2237
      %v2239 = vadd.f32 %v2235, %v2238
      %vm2240 = vweird.f32 %v2234
      %vm2241 = vweird.f32 %v2235
      %vm2242 = vmor %vm2240, %vm2241
      %v2243 = vsel %vm2242, %v2235, %v2239
      %v2244 = vand.u32 2147483647, %v2234
      %vm2245 = vcmp.eq.f32.partialorder %v2244, 8.507059e+37
      %v2246 = vand.u32 %v2234, 2147483648
      %v2247 = vor.u32 1.1754944e-38, %v2246
      %v2248 = vsel %vm2245, %v2247, %v2243
      %v2249 = vmul.f32 %v2224, %v2248
      %v2250 = vmin.f32 %v2249, 1.0
      %v2251 = vmax.f32 %v2250, -1.0
      %v2252 = vmul.f32 %v2127, %v2127
      %v2253 = vmin.f32 16.0, %v2252
      %v2254 = vmul.f32 %v2253, 2.1237322e-06
      %v2255 = vadd.f32 %v2254, 0.00028619796
      %v2256 = vmul.f32 %v2253, %v2255
      %v2257 = vadd.f32 %v2256, 0.0036580483
      %v2258 = vmul.f32 %v2253, %v2257
      %v2259 = vadd.f32 %v2258, 0.05243302
      %v2260 = vmul.f32 %v2253, %v2259
      %v2261 = vadd.f32 %v2260, 0.18741608
      %v2262 = vmul.f32 %v2253, %v2261
      %v2263 = vadd.f32 %v2262, 1.1283791
      %v2264 = vmul.f32 %v2127, %v2263
      %v2265 = vmul.f32 %v2253, 3.8918573e-05
      %v2266 = vadd.f32 %v2265, 0.001143296
      %v2267 = vmul.f32 %v2253, %v2266
      %v2268 = vadd.f32 %v2267, 0.014752088
      %v2269 = vmul.f32 %v2253, %v2268
      %v2270 = vadd.f32 %v2269, 0.112945676
      %v2271 = vmul.f32 %v2253, %v2270
      %v2272 = vadd.f32 %v2271, 0.4994258
      %v2273 = vmul.f32 %v2253, %v2272
      %v2274 = vadd.f32 %v2273, 1.0
      %v2275 = vrcp.pop %v2274
      %v2276 = vmul.f32 %v2274, %v2275
      %v2277 = vsub.f32 1.0, %v2276
      %v2278 = vmul.f32 %v2275, %v2277
      %v2279 = vadd.f32 %v2275, %v2278
      %vm2280 = vweird.f32 %v2274
      %vm2281 = vweird.f32 %v2275
      %vm2282 = vmor %vm2280, %vm2281
      %v2283 = vsel %vm2282, %v2275, %v2279
      %v2284 = vand.u32 2147483647, %v2274
      %vm2285 = vcmp.eq.f32.partialorder %v2284, 8.507059e+37
      %v2286 = vand.u32 %v2274, 2147483648
      %v2287 = vor.u32 1.1754944e-38, %v2286
      %v2288 = vsel %vm2285, %v2287, %v2283
      %v2289 = vmul.f32 %v2264, %v2288
      %v2290 = vmin.f32 %v2289, 1.0
      %v2291 = vmax.f32 %v2290, -1.0
      %v2292 = vmul.f32 %v2128, %v2128
      %v2293 = vmin.f32 16.0, %v2292
      %v2294 = vmul.f32 %v2293, 2.1237322e-06
      %v2295 = vadd.f32 %v2294, 0.00028619796
      %v2296 = vmul.f32 %v2293, %v2295
      %v2297 = vadd.f32 %v2296, 0.0036580483
      %v2298 = vmul.f32 %v2293, %v2297
      %v2299 = vadd.f32 %v2298, 0.05243302
      %v2300 = vmul.f32 %v2293, %v2299
      %v2301 = vadd.f32 %v2300, 0.18741608
      %v2302 = vmul.f32 %v2293, %v2301
      %v2303 = vadd.f32 %v2302, 1.1283791
      %v2304 = vmul.f32 %v2128, %v2303
      %v2305 = vmul.f32 %v2293, 3.8918573e-05
      %v2306 = vadd.f32 %v2305, 0.001143296
      %v2307 = vmul.f32 %v2293, %v2306
      %v2308 = vadd.f32 %v2307, 0.014752088
      %v2309 = vmul.f32 %v2293, %v2308
      %v2310 = vadd.f32 %v2309, 0.112945676
      %v2311 = vmul.f32 %v2293, %v2310
      %v2312 = vadd.f32 %v2311, 0.4994258
      %v2313 = vmul.f32 %v2293, %v2312
      %v2314 = vadd.f32 %v2313, 1.0
      %v2315 = vrcp.pop %v2314
      %v2316 = vmul.f32 %v2314, %v2315
      %v2317 = vsub.f32 1.0, %v2316
      %v2318 = vmul.f32 %v2315, %v2317
      %v2319 = vadd.f32 %v2315, %v2318
      %vm2320 = vweird.f32 %v2314
      %vm2321 = vweird.f32 %v2315
      %vm2322 = vmor %vm2320, %vm2321
      %v2323 = vsel %vm2322, %v2315, %v2319
      %v2324 = vand.u32 2147483647, %v2314
      %vm2325 = vcmp.eq.f32.partialorder %v2324, 8.507059e+37
      %v2326 = vand.u32 %v2314, 2147483648
      %v2327 = vor.u32 1.1754944e-38, %v2326
      %v2328 = vsel %vm2325, %v2327, %v2323
      %v2329 = vmul.f32 %v2304, %v2328
      %v2330 = vmin.f32 %v2329, 1.0
      %v2331 = vmax.f32 %v2330, -1.0
      %v2332 = vmul.f32 %v2129, %v2129
      %v2333 = vmin.f32 16.0, %v2332
      %v2334 = vmul.f32 %v2333, 2.1237322e-06
      %v2335 = vadd.f32 %v2334, 0.00028619796
      %v2336 = vmul.f32 %v2333, %v2335
      %v2337 = vadd.f32 %v2336, 0.0036580483
      %v2338 = vmul.f32 %v2333, %v2337
      %v2339 = vadd.f32 %v2338, 0.05243302
      %v2340 = vmul.f32 %v2333, %v2339
      %v2341 = vadd.f32 %v2340, 0.18741608
      %v2342 = vmul.f32 %v2333, %v2341
      %v2343 = vadd.f32 %v2342, 1.1283791
      %v2344 = vmul.f32 %v2129, %v2343
      %v2345 = vmul.f32 %v2333, 3.8918573e-05
      %v2346 = vadd.f32 %v2345, 0.001143296
      %v2347 = vmul.f32 %v2333, %v2346
      %v2348 = vadd.f32 %v2347, 0.014752088
      %v2349 = vmul.f32 %v2333, %v2348
      %v2350 = vadd.f32 %v2349, 0.112945676
      %v2351 = vmul.f32 %v2333, %v2350
      %v2352 = vadd.f32 %v2351, 0.4994258
      %v2353 = vmul.f32 %v2333, %v2352
      %v2354 = vadd.f32 %v2353, 1.0
      %v2355 = vrcp.pop %v2354
      %v2356 = vmul.f32 %v2354, %v2355
      %v2357 = vsub.f32 1.0, %v2356
      %v2358 = vmul.f32 %v2355, %v2357
      %v2359 = vadd.f32 %v2355, %v2358
      %vm2360 = vweird.f32 %v2354
      %vm2361 = vweird.f32 %v2355
      %vm2362 = vmor %vm2360, %vm2361
      %v2363 = vsel %vm2362, %v2355, %v2359
      %v2364 = vand.u32 2147483647, %v2354
      %vm2365 = vcmp.eq.f32.partialorder %v2364, 8.507059e+37
      %v2366 = vand.u32 %v2354, 2147483648
      %v2367 = vor.u32 1.1754944e-38, %v2366
      %v2368 = vsel %vm2365, %v2367, %v2363
      %v2369 = vmul.f32 %v2344, %v2368
      %v2370 = vmin.f32 %v2369, 1.0
      %v2371 = vmax.f32 %v2370, -1.0
      %v2372 = vmul.f32 %v2130, %v2130
      %v2373 = vmin.f32 16.0, %v2372
      %v2374 = vmul.f32 %v2373, 2.1237322e-06
      %v2375 = vadd.f32 %v2374, 0.00028619796
      %v2376 = vmul.f32 %v2373, %v2375
      %v2377 = vadd.f32 %v2376, 0.0036580483
      %v2378 = vmul.f32 %v2373, %v2377
      %v2379 = vadd.f32 %v2378, 0.05243302
      %v2380 = vmul.f32 %v2373, %v2379
      %v2381 = vadd.f32 %v2380, 0.18741608
      %v2382 = vmul.f32 %v2373, %v2381
      %v2383 = vadd.f32 %v2382, 1.1283791
      %v2384 = vmul.f32 %v2130, %v2383
      %v2385 = vmul.f32 %v2373, 3.8918573e-05
      %v2386 = vadd.f32 %v2385, 0.001143296
      %v2387 = vmul.f32 %v2373, %v2386
      %v2388 = vadd.f32 %v2387, 0.014752088
      %v2389 = vmul.f32 %v2373, %v2388
      %v2390 = vadd.f32 %v2389, 0.112945676
      %v2391 = vmul.f32 %v2373, %v2390
      %v2392 = vadd.f32 %v2391, 0.4994258
      %v2393 = vmul.f32 %v2373, %v2392
      %v2394 = vadd.f32 %v2393, 1.0
      %v2395 = vrcp.pop %v2394
      %v2396 = vmul.f32 %v2394, %v2395
      %v2397 = vsub.f32 1.0, %v2396
      %v2398 = vmul.f32 %v2395, %v2397
      %v2399 = vadd.f32 %v2395, %v2398
      %vm2400 = vweird.f32 %v2394
      %vm2401 = vweird.f32 %v2395
      %vm2402 = vmor %vm2400, %vm2401
      %v2403 = vsel %vm2402, %v2395, %v2399
      %v2404 = vand.u32 2147483647, %v2394
      %vm2405 = vcmp.eq.f32.partialorder %v2404, 8.507059e+37
      %v2406 = vand.u32 %v2394, 2147483648
      %v2407 = vor.u32 1.1754944e-38, %v2406
      %v2408 = vsel %vm2405, %v2407, %v2403
      %v2409 = vmul.f32 %v2384, %v2408
      %v2410 = vmin.f32 %v2409, 1.0
      %v2411 = vmax.f32 %v2410, -1.0
      %v2412 = vmul.f32 %v2131, %v2131
      %v2413 = vmin.f32 16.0, %v2412
      %v2414 = vmul.f32 %v2413, 2.1237322e-06
      %v2415 = vadd.f32 %v2414, 0.00028619796
      %v2416 = vmul.f32 %v2413, %v2415
      %v2417 = vadd.f32 %v2416, 0.0036580483
      %v2418 = vmul.f32 %v2413, %v2417
      %v2419 = vadd.f32 %v2418, 0.05243302
      %v2420 = vmul.f32 %v2413, %v2419
      %v2421 = vadd.f32 %v2420, 0.18741608
      %v2422 = vmul.f32 %v2413, %v2421
      %v2423 = vadd.f32 %v2422, 1.1283791
      %v2424 = vmul.f32 %v2131, %v2423
      %v2425 = vmul.f32 %v2413, 3.8918573e-05
      %v2426 = vadd.f32 %v2425, 0.001143296
      %v2427 = vmul.f32 %v2413, %v2426
      %v2428 = vadd.f32 %v2427, 0.014752088
      %v2429 = vmul.f32 %v2413, %v2428
      %v2430 = vadd.f32 %v2429, 0.112945676
      %v2431 = vmul.f32 %v2413, %v2430
      %v2432 = vadd.f32 %v2431, 0.4994258
      %v2433 = vmul.f32 %v2413, %v2432
      %v2434 = vadd.f32 %v2433, 1.0
      %v2435 = vrcp.pop %v2434
      %v2436 = vmul.f32 %v2434, %v2435
      %v2437 = vsub.f32 1.0, %v2436
      %v2438 = vmul.f32 %v2435, %v2437
      %v2439 = vadd.f32 %v2435, %v2438
      %vm2440 = vweird.f32 %v2434
      %vm2441 = vweird.f32 %v2435
      %vm2442 = vmor %vm2440, %vm2441
      %v2443 = vsel %vm2442, %v2435, %v2439
      %v2444 = vand.u32 2147483647, %v2434
      %vm2445 = vcmp.eq.f32.partialorder %v2444, 8.507059e+37
      %v2446 = vand.u32 %v2434, 2147483648
      %v2447 = vor.u32 1.1754944e-38, %v2446
      %v2448 = vsel %vm2445, %v2447, %v2443
      %v2449 = vmul.f32 %v2424, %v2448
      %v2450 = vmin.f32 %v2449, 1.0
      %v2451 = vmax.f32 %v2450, -1.0
      %v2452 = vadd.f32 %v2171, 1.0
      %v2453 = vadd.f32 %v2211, 1.0
      %v2454 = vadd.f32 %v2251, 1.0
      %v2455 = vadd.f32 %v2291, 1.0
      %v2456 = vadd.f32 %v2331, 1.0
      %v2457 = vadd.f32 %v2371, 1.0
      %v2458 = vadd.f32 %v2411, 1.0
      %v2459 = vadd.f32 %v2451, 1.0
      %v2460 = vmul.f32 %v2116, %v2452
      %v2461 = vmul.f32 %v2117, %v2453
      %v2462 = vmul.f32 %v2118, %v2454
      %v2463 = vmul.f32 %v2119, %v2455
      %v2464 = vmul.f32 %v2120, %v2456
      %v2465 = vmul.f32 %v2121, %v2457
      %v2466 = vmul.f32 %v2122, %v2458
      %v2467 = vmul.f32 %v2123, %v2459
      %v2468 = vpack.c.bf16 %v2462, %v2460
      %v2469 = vpack.c.bf16 %v2463, %v2461
      %v2470 = vpack.c.bf16 %v2466, %v2464
      %v2471 = vpack.c.bf16 %v2467, %v2465
      %v2472 = vld [vmem:[%s642] sm:$0xf]
      %v2473 = vld [vmem:[%s642 + $0x4] sm:$0xf]
      %v2474 = vld [vmem:[%s642 + $0x8] sm:$0xf]
      %v2475 = vld [vmem:[%s642 + $0xc] sm:$0xf]
      %v2476 = vld [vmem:[%s642 + $0x10] sm:$0xf]
      %v2477 = vld [vmem:[%s642 + $0x14] sm:$0xf]
      %v2478 = vld [vmem:[%s642 + $0x18] sm:$0xf]
      %v2479 = vld [vmem:[%s642 + $0x1c] sm:$0xf]
      %v2480 = vld [vmem:[%s642 + $0x20] sm:$0xf]
      %v2481 = vld [vmem:[%s642 + $0x24] sm:$0xf]
      %v2482 = vld [vmem:[%s642 + $0x28] sm:$0xf]
      %v2483 = vld [vmem:[%s642 + $0x2c] sm:$0xf]
      %v2484 = vld [vmem:[%s642 + $0x30] sm:$0xf]
      %v2485 = vld [vmem:[%s642 + $0x34] sm:$0xf]
      %v2486 = vld [vmem:[%s642 + $0x38] sm:$0xf]
      %v2487 = vld [vmem:[%s642 + $0x3c] sm:$0xf]
      %v2488 = vld [vmem:[%s642 + $0x40] sm:$0xf]
      %v2489 = vld [vmem:[%s642 + $0x44] sm:$0xf]
      %v2490 = vld [vmem:[%s642 + $0x48] sm:$0xf]
      %v2491 = vld [vmem:[%s642 + $0x4c] sm:$0xf]
      %v2492 = vld [vmem:[%s642 + $0x50] sm:$0xf]
      %v2493 = vld [vmem:[%s642 + $0x54] sm:$0xf]
      %v2494 = vld [vmem:[%s642 + $0x58] sm:$0xf]
      %v2495 = vld [vmem:[%s642 + $0x5c] sm:$0xf]
      %v2496 = vld [vmem:[%s642 + $0x60] sm:$0xf]
      %v2497 = vld [vmem:[%s642 + $0x64] sm:$0xf]
      %v2498 = vld [vmem:[%s642 + $0x68] sm:$0xf]
      %v2499 = vld [vmem:[%s642 + $0x6c] sm:$0xf]
      %v2500 = vld [vmem:[%s642 + $0x70] sm:$0xf]
      %v2501 = vld [vmem:[%s642 + $0x74] sm:$0xf]
      %v2502 = vld [vmem:[%s642 + $0x78] sm:$0xf]
      %v2503 = vld [vmem:[%s642 + $0x7c] sm:$0xf]
      %v2504 = vld [vmem:[%s645] sm:$0x1]
      %v2506 = vperm.slane %v2504, 0
      %v2540 = vunpack.c.l.b16 %v2472
      %v2541 = vunpack.c.l.b16 %v2473
      %v2542 = vunpack.c.l.b16 %v2474
      %v2543 = vunpack.c.l.b16 %v2475
      %v2544 = vunpack.c.l.b16 %v2476
      %v2545 = vunpack.c.l.b16 %v2477
      %v2546 = vunpack.c.l.b16 %v2478
      %v2547 = vunpack.c.l.b16 %v2479
      %v2548 = vunpack.c.l.b16 %v2480
      %v2549 = vunpack.c.l.b16 %v2481
      %v2550 = vunpack.c.l.b16 %v2482
      %v2551 = vunpack.c.l.b16 %v2483
      %v2552 = vunpack.c.l.b16 %v2484
      %v2553 = vunpack.c.l.b16 %v2485
      %v2554 = vunpack.c.l.b16 %v2486
      %v2555 = vunpack.c.l.b16 %v2487
      %v2556 = vunpack.c.l.b16 %v2488
      %v2557 = vunpack.c.l.b16 %v2489
      %v2558 = vunpack.c.l.b16 %v2490
      %v2559 = vunpack.c.l.b16 %v2491
      %v2560 = vunpack.c.l.b16 %v2492
      %v2561 = vunpack.c.l.b16 %v2493
      %v2562 = vunpack.c.l.b16 %v2494
      %v2563 = vunpack.c.l.b16 %v2495
      %v2564 = vunpack.c.l.b16 %v2496
      %v2565 = vunpack.c.l.b16 %v2497
      %v2566 = vunpack.c.l.b16 %v2498
      %v2567 = vunpack.c.l.b16 %v2499
      %v2568 = vunpack.c.l.b16 %v2500
      %v2569 = vunpack.c.l.b16 %v2501
      %v2570 = vunpack.c.l.b16 %v2502
      %v2571 = vunpack.c.l.b16 %v2503
      %v2572 = vpack.c.b16 %v2541, %v2540
      %v2573 = vpack.c.b16 %v2543, %v2542
      %v2574 = vpack.c.b16 %v2545, %v2544
      %v2575 = vpack.c.b16 %v2547, %v2546
      %v2576 = vpack.c.b16 %v2549, %v2548
      %v2577 = vpack.c.b16 %v2551, %v2550
      %v2578 = vpack.c.b16 %v2553, %v2552
      %v2579 = vpack.c.b16 %v2555, %v2554
      %v2580 = vpack.c.b16 %v2557, %v2556
      %v2581 = vpack.c.b16 %v2559, %v2558
      %v2582 = vpack.c.b16 %v2561, %v2560
      %v2583 = vpack.c.b16 %v2563, %v2562
      %v2584 = vpack.c.b16 %v2565, %v2564
      %v2585 = vpack.c.b16 %v2567, %v2566
      %v2586 = vpack.c.b16 %v2569, %v2568
      %v2587 = vpack.c.b16 %v2571, %v2570
      %2604 = vmatpush.bf16.msra.mxu0 %v2579
      %2605 = vmatpush.bf16.msra.mxu0 %v2578
      %2606 = vmatpush.bf16.msra.mxu0 %v2577
      %2607 = vmatpush.bf16.msra.mxu0 %v2576
      %2608 = vmatpush.bf16.msra.mxu0 %v2575
      %2609 = vmatpush.bf16.msra.mxu0 %v2574
      %2610 = vmatpush.bf16.msra.mxu0 %v2573
      %2611 = vmatpush.bf16.msra.mxu0 %v2572
      %2612 = vmatmul.bf16.gmra.mxu0 %v2468
      %v2613 = vpop.f32.mrf.mxu0
      %v2614 = vadd.f32 %v2506, %v2613
      %v2615 = vpop.f32.mrf.mxu0
      %v2616 = vadd.f32 %v2506, %v2615
      %2617 = vmatmul.bf16.gmra.mxu0 %v2470
      %v2618 = vpop.f32.mrf.mxu0
      %v2619 = vadd.f32 %v2506, %v2618
      %v2620 = vpop.f32.mrf.mxu0
      %v2621 = vadd.f32 %v2506, %v2620
      %2622 = vdwg.mxu0
      %2623 = vmatpush.bf16.msra.mxu0 %v2587
      %2624 = vmatpush.bf16.msra.mxu0 %v2586
      %2625 = vmatpush.bf16.msra.mxu0 %v2585
      %2626 = vmatpush.bf16.msra.mxu0 %v2584
      %2627 = vmatpush.bf16.msra.mxu0 %v2583
      %2628 = vmatpush.bf16.msra.mxu0 %v2582
      %2629 = vmatpush.bf16.msra.mxu0 %v2581
      %2630 = vmatpush.bf16.msra.mxu0 %v2580
      %2631 = vmatmul.bf16.gmra.mxu0 %v2469
      %v2632 = vpop.f32.mrf.mxu0
      %v2633 = vadd.f32 %v2614, %v2632
      %v2634 = vpop.f32.mrf.mxu0
      %v2635 = vadd.f32 %v2616, %v2634
      %2636 = vmatmul.bf16.gmra.mxu0 %v2471
      %v2637 = vpop.f32.mrf.mxu0
      %v2638 = vadd.f32 %v2619, %v2637
      %v2639 = vpop.f32.mrf.mxu0
      %v2640 = vadd.f32 %v2621, %v2639
      %2641 = vdwg.mxu0
      %v2642 = vadd.f32 %v1908, %v2633
      %v2643 = vadd.f32 %v1909, %v2635
      %v2644 = vadd.f32 %v1910, %v2638
      %v2645 = vadd.f32 %v1911, %v2640
      %2646 = vst.msk [vmem:[%s650] sm:$0xff] %vm671, %v2642
      %2647 = vst.msk [vmem:[%s650 + $0x8] sm:$0xff] %vm671, %v2643
      %2648 = vst.msk [vmem:[%s650 + $0x10] sm:$0xff] %vm671, %v2644
      %2649 = vst.msk [vmem:[%s650 + $0x18] sm:$0xff] %vm671, %v2645
      %p2650 = scmp.lt.s32.totalorder %s28, 1
      %s2651 = scalar_select %p2650, %s28, 1
      %s2652 = smul.addr %s2651, 4
      %s2653 = smul.addr %s2652, 8
      %s2654 = scalar_lea.vmem %s13, %s2653
      // Predicated region
      $region77: #{frozen_openclip_image_embedder_v2.5} parent=71 // pred_check
        %p2655 = pneg %p392
      $region78: #{frozen_openclip_image_embedder_v2.5} parent=71 // pred_check_branch
        %2657 = sbr.rel (%p2655) target = $region80
      $region79: #{frozen_openclip_image_embedder_v2.5} parent=71 // pred_region
        _
      $region80: #{frozen_openclip_image_embedder_v2.5} parent=71 // pred_fallthru
        _
    $region72: #{frozen_openclip_image_embedder_v2.5} parent=5 // pred_fallthru
      _
    %p2658 = scmp.le.s32.totalorder 2, %s19
    // Predicated region
    $region81: #{frozen_openclip_image_embedder_v2.5} parent=5 // pred_check
      %p2659 = pneg %p2658
    $region82: #{frozen_openclip_image_embedder_v2.5} parent=5 // pred_check_branch
      %2661 = sbr.rel (%p2659) target = $region84
    $region83: #{frozen_openclip_image_embedder_v2.5} parent=5 // pred_region
      %s2662 = ssub.s32 %s19, 2
      // Predicated region
      $region85: #{frozen_openclip_image_embedder_v2.5} parent=83 // pred_check
        %p2663 = pneg %p398
      $region86: #{frozen_openclip_image_embedder_v2.5} parent=83 // pred_check_branch
        %2665 = sbr.rel (%p2663) target = $region88
      $region87: #{frozen_openclip_image_embedder_v2.5} parent=83 // pred_region
        %p2666 = scmp.lt.s32.totalorder %s30, 1
        %s2667 = scalar_select %p2666, %s30, 1
        %s2668 = smul.addr %s2667, 4
        %s2669 = smul.addr %s2668, 8
        %s2670 = scalar_lea.vmem %s13, %s2669
      $region88: #{frozen_openclip_image_embedder_v2.5} parent=83 // pred_fallthru
        _
    $region84: #{frozen_openclip_image_embedder_v2.5} parent=5 // pred_fallthru
      _
  $region6: #{frozen_openclip_image_embedder_v2.5} parent=0 // loop_footer
    %s23 = sadd.s32 1, %s19
  $region7: #{frozen_openclip_image_embedder_v2.5} parent=0 // loop_footer_branch
    %18 = sbr.rel target = $region3
  $region8: #{frozen_openclip_image_embedder_v2.5} parent=0 // loop_exit
    _

</llo_original>
